<compile_context>
chip_gen: v7x
topology: tpu7x:2x2x1
jax: 0.10.0
libtpu: 0.0.40
codegen_flags: <defaults>
</compile_context>

<pallas_src>
import functools

import jax
import jax.numpy as jnp
from jax.experimental import pallas as pl
from jax.experimental.pallas import tpu as pltpu

LATENT_SHAPE = (16, 12, 17)
LATENT_FLAT = 16 * 12 * 17            # 3264
SACCADE_DIM = 2
IN_DIM = LATENT_FLAT + SACCADE_DIM    # 3266
H1 = 128
H2 = 64
H2_PAD = 128                          # 64-wide hidden padded to a full lane tile
H3 = 128
OUT_DIM = LATENT_FLAT                 # 3264

MAX_TB = 512                          # max batch rows per grid step


def _mlp_kernel(lat_ref, sac_ref,
                w1l_ref, w1s_ref, b1_ref,
                w2_ref, b2_ref,
                w3_ref, b3_ref,
                w4_ref, b4_ref,
                out_ref):
    """relu(relu(relu([lat|sac]@W1+b1)@W2+b2)@W3+b3)@W4+b4 for one batch tile."""
    # Layer 1: bf16 MXU matmul on the latent part (cast after the DMA, so the
    # HBM stream stays whatever dtype the caller provided), f32 accumulation.
    lat = lat_ref[...].astype(jnp.bfloat16)                   # (TB, 3264)
    h = jnp.dot(lat, w1l_ref[...], preferred_element_type=jnp.float32)

    # Saccade part as two VPU rank-1 updates (K=2 MXU matmul would force a
    # weight swap + fill/drain between the two big matmuls).
    sac = sac_ref[...].astype(jnp.float32)                    # (TB, 2)
    w1s = w1s_ref[...]                                        # (2, 128) f32
    h = h + sac[:, 0:1] * w1s[0:1, :] + sac[:, 1:2] * w1s[1:2, :]
    h = jnp.maximum(h + b1_ref[...], 0.0)                     # (TB, 128)

    # Layer 2 (hidden 64 zero-padded to 128 lanes -- exact through the ReLU).
    h = jnp.dot(h, w2_ref[...], preferred_element_type=jnp.float32)
    h = jnp.maximum(h + b2_ref[...], 0.0)                     # (TB, 128)

    # Layer 3.
    h = jnp.dot(h, w3_ref[...], preferred_element_type=jnp.float32)
    h = jnp.maximum(h + b3_ref[...], 0.0)                     # (TB, 128)

    # Layer 4 (no ReLU): bf16 MXU matmul, f32 accumulation.
    h = jnp.dot(h.astype(jnp.bfloat16), w4_ref[...],
                preferred_element_type=jnp.float32)
    out_ref[...] = (h + b4_ref[...]).astype(out_ref.dtype)    # (TB, 3264)


def _prepare_params(params):
    """PyTorch-style params -> kernel layout (split W1, pad 64->128, bf16 big W)."""
    (w1, b1), (w2, b2), (w3, b3), (w4, b4) = params
    w1_lat = w1[:LATENT_FLAT].astype(jnp.bfloat16)            # (3264, 128) bf16
    w1_sac = w1[LATENT_FLAT:].astype(jnp.float32)             # (2, 128)    f32
    pad = H2_PAD - H2
    w2p = jnp.pad(w2.astype(jnp.float32), ((0, 0), (0, pad)))  # (128, 128) zero cols
    b2p = jnp.pad(b2.astype(jnp.float32), ((0, pad),))         # (128,)     zero tail
    w3p = jnp.pad(w3.astype(jnp.float32), ((0, pad), (0, 0)))  # (128, 128) zero rows
    w4b = w4.astype(jnp.bfloat16)                              # (128, 3264) bf16
    # Biases as (1, N) rows so they broadcast against (TB, N) in the kernel.
    return (w1_lat, w1_sac, b1.astype(jnp.float32).reshape(1, -1),
            w2p, b2p.reshape(1, -1),
            w3p, b3.astype(jnp.float32).reshape(1, -1),
            w4b, b4.astype(jnp.float32).reshape(1, -1))


def _round_up(x, m):
    return ((x + m - 1) // m) * m


def _batch_tile(batch):
    """Batch tile: <= MAX_TB, multiple of 8 (or == batch), and chosen so the
    grid has >= 2 (even-ish) steps whenever possible -- v7x has 2 TensorCores
    and the 'parallel' axis only shards if there are >= 2 grid steps."""
    if batch <= 8:
        return batch
    halves = max(1, -(-batch // (2 * MAX_TB)))        # ceil(batch / (2*MAX_TB))
    tb = _round_up(-(-batch // (2 * halves)), 8)      # ceil(batch / (2*halves))
    return min(MAX_TB, tb, batch)


@functools.partial(jax.jit, static_argnames=("out_dtype",))
def saccade_shift_forward(latent_input, saccade_input, params,
                          out_dtype=jnp.bfloat16):
    """JAX wrapper reproducing SaccadeShiftNN.forward (bf16 streaming by default)."""
    B = latent_input.shape[0]
    # No wrapper-side dtype cast of the big latent tensor: it would be an extra
    # full HBM pass. The kernel casts to bf16 after the DMA instead.
    latent_flat = latent_input.reshape(B, LATENT_FLAT)
    saccade_flat = saccade_input.reshape(B, SACCADE_DIM).astype(jnp.float32)

    (w1_lat, w1_sac, b1, w2, b2, w3, b3, w4, b4) = _prepare_params(params)

    tb = _batch_tile(B)
    grid = (pl.cdiv(B, tb),)

    def batch_spec(cols):
        return pl.BlockSpec((tb, cols), lambda i: (i, 0))

    def const_spec(shape):
        # Grid-resident block (constant index_map); single buffer -- the default
        # double buffer would waste VMEM on operands that are DMA'd exactly once.
        return pl.BlockSpec(shape, lambda i: (0, 0), pipeline_mode=pl.Buffered(1))

    in_itemsize = jnp.dtype(latent_flat.dtype).itemsize
    out_itemsize = jnp.dtype(out_dtype).itemsize
    flops = 2 * B * (LATENT_FLAT * H1 + SACCADE_DIM * H1
                     + H1 * H2_PAD + H2_PAD * H3 + H3 * OUT_DIM)
    weight_bytes = (2 * (LATENT_FLAT * H1 + H3 * OUT_DIM)            # bf16 W1lat, W4
                    + 4 * (SACCADE_DIM * H1 + H1 * H2_PAD + H2_PAD * H3
                           + H1 + H2_PAD + H3 + OUT_DIM))            # f32 rest
    bytes_accessed = (B * LATENT_FLAT * in_itemsize + B * SACCADE_DIM * 4
                      + B * OUT_DIM * out_itemsize + weight_bytes)

    out = pl.pallas_call(
        _mlp_kernel,
        out_shape=jax.ShapeDtypeStruct((B, OUT_DIM), out_dtype),
        grid=grid,
        in_specs=[
            batch_spec(LATENT_FLAT),            # latent tile      (TB, 3264)
            batch_spec(SACCADE_DIM),            # saccade tile     (TB, 2)
            const_spec((LATENT_FLAT, H1)),      # W1 latent part   (bf16, resident)
            const_spec((SACCADE_DIM, H1)),      # W1 saccade part  (f32, resident)
            const_spec((1, H1)),                # b1
            const_spec((H1, H2_PAD)),           # W2 (padded)
            const_spec((1, H2_PAD)),            # b2 (padded)
            const_spec((H2_PAD, H3)),           # W3 (padded)
            const_spec((1, H3)),                # b3
            const_spec((H3, OUT_DIM)),          # W4 (bf16)
            const_spec((1, OUT_DIM)),           # b4
        ],
        out_specs=batch_spec(OUT_DIM),
        compiler_params=pltpu.CompilerParams(
            dimension_semantics=("parallel",),
            vmem_limit_bytes=48 * 1024 * 1024,
        ),
        cost_estimate=pl.CostEstimate(
            flops=flops, transcendentals=0, bytes_accessed=bytes_accessed),
    )(latent_flat, saccade_flat,
      w1_lat, w1_sac, b1, w2, b2, w3, b3, w4, b4)

    return out.reshape(-1, *LATENT_SHAPE)


def init_params(key):
    """Deterministic init mimicking nn.Linear (uniform(-1/sqrt(in), 1/sqrt(in))).

    Weights are stored as (in_features, out_features) == PyTorch W.T so every
    layer is a plain  y = x @ W + b."""
    dims = [(IN_DIM, H1), (H1, H2), (H2, H3), (H3, OUT_DIM)]
    params = []
    for (din, dout) in dims:
        key, kw, kb = jax.random.split(key, 3)
        bound = 1.0 / jnp.sqrt(din)
        w = jax.random.uniform(kw, (din, dout), jnp.float32, -bound, bound)
        b = jax.random.uniform(kb, (dout,), jnp.float32, -bound, bound)
        params.append((w, b))
    return params


def _reference_forward(latent_input, saccade_input, params,
                       quantize_like_kernel=False):
    """Plain-JAX reference. With quantize_like_kernel=True the bf16-rounded
    tensors match the kernel's storage (latent, W1-latent, W4), isolating
    kernel correctness from bf16 quantization error."""
    B = latent_input.shape[0]
    x_lat = latent_input.reshape(B, -1).astype(jnp.float32)
    x_sac = saccade_input.reshape(B, -1).astype(jnp.float32)
    (w1, b1), (w2, b2), (w3, b3), (w4, b4) = params
    if quantize_like_kernel:
        x_lat = x_lat.astype(jnp.bfloat16).astype(jnp.float32)
        w1 = w1.at[:LATENT_FLAT].set(
            w1[:LATENT_FLAT].astype(jnp.bfloat16).astype(jnp.float32))
        w4 = w4.astype(jnp.bfloat16).astype(jnp.float32)
    x = jnp.concatenate([x_lat, x_sac], axis=1)
    h = jax.nn.relu(x @ w1 + b1)
    h = jax.nn.relu(h @ w2 + b2)
    h = jax.nn.relu(h @ w3 + b3)
    out = h @ w4 + b4
    return out.reshape(-1, *LATENT_SHAPE)


if __name__ == "__main__":
    key = jax.random.PRNGKey(0)
    k_params, k_lat, k_sac = jax.random.split(key, 3)
    params = init_params(k_params)

    # --- Required small demo: B=2, f32 inputs, bf16 output (single grid step).
    B = 2
    latent_input = jax.random.normal(k_lat, (B, *LATENT_SHAPE), jnp.float32)
    saccade_input = jax.random.normal(k_sac, (B, SACCADE_DIM), jnp.float32)

    out = jax.block_until_ready(
        saccade_shift_forward(latent_input, saccade_input, params))
    assert out.shape == (B, *LATENT_SHAPE), out.shape

    ref_q = _reference_forward(latent_input, saccade_input, params,
                               quantize_like_kernel=True)
    assert jnp.allclose(out.astype(jnp.float32), ref_q,
                        atol=1e-2, rtol=1e-2), "mismatch vs bf16-matched reference"
    ref_f32 = _reference_forward(latent_input, saccade_input, params)
    assert jnp.allclose(out.astype(jnp.float32), ref_f32,
                        atol=5e-2, rtol=5e-2), "mismatch vs f32 reference"

    # --- Multi-step grid (2 x 256-row tiles), f32 output path.
    B2 = 512
    k_lat2, k_sac2 = jax.random.split(k_lat)
    latent2 = jax.random.normal(k_lat2, (B2, *LATENT_SHAPE), jnp.float32)
    saccade2 = jax.random.normal(k_sac2, (B2, SACCADE_DIM), jnp.float32)
    out2 = jax.block_until_ready(
        saccade_shift_forward(latent2, saccade2, params, out_dtype=jnp.float32))
    ref2 = _reference_forward(latent2, saccade2, params, quantize_like_kernel=True)
    assert out2.shape == (B2, *LATENT_SHAPE), out2.shape
    assert jnp.allclose(out2, ref2, atol=1e-2, rtol=1e-2), "tiled mismatch"

    # --- Partial last tile (B=300 -> 152-row tiles) + bf16 input streaming.
    B3 = 300
    k_lat3, k_sac3 = jax.random.split(k_sac)
    latent3 = jax.random.normal(k_lat3, (B3, *LATENT_SHAPE),
                                jnp.float32).astype(jnp.bfloat16)
    saccade3 = jax.random.normal(k_sac3, (B3, SACCADE_DIM), jnp.float32)
    out3 = jax.block_until_ready(saccade_shift_forward(latent3, saccade3, params))
    ref3 = _reference_forward(latent3, saccade3, params, quantize_like_kernel=True)
    assert out3.shape == (B3, *LATENT_SHAPE), out3.shape
    assert jnp.allclose(out3.astype(jnp.float32), ref3,
                        atol=1e-2, rtol=1e-2), "partial-tile mismatch"

    print("KERNEL_OK")
</pallas_src>

<mosaic_0001>
module attributes {stable_mosaic.version = 11 : i64} {
  func.func @_mlp_kernel(%arg0: i32, %arg1: memref<2x3264xf32, #tpu.memory_space<vmem>>, %arg2: memref<2x2xf32, #tpu.memory_space<vmem>>, %arg3: memref<3264x128xbf16, #tpu.memory_space<vmem>>, %arg4: memref<2x128xf32, #tpu.memory_space<vmem>>, %arg5: memref<1x128xf32, #tpu.memory_space<vmem>>, %arg6: memref<128x128xf32, #tpu.memory_space<vmem>>, %arg7: memref<1x128xf32, #tpu.memory_space<vmem>>, %arg8: memref<128x128xf32, #tpu.memory_space<vmem>>, %arg9: memref<1x128xf32, #tpu.memory_space<vmem>>, %arg10: memref<128x3264xbf16, #tpu.memory_space<vmem>>, %arg11: memref<1x3264xf32, #tpu.memory_space<vmem>>, %arg12: memref<2x3264xbf16, #tpu.memory_space<vmem>>) attributes {dimension_semantics = [#tpu.dimension_semantics<parallel>], iteration_bounds = array<i64: 1>, scalar_prefetch = 0 : i64, scratch_operands = 0 : i64, tpu.core_type = #tpu.core_type<tc>, window_params = [{transform_indices = @transform_0, window_bounds = array<i64: 2, 3264>}, {transform_indices = @transform_1, window_bounds = array<i64: 2, 2>}, {pipeline_mode = #tpu.pipeline_mode<synchronous>, transform_indices = @transform_2, window_bounds = array<i64: 3264, 128>}, {pipeline_mode = #tpu.pipeline_mode<synchronous>, transform_indices = @transform_3, window_bounds = array<i64: 2, 128>}, {pipeline_mode = #tpu.pipeline_mode<synchronous>, transform_indices = @transform_4, window_bounds = array<i64: 1, 128>}, {pipeline_mode = #tpu.pipeline_mode<synchronous>, transform_indices = @transform_5, window_bounds = array<i64: 128, 128>}, {pipeline_mode = #tpu.pipeline_mode<synchronous>, transform_indices = @transform_6, window_bounds = array<i64: 1, 128>}, {pipeline_mode = #tpu.pipeline_mode<synchronous>, transform_indices = @transform_7, window_bounds = array<i64: 128, 128>}, {pipeline_mode = #tpu.pipeline_mode<synchronous>, transform_indices = @transform_8, window_bounds = array<i64: 1, 128>}, {pipeline_mode = #tpu.pipeline_mode<synchronous>, transform_indices = @transform_9, window_bounds = array<i64: 128, 3264>}, {pipeline_mode = #tpu.pipeline_mode<synchronous>, transform_indices = @transform_10, window_bounds = array<i64: 1, 3264>}, {transform_indices = @transform_11, window_bounds = array<i64: 2, 3264>}]} {
    %c0 = arith.constant 0 : index
    %c0_0 = arith.constant 0 : index
    %0 = vector.load %arg1[%c0, %c0_0] : memref<2x3264xf32, #tpu.memory_space<vmem>>, vector<2x3264xf32>
    %1 = arith.truncf %0 : vector<2x3264xf32> to vector<2x3264xbf16>
    %c0_1 = arith.constant 0 : index
    %c0_2 = arith.constant 0 : index
    %2 = vector.load %arg3[%c0_1, %c0_2] : memref<3264x128xbf16, #tpu.memory_space<vmem>>, vector<3264x128xbf16>
    %cst = arith.constant dense<0.000000e+00> : vector<2x128xf32>
    %3 = tpu.matmul %1, %2, %cst {dimension_numbers = #tpu.dot_dimension_numbers<[1], [0], [0], [1], [0, 0, 1, 1], [], []>} : vector<2x3264xbf16>, vector<3264x128xbf16>, vector<2x128xf32> -> vector<2x128xf32>
    %c0_3 = arith.constant 0 : index
    %c0_4 = arith.constant 0 : index
    %4 = vector.load %arg2[%c0_3, %c0_4] : memref<2x2xf32, #tpu.memory_space<vmem>>, vector<2x2xf32>
    %c0_5 = arith.constant 0 : index
    %c0_6 = arith.constant 0 : index
    %5 = vector.load %arg4[%c0_5, %c0_6] : memref<2x128xf32, #tpu.memory_space<vmem>>, vector<2x128xf32>
    %6 = vector.extract_strided_slice %4 {offsets = [0, 0], sizes = [2, 1], strides = [1, 1]} : vector<2x2xf32> to vector<2x1xf32>
    %7 = vector.extract_strided_slice %5 {offsets = [0, 0], sizes = [1, 128], strides = [1, 1]} : vector<2x128xf32> to vector<1x128xf32>
    %8 = vector.broadcast %6 : vector<2x1xf32> to vector<2x128xf32>
    %9 = vector.broadcast %7 : vector<1x128xf32> to vector<2x128xf32>
    %10 = arith.mulf %8, %9 : vector<2x128xf32>
    %11 = arith.addf %3, %10 : vector<2x128xf32>
    %12 = vector.extract_strided_slice %4 {offsets = [0, 1], sizes = [2, 1], strides = [1, 1]} : vector<2x2xf32> to vector<2x1xf32>
    %13 = vector.extract_strided_slice %5 {offsets = [1, 0], sizes = [1, 128], strides = [1, 1]} : vector<2x128xf32> to vector<1x128xf32>
    %14 = vector.broadcast %12 : vector<2x1xf32> to vector<2x128xf32>
    %15 = vector.broadcast %13 : vector<1x128xf32> to vector<2x128xf32>
    %16 = arith.mulf %14, %15 : vector<2x128xf32>
    %17 = arith.addf %11, %16 : vector<2x128xf32>
    %c0_7 = arith.constant 0 : index
    %c0_8 = arith.constant 0 : index
    %18 = vector.load %arg5[%c0_7, %c0_8] : memref<1x128xf32, #tpu.memory_space<vmem>>, vector<1x128xf32>
    %19 = vector.broadcast %18 : vector<1x128xf32> to vector<2x128xf32>
    %20 = arith.addf %17, %19 : vector<2x128xf32>
    %cst_9 = arith.constant 0.000000e+00 : f32
    %21 = vector.broadcast %cst_9 : f32 to vector<2x128xf32>
    %22 = arith.maximumf %20, %21 : vector<2x128xf32>
    %c0_10 = arith.constant 0 : index
    %c0_11 = arith.constant 0 : index
    %23 = vector.load %arg6[%c0_10, %c0_11] : memref<128x128xf32, #tpu.memory_space<vmem>>, vector<128x128xf32>
    %cst_12 = arith.constant dense<0.000000e+00> : vector<2x128xf32>
    %24 = tpu.matmul %22, %23, %cst_12 {dimension_numbers = #tpu.dot_dimension_numbers<[1], [0], [0], [1], [0, 0, 1, 1], [], []>} : vector<2x128xf32>, vector<128x128xf32>, vector<2x128xf32> -> vector<2x128xf32>
    %c0_13 = arith.constant 0 : index
    %c0_14 = arith.constant 0 : index
    %25 = vector.load %arg7[%c0_13, %c0_14] : memref<1x128xf32, #tpu.memory_space<vmem>>, vector<1x128xf32>
    %26 = vector.broadcast %25 : vector<1x128xf32> to vector<2x128xf32>
    %27 = arith.addf %24, %26 : vector<2x128xf32>
    %cst_15 = arith.constant 0.000000e+00 : f32
    %28 = vector.broadcast %cst_15 : f32 to vector<2x128xf32>
    %29 = arith.maximumf %27, %28 : vector<2x128xf32>
    %c0_16 = arith.constant 0 : index
    %c0_17 = arith.constant 0 : index
    %30 = vector.load %arg8[%c0_16, %c0_17] : memref<128x128xf32, #tpu.memory_space<vmem>>, vector<128x128xf32>
    %cst_18 = arith.constant dense<0.000000e+00> : vector<2x128xf32>
    %31 = tpu.matmul %29, %30, %cst_18 {dimension_numbers = #tpu.dot_dimension_numbers<[1], [0], [0], [1], [0, 0, 1, 1], [], []>} : vector<2x128xf32>, vector<128x128xf32>, vector<2x128xf32> -> vector<2x128xf32>
    %c0_19 = arith.constant 0 : index
    %c0_20 = arith.constant 0 : index
    %32 = vector.load %arg9[%c0_19, %c0_20] : memref<1x128xf32, #tpu.memory_space<vmem>>, vector<1x128xf32>
    %33 = vector.broadcast %32 : vector<1x128xf32> to vector<2x128xf32>
    %34 = arith.addf %31, %33 : vector<2x128xf32>
    %cst_21 = arith.constant 0.000000e+00 : f32
    %35 = vector.broadcast %cst_21 : f32 to vector<2x128xf32>
    %36 = arith.maximumf %34, %35 : vector<2x128xf32>
    %37 = arith.truncf %36 : vector<2x128xf32> to vector<2x128xbf16>
    %c0_22 = arith.constant 0 : index
    %c0_23 = arith.constant 0 : index
    %38 = vector.load %arg10[%c0_22, %c0_23] : memref<128x3264xbf16, #tpu.memory_space<vmem>>, vector<128x3264xbf16>
    %cst_24 = arith.constant dense<0.000000e+00> : vector<2x3264xf32>
    %39 = tpu.matmul %37, %38, %cst_24 {dimension_numbers = #tpu.dot_dimension_numbers<[1], [0], [0], [1], [0, 0, 1, 1], [], []>} : vector<2x128xbf16>, vector<128x3264xbf16>, vector<2x3264xf32> -> vector<2x3264xf32>
    %c0_25 = arith.constant 0 : index
    %c0_26 = arith.constant 0 : index
    %40 = vector.load %arg11[%c0_25, %c0_26] : memref<1x3264xf32, #tpu.memory_space<vmem>>, vector<1x3264xf32>
    %41 = vector.broadcast %40 : vector<1x3264xf32> to vector<2x3264xf32>
    %42 = arith.addf %39, %41 : vector<2x3264xf32>
    %43 = arith.truncf %42 : vector<2x3264xf32> to vector<2x3264xbf16>
    %c0_27 = arith.constant 0 : index
    %c0_28 = arith.constant 0 : index
    %44 = vector.load %arg12[%c0_27, %c0_28] : memref<2x3264xbf16, #tpu.memory_space<vmem>>, vector<2x3264xbf16>
    tpu.vector_store %arg12[%c0_27, %c0_28], %43 {strides = array<i32>} : memref<2x3264xbf16, #tpu.memory_space<vmem>>, vector<2x3264xbf16>,
    return
  }
  func.func @transform_0(%arg0: i32) -> (i32, i32) {
    %c0_i32 = arith.constant 0 : i32
    %c0_i32_0 = arith.constant 0 : i32
    return %arg0, %c0_i32 : i32, i32
  }
  func.func @transform_1(%arg0: i32) -> (i32, i32) {
    %c0_i32 = arith.constant 0 : i32
    %c0_i32_0 = arith.constant 0 : i32
    return %arg0, %c0_i32 : i32, i32
  }
  func.func @transform_2(%arg0: i32) -> (i32, i32) {
    %c0_i32 = arith.constant 0 : i32
    %c0_i32_0 = arith.constant 0 : i32
    %c0_i32_1 = arith.constant 0 : i32
    return %c0_i32, %c0_i32_0 : i32, i32
  }
  func.func @transform_3(%arg0: i32) -> (i32, i32) {
    %c0_i32 = arith.constant 0 : i32
    %c0_i32_0 = arith.constant 0 : i32
    %c0_i32_1 = arith.constant 0 : i32
    return %c0_i32, %c0_i32_0 : i32, i32
  }
  func.func @transform_4(%arg0: i32) -> (i32, i32) {
    %c0_i32 = arith.constant 0 : i32
    %c0_i32_0 = arith.constant 0 : i32
    %c0_i32_1 = arith.constant 0 : i32
    return %c0_i32, %c0_i32_0 : i32, i32
  }
  func.func @transform_5(%arg0: i32) -> (i32, i32) {
    %c0_i32 = arith.constant 0 : i32
    %c0_i32_0 = arith.constant 0 : i32
    %c0_i32_1 = arith.constant 0 : i32
    return %c0_i32, %c0_i32_0 : i32, i32
  }
  func.func @transform_6(%arg0: i32) -> (i32, i32) {
    %c0_i32 = arith.constant 0 : i32
    %c0_i32_0 = arith.constant 0 : i32
    %c0_i32_1 = arith.constant 0 : i32
    return %c0_i32, %c0_i32_0 : i32, i32
  }
  func.func @transform_7(%arg0: i32) -> (i32, i32) {
    %c0_i32 = arith.constant 0 : i32
    %c0_i32_0 = arith.constant 0 : i32
    %c0_i32_1 = arith.constant 0 : i32
    return %c0_i32, %c0_i32_0 : i32, i32
  }
  func.func @transform_8(%arg0: i32) -> (i32, i32) {
    %c0_i32 = arith.constant 0 : i32
    %c0_i32_0 = arith.constant 0 : i32
    %c0_i32_1 = arith.constant 0 : i32
    return %c0_i32, %c0_i32_0 : i32, i32
  }
  func.func @transform_9(%arg0: i32) -> (i32, i32) {
    %c0_i32 = arith.constant 0 : i32
    %c0_i32_0 = arith.constant 0 : i32
    %c0_i32_1 = arith.constant 0 : i32
    return %c0_i32, %c0_i32_0 : i32, i32
  }
  func.func @transform_10(%arg0: i32) -> (i32, i32) {
    %c0_i32 = arith.constant 0 : i32
    %c0_i32_0 = arith.constant 0 : i32
    %c0_i32_1 = arith.constant 0 : i32
    return %c0_i32, %c0_i32_0 : i32, i32
  }
  func.func @transform_11(%arg0: i32) -> (i32, i32) {
    %c0_i32 = arith.constant 0 : i32
    %c0_i32_0 = arith.constant 0 : i32
    return %arg0, %c0_i32 : i32, i32
  }
}

</mosaic_0001>

<llo_original>
// kernel: saccade_shift_forward.1
$region0: #{saccade_shift_forward.1}
  #allocation0 [shape = 'u32[]', space=smem, size = 0x4, offset = 0x4, fixed_abs, tag = 'smem constant byte address 0x4 - core index']
  #allocation1 [shape = 'u32[144,128]{1,0:T(1,128)}', space=vmem, size = 0x12000, scoped, tag = 'internal scratch']
  %s0 = inlined_call_operand.vmem [shape: f32[2,3264], index: 0, kind: input, shape index: {}]
  %s1 = inlined_call_operand.vmem [shape: f32[2,2], index: 1, kind: input, shape index: {}]
  %s2 = inlined_call_operand.vmem [shape: bf16[3264,128], index: 2, kind: input, shape index: {}]
  %s3 = inlined_call_operand.vmem [shape: f32[2,128], index: 3, kind: input, shape index: {}]
  %s4 = inlined_call_operand.vmem [shape: f32[1,128], index: 4, kind: input, shape index: {}]
  %s5 = inlined_call_operand.vmem [shape: f32[128,128], index: 5, kind: input, shape index: {}]
  %s6 = inlined_call_operand.vmem [shape: f32[1,128], index: 6, kind: input, shape index: {}]
  %s7 = inlined_call_operand.vmem [shape: f32[128,128], index: 7, kind: input, shape index: {}]
  %s8 = inlined_call_operand.vmem [shape: f32[1,128], index: 8, kind: input, shape index: {}]
  %s9 = inlined_call_operand.vmem [shape: bf16[128,3264], index: 9, kind: input, shape index: {}]
  %s10 = inlined_call_operand.vmem [shape: f32[1,3264], index: 10, kind: input, shape index: {}]
  %s11 = inlined_call_operand.vmem [shape: bf16[2,3264], index: 11, kind: output, shape index: {}]
  %s12 = sld [smem:[#allocation0]]
  $region54: #{saccade_shift_forward.1} parent=0
    _
  %s14 = ssub.s32 1, %s12
  %s15 = scalar_select 0, %s14, %s12
  // Predicated region
  $region2: #{saccade_shift_forward.1} parent=0 // pred_check
    _
  $region3: #{saccade_shift_forward.1} parent=0 // pred_check_branch
    %17 = sbr.rel (0) target = $region5
  $region4: #{saccade_shift_forward.1} parent=0 // pred_region
    _
  $region5: #{saccade_shift_forward.1} parent=0 // pred_fallthru
    _
  // Predicated region
  $region6: #{saccade_shift_forward.1} parent=0 // pred_check
    _
  $region7: #{saccade_shift_forward.1} parent=0 // pred_check_branch
    %19 = sbr.rel (0) target = $region9
  $region8: #{saccade_shift_forward.1} parent=0 // pred_region
    _
  $region9: #{saccade_shift_forward.1} parent=0 // pred_fallthru
    _
  // Predicated region
  $region10: #{saccade_shift_forward.1} parent=0 // pred_check
    _
  $region11: #{saccade_shift_forward.1} parent=0 // pred_check_branch
    %21 = sbr.rel (0) target = $region13
  $region12: #{saccade_shift_forward.1} parent=0 // pred_region
    _
  $region13: #{saccade_shift_forward.1} parent=0 // pred_fallthru
    _
  // Predicated region
  $region14: #{saccade_shift_forward.1} parent=0 // pred_check
    _
  $region15: #{saccade_shift_forward.1} parent=0 // pred_check_branch
    %23 = sbr.rel (0) target = $region17
  $region16: #{saccade_shift_forward.1} parent=0 // pred_region
    _
  $region17: #{saccade_shift_forward.1} parent=0 // pred_fallthru
    _
  // Predicated region
  $region18: #{saccade_shift_forward.1} parent=0 // pred_check
    _
  $region19: #{saccade_shift_forward.1} parent=0 // pred_check_branch
    %25 = sbr.rel (0) target = $region21
  $region20: #{saccade_shift_forward.1} parent=0 // pred_region
    _
  $region21: #{saccade_shift_forward.1} parent=0 // pred_fallthru
    _
  // Predicated region
  $region22: #{saccade_shift_forward.1} parent=0 // pred_check
    _
  $region23: #{saccade_shift_forward.1} parent=0 // pred_check_branch
    %27 = sbr.rel (0) target = $region25
  $region24: #{saccade_shift_forward.1} parent=0 // pred_region
    _
  $region25: #{saccade_shift_forward.1} parent=0 // pred_fallthru
    _
  // Predicated region
  $region26: #{saccade_shift_forward.1} parent=0 // pred_check
    _
  $region27: #{saccade_shift_forward.1} parent=0 // pred_check_branch
    %29 = sbr.rel (0) target = $region29
  $region28: #{saccade_shift_forward.1} parent=0 // pred_region
    _
  $region29: #{saccade_shift_forward.1} parent=0 // pred_fallthru
    _
  // Predicated region
  $region30: #{saccade_shift_forward.1} parent=0 // pred_check
    _
  $region31: #{saccade_shift_forward.1} parent=0 // pred_check_branch
    %31 = sbr.rel (0) target = $region33
  $region32: #{saccade_shift_forward.1} parent=0 // pred_region
    _
  $region33: #{saccade_shift_forward.1} parent=0 // pred_fallthru
    _
  // Predicated region
  $region34: #{saccade_shift_forward.1} parent=0 // pred_check
    _
  $region35: #{saccade_shift_forward.1} parent=0 // pred_check_branch
    %33 = sbr.rel (0) target = $region37
  $region36: #{saccade_shift_forward.1} parent=0 // pred_region
    _
  $region37: #{saccade_shift_forward.1} parent=0 // pred_fallthru
    _
  // Predicated region
  $region38: #{saccade_shift_forward.1} parent=0 // pred_check
    _
  $region39: #{saccade_shift_forward.1} parent=0 // pred_check_branch
    %35 = sbr.rel (0) target = $region41
  $region40: #{saccade_shift_forward.1} parent=0 // pred_region
    _
  $region41: #{saccade_shift_forward.1} parent=0 // pred_fallthru
    _
  // Predicated region
  $region42: #{saccade_shift_forward.1} parent=0 // pred_check
    _
  $region43: #{saccade_shift_forward.1} parent=0 // pred_check_branch
    %37 = sbr.rel (0) target = $region45
  $region44: #{saccade_shift_forward.1} parent=0 // pred_region
    _
  $region45: #{saccade_shift_forward.1} parent=0 // pred_fallthru
    _
  %v39 = vld [vmem:[%s0] sm:$0xff]
  %v40 = vld [vmem:[%s0 + $0x8] sm:$0xff]
  %v41 = vld [vmem:[%s0 + $0x10] sm:$0xff]
  %v42 = vld [vmem:[%s0 + $0x18] sm:$0xff]
  %v43 = vld [vmem:[%s0 + $0x20] sm:$0xff]
  %v44 = vld [vmem:[%s0 + $0x28] sm:$0xff]
  %v45 = vld [vmem:[%s0 + $0x30] sm:$0xf]
  %v53 = vcombine.high %v39, %v39
  %v55 = vunpack.c.l.s4 1983009808
  %v56 = vunpack.c.0.s8 %v55
  %v57 = vlaneseq
  %v58 = vshrl.u32 %v57, 7
  %v59 = vsub.s32 %v56, %v58
  %v60 = vrot.slane %v39, %v59
  %v62 = vunpack.c.l.s4 1983009808
  %v63 = vunpack.c.0.s8 %v62
  %v64 = vlaneseq
  %v65 = vshrl.u32 %v64, 7
  %v66 = vsub.s32 %v63, %v65
  %v67 = vrot.slane %v53, %v66
  %v68 = vcombine.high %v60, %v60
  %v69 = vcombine.high %v67, %v67
  %v70 = vcombine.high %v40, %v40
  %v72 = vunpack.c.l.s4 1983009808
  %v73 = vunpack.c.0.s8 %v72
  %v74 = vlaneseq
  %v75 = vshrl.u32 %v74, 7
  %v76 = vsub.s32 %v73, %v75
  %v77 = vrot.slane %v40, %v76
  %v79 = vunpack.c.l.s4 1983009808
  %v80 = vunpack.c.0.s8 %v79
  %v81 = vlaneseq
  %v82 = vshrl.u32 %v81, 7
  %v83 = vsub.s32 %v80, %v82
  %v84 = vrot.slane %v70, %v83
  %v85 = vcombine.high %v77, %v77
  %v86 = vcombine.high %v84, %v84
  %v87 = vcombine.high %v41, %v41
  %v89 = vunpack.c.l.s4 1983009808
  %v90 = vunpack.c.0.s8 %v89
  %v91 = vlaneseq
  %v92 = vshrl.u32 %v91, 7
  %v93 = vsub.s32 %v90, %v92
  %v94 = vrot.slane %v41, %v93
  %v96 = vunpack.c.l.s4 1983009808
  %v97 = vunpack.c.0.s8 %v96
  %v98 = vlaneseq
  %v99 = vshrl.u32 %v98, 7
  %v100 = vsub.s32 %v97, %v99
  %v101 = vrot.slane %v87, %v100
  %v102 = vcombine.high %v94, %v94
  %v103 = vcombine.high %v101, %v101
  %v104 = vcombine.high %v42, %v42
  %v106 = vunpack.c.l.s4 1983009808
  %v107 = vunpack.c.0.s8 %v106
  %v108 = vlaneseq
  %v109 = vshrl.u32 %v108, 7
  %v110 = vsub.s32 %v107, %v109
  %v111 = vrot.slane %v42, %v110
  %v113 = vunpack.c.l.s4 1983009808
  %v114 = vunpack.c.0.s8 %v113
  %v115 = vlaneseq
  %v116 = vshrl.u32 %v115, 7
  %v117 = vsub.s32 %v114, %v116
  %v118 = vrot.slane %v104, %v117
  %v119 = vcombine.high %v111, %v111
  %v120 = vcombine.high %v118, %v118
  %v121 = vcombine.high %v43, %v43
  %v123 = vunpack.c.l.s4 1983009808
  %v124 = vunpack.c.0.s8 %v123
  %v125 = vlaneseq
  %v126 = vshrl.u32 %v125, 7
  %v127 = vsub.s32 %v124, %v126
  %v128 = vrot.slane %v43, %v127
  %v130 = vunpack.c.l.s4 1983009808
  %v131 = vunpack.c.0.s8 %v130
  %v132 = vlaneseq
  %v133 = vshrl.u32 %v132, 7
  %v134 = vsub.s32 %v131, %v133
  %v135 = vrot.slane %v121, %v134
  %v136 = vcombine.high %v128, %v128
  %v137 = vcombine.high %v135, %v135
  %v138 = vcombine.high %v44, %v44
  %v140 = vunpack.c.l.s4 1983009808
  %v141 = vunpack.c.0.s8 %v140
  %v142 = vlaneseq
  %v143 = vshrl.u32 %v142, 7
  %v144 = vsub.s32 %v141, %v143
  %v145 = vrot.slane %v44, %v144
  %v147 = vunpack.c.l.s4 1983009808
  %v148 = vunpack.c.0.s8 %v147
  %v149 = vlaneseq
  %v150 = vshrl.u32 %v149, 7
  %v151 = vsub.s32 %v148, %v150
  %v152 = vrot.slane %v138, %v151
  %v153 = vcombine.high %v145, %v145
  %v154 = vcombine.high %v152, %v152
  %v156 = vunpack.c.l.s4 1983009808
  %v157 = vunpack.c.0.s8 %v156
  %v158 = vlaneseq
  %v159 = vshrl.u32 %v158, 7
  %v160 = vsub.s32 %v157, %v159
  %v161 = vrot.slane %v45, %v160
  %v162 = vcombine.high %v161, %v161
  %v189 = vpack.c.bf16 %v60, %v60
  %v190 = vpack.c.bf16 %v68, %v68
  %v191 = vpack.c.bf16 %v67, %v67
  %v192 = vpack.c.bf16 %v69, %v69
  %v193 = vpack.c.bf16 %v77, %v77
  %v194 = vpack.c.bf16 %v85, %v85
  %v195 = vpack.c.bf16 %v84, %v84
  %v196 = vpack.c.bf16 %v86, %v86
  %v197 = vpack.c.bf16 %v94, %v94
  %v198 = vpack.c.bf16 %v102, %v102
  %v199 = vpack.c.bf16 %v101, %v101
  %v200 = vpack.c.bf16 %v103, %v103
  %v201 = vpack.c.bf16 %v111, %v111
  %v202 = vpack.c.bf16 %v119, %v119
  %v203 = vpack.c.bf16 %v118, %v118
  %v204 = vpack.c.bf16 %v120, %v120
  %v205 = vpack.c.bf16 %v128, %v128
  %v206 = vpack.c.bf16 %v136, %v136
  %v207 = vpack.c.bf16 %v135, %v135
  %v208 = vpack.c.bf16 %v137, %v137
  %v209 = vpack.c.bf16 %v145, %v145
  %v210 = vpack.c.bf16 %v153, %v153
  %v211 = vpack.c.bf16 %v152, %v152
  %v212 = vpack.c.bf16 %v154, %v154
  %v213 = vpack.c.bf16 %v161, %v161
  %v214 = vpack.c.bf16 %v162, %v162
  %v215 = vld [vmem:[%s2] sm:$0xf]
  %v216 = vld [vmem:[%s2 + $0x4] sm:$0xf]
  %v217 = vld [vmem:[%s2 + $0x8] sm:$0xf]
  %v218 = vld [vmem:[%s2 + $0xc] sm:$0xf]
  %v219 = vld [vmem:[%s2 + $0x10] sm:$0xf]
  %v220 = vld [vmem:[%s2 + $0x14] sm:$0xf]
  %v221 = vld [vmem:[%s2 + $0x18] sm:$0xf]
  %v222 = vld [vmem:[%s2 + $0x1c] sm:$0xf]
  %v223 = vld [vmem:[%s2 + $0x20] sm:$0xf]
  %v224 = vld [vmem:[%s2 + $0x24] sm:$0xf]
  %v225 = vld [vmem:[%s2 + $0x28] sm:$0xf]
  %v226 = vld [vmem:[%s2 + $0x2c] sm:$0xf]
  %v227 = vld [vmem:[%s2 + $0x30] sm:$0xf]
  %v228 = vld [vmem:[%s2 + $0x34] sm:$0xf]
  %v229 = vld [vmem:[%s2 + $0x38] sm:$0xf]
  %v230 = vld [vmem:[%s2 + $0x3c] sm:$0xf]
  %v231 = vld [vmem:[%s2 + $0x40] sm:$0xf]
  %v232 = vld [vmem:[%s2 + $0x44] sm:$0xf]
  %v233 = vld [vmem:[%s2 + $0x48] sm:$0xf]
  %v234 = vld [vmem:[%s2 + $0x4c] sm:$0xf]
  %v235 = vld [vmem:[%s2 + $0x50] sm:$0xf]
  %v236 = vld [vmem:[%s2 + $0x54] sm:$0xf]
  %v237 = vld [vmem:[%s2 + $0x58] sm:$0xf]
  %v238 = vld [vmem:[%s2 + $0x5c] sm:$0xf]
  %v239 = vld [vmem:[%s2 + $0x60] sm:$0xf]
  %v240 = vld [vmem:[%s2 + $0x64] sm:$0xf]
  %v241 = vld [vmem:[%s2 + $0x68] sm:$0xf]
  %v242 = vld [vmem:[%s2 + $0x6c] sm:$0xf]
  %v243 = vld [vmem:[%s2 + $0x70] sm:$0xf]
  %v244 = vld [vmem:[%s2 + $0x74] sm:$0xf]
  %v245 = vld [vmem:[%s2 + $0x78] sm:$0xf]
  %v246 = vld [vmem:[%s2 + $0x7c] sm:$0xf]
  %v247 = vld [vmem:[%s2 + $0x80] sm:$0xf]
  %v248 = vld [vmem:[%s2 + $0x84] sm:$0xf]
  %v249 = vld [vmem:[%s2 + $0x88] sm:$0xf]
  %v250 = vld [vmem:[%s2 + $0x8c] sm:$0xf]
  %v251 = vld [vmem:[%s2 + $0x90] sm:$0xf]
  %v252 = vld [vmem:[%s2 + $0x94] sm:$0xf]
  %v253 = vld [vmem:[%s2 + $0x98] sm:$0xf]
  %v254 = vld [vmem:[%s2 + $0x9c] sm:$0xf]
  %v255 = vld [vmem:[%s2 + $0xa0] sm:$0xf]
  %v256 = vld [vmem:[%s2 + $0xa4] sm:$0xf]
  %v257 = vld [vmem:[%s2 + $0xa8] sm:$0xf]
  %v258 = vld [vmem:[%s2 + $0xac] sm:$0xf]
  %v259 = vld [vmem:[%s2 + $0xb0] sm:$0xf]
  %v260 = vld [vmem:[%s2 + $0xb4] sm:$0xf]
  %v261 = vld [vmem:[%s2 + $0xb8] sm:$0xf]
  %v262 = vld [vmem:[%s2 + $0xbc] sm:$0xf]
  %v263 = vld [vmem:[%s2 + $0xc0] sm:$0xf]
  %v264 = vld [vmem:[%s2 + $0xc4] sm:$0xf]
  %v265 = vld [vmem:[%s2 + $0xc8] sm:$0xf]
  %v266 = vld [vmem:[%s2 + $0xcc] sm:$0xf]
  %v267 = vld [vmem:[%s2 + $0xd0] sm:$0xf]
  %v268 = vld [vmem:[%s2 + $0xd4] sm:$0xf]
  %v269 = vld [vmem:[%s2 + $0xd8] sm:$0xf]
  %v270 = vld [vmem:[%s2 + $0xdc] sm:$0xf]
  %v271 = vld [vmem:[%s2 + $0xe0] sm:$0xf]
  %v272 = vld [vmem:[%s2 + $0xe4] sm:$0xf]
  %v273 = vld [vmem:[%s2 + $0xe8] sm:$0xf]
  %v274 = vld [vmem:[%s2 + $0xec] sm:$0xf]
  %v275 = vld [vmem:[%s2 + $0xf0] sm:$0xf]
  %v276 = vld [vmem:[%s2 + $0xf4] sm:$0xf]
  %v277 = vld [vmem:[%s2 + $0xf8] sm:$0xf]
  %v278 = vld [vmem:[%s2 + $0xfc] sm:$0xf]
  %v279 = vld [vmem:[%s2 + $0x100] sm:$0xf]
  %v280 = vld [vmem:[%s2 + $0x104] sm:$0xf]
  %v281 = vld [vmem:[%s2 + $0x108] sm:$0xf]
  %v282 = vld [vmem:[%s2 + $0x10c] sm:$0xf]
  %v283 = vld [vmem:[%s2 + $0x110] sm:$0xf]
  %v284 = vld [vmem:[%s2 + $0x114] sm:$0xf]
  %v285 = vld [vmem:[%s2 + $0x118] sm:$0xf]
  %v286 = vld [vmem:[%s2 + $0x11c] sm:$0xf]
  %v287 = vld [vmem:[%s2 + $0x120] sm:$0xf]
  %v288 = vld [vmem:[%s2 + $0x124] sm:$0xf]
  %v289 = vld [vmem:[%s2 + $0x128] sm:$0xf]
  %v290 = vld [vmem:[%s2 + $0x12c] sm:$0xf]
  %v291 = vld [vmem:[%s2 + $0x130] sm:$0xf]
  %v292 = vld [vmem:[%s2 + $0x134] sm:$0xf]
  %v293 = vld [vmem:[%s2 + $0x138] sm:$0xf]
  %v294 = vld [vmem:[%s2 + $0x13c] sm:$0xf]
  %v295 = vld [vmem:[%s2 + $0x140] sm:$0xf]
  %v296 = vld [vmem:[%s2 + $0x144] sm:$0xf]
  %v297 = vld [vmem:[%s2 + $0x148] sm:$0xf]
  %v298 = vld [vmem:[%s2 + $0x14c] sm:$0xf]
  %v299 = vld [vmem:[%s2 + $0x150] sm:$0xf]
  %v300 = vld [vmem:[%s2 + $0x154] sm:$0xf]
  %v301 = vld [vmem:[%s2 + $0x158] sm:$0xf]
  %v302 = vld [vmem:[%s2 + $0x15c] sm:$0xf]
  %v303 = vld [vmem:[%s2 + $0x160] sm:$0xf]
  %v304 = vld [vmem:[%s2 + $0x164] sm:$0xf]
  %v305 = vld [vmem:[%s2 + $0x168] sm:$0xf]
  %v306 = vld [vmem:[%s2 + $0x16c] sm:$0xf]
  %v307 = vld [vmem:[%s2 + $0x170] sm:$0xf]
  %v308 = vld [vmem:[%s2 + $0x174] sm:$0xf]
  %v309 = vld [vmem:[%s2 + $0x178] sm:$0xf]
  %v310 = vld [vmem:[%s2 + $0x17c] sm:$0xf]
  %v311 = vld [vmem:[%s2 + $0x180] sm:$0xf]
  %v312 = vld [vmem:[%s2 + $0x184] sm:$0xf]
  %v313 = vld [vmem:[%s2 + $0x188] sm:$0xf]
  %v314 = vld [vmem:[%s2 + $0x18c] sm:$0xf]
  %v315 = vld [vmem:[%s2 + $0x190] sm:$0xf]
  %v316 = vld [vmem:[%s2 + $0x194] sm:$0xf]
  %v317 = vld [vmem:[%s2 + $0x198] sm:$0xf]
  %v318 = vld [vmem:[%s2 + $0x19c] sm:$0xf]
  %v319 = vld [vmem:[%s2 + $0x1a0] sm:$0xf]
  %v320 = vld [vmem:[%s2 + $0x1a4] sm:$0xf]
  %v321 = vld [vmem:[%s2 + $0x1a8] sm:$0xf]
  %v322 = vld [vmem:[%s2 + $0x1ac] sm:$0xf]
  %v323 = vld [vmem:[%s2 + $0x1b0] sm:$0xf]
  %v324 = vld [vmem:[%s2 + $0x1b4] sm:$0xf]
  %v325 = vld [vmem:[%s2 + $0x1b8] sm:$0xf]
  %v326 = vld [vmem:[%s2 + $0x1bc] sm:$0xf]
  %v327 = vld [vmem:[%s2 + $0x1c0] sm:$0xf]
  %v328 = vld [vmem:[%s2 + $0x1c4] sm:$0xf]
  %v329 = vld [vmem:[%s2 + $0x1c8] sm:$0xf]
  %v330 = vld [vmem:[%s2 + $0x1cc] sm:$0xf]
  %v331 = vld [vmem:[%s2 + $0x1d0] sm:$0xf]
  %v332 = vld [vmem:[%s2 + $0x1d4] sm:$0xf]
  %v333 = vld [vmem:[%s2 + $0x1d8] sm:$0xf]
  %v334 = vld [vmem:[%s2 + $0x1dc] sm:$0xf]
  %v335 = vld [vmem:[%s2 + $0x1e0] sm:$0xf]
  %v336 = vld [vmem:[%s2 + $0x1e4] sm:$0xf]
  %v337 = vld [vmem:[%s2 + $0x1e8] sm:$0xf]
  %v338 = vld [vmem:[%s2 + $0x1ec] sm:$0xf]
  %v339 = vld [vmem:[%s2 + $0x1f0] sm:$0xf]
  %v340 = vld [vmem:[%s2 + $0x1f4] sm:$0xf]
  %v341 = vld [vmem:[%s2 + $0x1f8] sm:$0xf]
  %v342 = vld [vmem:[%s2 + $0x1fc] sm:$0xf]
  %v343 = vld [vmem:[%s2 + $0x200] sm:$0xf]
  %v344 = vld [vmem:[%s2 + $0x204] sm:$0xf]
  %v345 = vld [vmem:[%s2 + $0x208] sm:$0xf]
  %v346 = vld [vmem:[%s2 + $0x20c] sm:$0xf]
  %v347 = vld [vmem:[%s2 + $0x210] sm:$0xf]
  %v348 = vld [vmem:[%s2 + $0x214] sm:$0xf]
  %v349 = vld [vmem:[%s2 + $0x218] sm:$0xf]
  %v350 = vld [vmem:[%s2 + $0x21c] sm:$0xf]
  %v351 = vld [vmem:[%s2 + $0x220] sm:$0xf]
  %v352 = vld [vmem:[%s2 + $0x224] sm:$0xf]
  %v353 = vld [vmem:[%s2 + $0x228] sm:$0xf]
  %v354 = vld [vmem:[%s2 + $0x22c] sm:$0xf]
  %v355 = vld [vmem:[%s2 + $0x230] sm:$0xf]
  %v356 = vld [vmem:[%s2 + $0x234] sm:$0xf]
  %v357 = vld [vmem:[%s2 + $0x238] sm:$0xf]
  %v358 = vld [vmem:[%s2 + $0x23c] sm:$0xf]
  %v359 = vld [vmem:[%s2 + $0x240] sm:$0xf]
  %v360 = vld [vmem:[%s2 + $0x244] sm:$0xf]
  %v361 = vld [vmem:[%s2 + $0x248] sm:$0xf]
  %v362 = vld [vmem:[%s2 + $0x24c] sm:$0xf]
  %v363 = vld [vmem:[%s2 + $0x250] sm:$0xf]
  %v364 = vld [vmem:[%s2 + $0x254] sm:$0xf]
  %v365 = vld [vmem:[%s2 + $0x258] sm:$0xf]
  %v366 = vld [vmem:[%s2 + $0x25c] sm:$0xf]
  %v367 = vld [vmem:[%s2 + $0x260] sm:$0xf]
  %v368 = vld [vmem:[%s2 + $0x264] sm:$0xf]
  %v369 = vld [vmem:[%s2 + $0x268] sm:$0xf]
  %v370 = vld [vmem:[%s2 + $0x26c] sm:$0xf]
  %v371 = vld [vmem:[%s2 + $0x270] sm:$0xf]
  %v372 = vld [vmem:[%s2 + $0x274] sm:$0xf]
  %v373 = vld [vmem:[%s2 + $0x278] sm:$0xf]
  %v374 = vld [vmem:[%s2 + $0x27c] sm:$0xf]
  %v375 = vld [vmem:[%s2 + $0x280] sm:$0xf]
  %v376 = vld [vmem:[%s2 + $0x284] sm:$0xf]
  %v377 = vld [vmem:[%s2 + $0x288] sm:$0xf]
  %v378 = vld [vmem:[%s2 + $0x28c] sm:$0xf]
  %v379 = vld [vmem:[%s2 + $0x290] sm:$0xf]
  %v380 = vld [vmem:[%s2 + $0x294] sm:$0xf]
  %v381 = vld [vmem:[%s2 + $0x298] sm:$0xf]
  %v382 = vld [vmem:[%s2 + $0x29c] sm:$0xf]
  %v383 = vld [vmem:[%s2 + $0x2a0] sm:$0xf]
  %v384 = vld [vmem:[%s2 + $0x2a4] sm:$0xf]
  %v385 = vld [vmem:[%s2 + $0x2a8] sm:$0xf]
  %v386 = vld [vmem:[%s2 + $0x2ac] sm:$0xf]
  %v387 = vld [vmem:[%s2 + $0x2b0] sm:$0xf]
  %v388 = vld [vmem:[%s2 + $0x2b4] sm:$0xf]
  %v389 = vld [vmem:[%s2 + $0x2b8] sm:$0xf]
  %v390 = vld [vmem:[%s2 + $0x2bc] sm:$0xf]
  %v391 = vld [vmem:[%s2 + $0x2c0] sm:$0xf]
  %v392 = vld [vmem:[%s2 + $0x2c4] sm:$0xf]
  %v393 = vld [vmem:[%s2 + $0x2c8] sm:$0xf]
  %v394 = vld [vmem:[%s2 + $0x2cc] sm:$0xf]
  %v395 = vld [vmem:[%s2 + $0x2d0] sm:$0xf]
  %v396 = vld [vmem:[%s2 + $0x2d4] sm:$0xf]
  %v397 = vld [vmem:[%s2 + $0x2d8] sm:$0xf]
  %v398 = vld [vmem:[%s2 + $0x2dc] sm:$0xf]
  %v399 = vld [vmem:[%s2 + $0x2e0] sm:$0xf]
  %v400 = vld [vmem:[%s2 + $0x2e4] sm:$0xf]
  %v401 = vld [vmem:[%s2 + $0x2e8] sm:$0xf]
  %v402 = vld [vmem:[%s2 + $0x2ec] sm:$0xf]
  %v403 = vld [vmem:[%s2 + $0x2f0] sm:$0xf]
  %v404 = vld [vmem:[%s2 + $0x2f4] sm:$0xf]
  %v405 = vld [vmem:[%s2 + $0x2f8] sm:$0xf]
  %v406 = vld [vmem:[%s2 + $0x2fc] sm:$0xf]
  %v407 = vld [vmem:[%s2 + $0x300] sm:$0xf]
  %v408 = vld [vmem:[%s2 + $0x304] sm:$0xf]
  %v409 = vld [vmem:[%s2 + $0x308] sm:$0xf]
  %v410 = vld [vmem:[%s2 + $0x30c] sm:$0xf]
  %v411 = vld [vmem:[%s2 + $0x310] sm:$0xf]
  %v412 = vld [vmem:[%s2 + $0x314] sm:$0xf]
  %v413 = vld [vmem:[%s2 + $0x318] sm:$0xf]
  %v414 = vld [vmem:[%s2 + $0x31c] sm:$0xf]
  %v415 = vld [vmem:[%s2 + $0x320] sm:$0xf]
  %v416 = vld [vmem:[%s2 + $0x324] sm:$0xf]
  %v417 = vld [vmem:[%s2 + $0x328] sm:$0xf]
  %v418 = vld [vmem:[%s2 + $0x32c] sm:$0xf]
  %v419 = vld [vmem:[%s2 + $0x330] sm:$0xf]
  %v420 = vld [vmem:[%s2 + $0x334] sm:$0xf]
  %v421 = vld [vmem:[%s2 + $0x338] sm:$0xf]
  %v422 = vld [vmem:[%s2 + $0x33c] sm:$0xf]
  %v423 = vld [vmem:[%s2 + $0x340] sm:$0xf]
  %v424 = vld [vmem:[%s2 + $0x344] sm:$0xf]
  %v425 = vld [vmem:[%s2 + $0x348] sm:$0xf]
  %v426 = vld [vmem:[%s2 + $0x34c] sm:$0xf]
  %v427 = vld [vmem:[%s2 + $0x350] sm:$0xf]
  %v428 = vld [vmem:[%s2 + $0x354] sm:$0xf]
  %v429 = vld [vmem:[%s2 + $0x358] sm:$0xf]
  %v430 = vld [vmem:[%s2 + $0x35c] sm:$0xf]
  %v431 = vld [vmem:[%s2 + $0x360] sm:$0xf]
  %v432 = vld [vmem:[%s2 + $0x364] sm:$0xf]
  %v433 = vld [vmem:[%s2 + $0x368] sm:$0xf]
  %v434 = vld [vmem:[%s2 + $0x36c] sm:$0xf]
  %v435 = vld [vmem:[%s2 + $0x370] sm:$0xf]
  %v436 = vld [vmem:[%s2 + $0x374] sm:$0xf]
  %v437 = vld [vmem:[%s2 + $0x378] sm:$0xf]
  %v438 = vld [vmem:[%s2 + $0x37c] sm:$0xf]
  %v439 = vld [vmem:[%s2 + $0x380] sm:$0xf]
  %v440 = vld [vmem:[%s2 + $0x384] sm:$0xf]
  %v441 = vld [vmem:[%s2 + $0x388] sm:$0xf]
  %v442 = vld [vmem:[%s2 + $0x38c] sm:$0xf]
  %v443 = vld [vmem:[%s2 + $0x390] sm:$0xf]
  %v444 = vld [vmem:[%s2 + $0x394] sm:$0xf]
  %v445 = vld [vmem:[%s2 + $0x398] sm:$0xf]
  %v446 = vld [vmem:[%s2 + $0x39c] sm:$0xf]
  %v447 = vld [vmem:[%s2 + $0x3a0] sm:$0xf]
  %v448 = vld [vmem:[%s2 + $0x3a4] sm:$0xf]
  %v449 = vld [vmem:[%s2 + $0x3a8] sm:$0xf]
  %v450 = vld [vmem:[%s2 + $0x3ac] sm:$0xf]
  %v451 = vld [vmem:[%s2 + $0x3b0] sm:$0xf]
  %v452 = vld [vmem:[%s2 + $0x3b4] sm:$0xf]
  %v453 = vld [vmem:[%s2 + $0x3b8] sm:$0xf]
  %v454 = vld [vmem:[%s2 + $0x3bc] sm:$0xf]
  %v455 = vld [vmem:[%s2 + $0x3c0] sm:$0xf]
  %v456 = vld [vmem:[%s2 + $0x3c4] sm:$0xf]
  %v457 = vld [vmem:[%s2 + $0x3c8] sm:$0xf]
  %v458 = vld [vmem:[%s2 + $0x3cc] sm:$0xf]
  %v459 = vld [vmem:[%s2 + $0x3d0] sm:$0xf]
  %v460 = vld [vmem:[%s2 + $0x3d4] sm:$0xf]
  %v461 = vld [vmem:[%s2 + $0x3d8] sm:$0xf]
  %v462 = vld [vmem:[%s2 + $0x3dc] sm:$0xf]
  %v463 = vld [vmem:[%s2 + $0x3e0] sm:$0xf]
  %v464 = vld [vmem:[%s2 + $0x3e4] sm:$0xf]
  %v465 = vld [vmem:[%s2 + $0x3e8] sm:$0xf]
  %v466 = vld [vmem:[%s2 + $0x3ec] sm:$0xf]
  %v467 = vld [vmem:[%s2 + $0x3f0] sm:$0xf]
  %v468 = vld [vmem:[%s2 + $0x3f4] sm:$0xf]
  %v469 = vld [vmem:[%s2 + $0x3f8] sm:$0xf]
  %v470 = vld [vmem:[%s2 + $0x3fc] sm:$0xf]
  %v471 = vld [vmem:[%s2 + $0x400] sm:$0xf]
  %v472 = vld [vmem:[%s2 + $0x404] sm:$0xf]
  %v473 = vld [vmem:[%s2 + $0x408] sm:$0xf]
  %v474 = vld [vmem:[%s2 + $0x40c] sm:$0xf]
  %v475 = vld [vmem:[%s2 + $0x410] sm:$0xf]
  %v476 = vld [vmem:[%s2 + $0x414] sm:$0xf]
  %v477 = vld [vmem:[%s2 + $0x418] sm:$0xf]
  %v478 = vld [vmem:[%s2 + $0x41c] sm:$0xf]
  %v479 = vld [vmem:[%s2 + $0x420] sm:$0xf]
  %v480 = vld [vmem:[%s2 + $0x424] sm:$0xf]
  %v481 = vld [vmem:[%s2 + $0x428] sm:$0xf]
  %v482 = vld [vmem:[%s2 + $0x42c] sm:$0xf]
  %v483 = vld [vmem:[%s2 + $0x430] sm:$0xf]
  %v484 = vld [vmem:[%s2 + $0x434] sm:$0xf]
  %v485 = vld [vmem:[%s2 + $0x438] sm:$0xf]
  %v486 = vld [vmem:[%s2 + $0x43c] sm:$0xf]
  %v487 = vld [vmem:[%s2 + $0x440] sm:$0xf]
  %v488 = vld [vmem:[%s2 + $0x444] sm:$0xf]
  %v489 = vld [vmem:[%s2 + $0x448] sm:$0xf]
  %v490 = vld [vmem:[%s2 + $0x44c] sm:$0xf]
  %v491 = vld [vmem:[%s2 + $0x450] sm:$0xf]
  %v492 = vld [vmem:[%s2 + $0x454] sm:$0xf]
  %v493 = vld [vmem:[%s2 + $0x458] sm:$0xf]
  %v494 = vld [vmem:[%s2 + $0x45c] sm:$0xf]
  %v495 = vld [vmem:[%s2 + $0x460] sm:$0xf]
  %v496 = vld [vmem:[%s2 + $0x464] sm:$0xf]
  %v497 = vld [vmem:[%s2 + $0x468] sm:$0xf]
  %v498 = vld [vmem:[%s2 + $0x46c] sm:$0xf]
  %v499 = vld [vmem:[%s2 + $0x470] sm:$0xf]
  %v500 = vld [vmem:[%s2 + $0x474] sm:$0xf]
  %v501 = vld [vmem:[%s2 + $0x478] sm:$0xf]
  %v502 = vld [vmem:[%s2 + $0x47c] sm:$0xf]
  %v503 = vld [vmem:[%s2 + $0x480] sm:$0xf]
  %v504 = vld [vmem:[%s2 + $0x484] sm:$0xf]
  %v505 = vld [vmem:[%s2 + $0x488] sm:$0xf]
  %v506 = vld [vmem:[%s2 + $0x48c] sm:$0xf]
  %v507 = vld [vmem:[%s2 + $0x490] sm:$0xf]
  %v508 = vld [vmem:[%s2 + $0x494] sm:$0xf]
  %v509 = vld [vmem:[%s2 + $0x498] sm:$0xf]
  %v510 = vld [vmem:[%s2 + $0x49c] sm:$0xf]
  %v511 = vld [vmem:[%s2 + $0x4a0] sm:$0xf]
  %v512 = vld [vmem:[%s2 + $0x4a4] sm:$0xf]
  %v513 = vld [vmem:[%s2 + $0x4a8] sm:$0xf]
  %v514 = vld [vmem:[%s2 + $0x4ac] sm:$0xf]
  %v515 = vld [vmem:[%s2 + $0x4b0] sm:$0xf]
  %v516 = vld [vmem:[%s2 + $0x4b4] sm:$0xf]
  %v517 = vld [vmem:[%s2 + $0x4b8] sm:$0xf]
  %v518 = vld [vmem:[%s2 + $0x4bc] sm:$0xf]
  %v519 = vld [vmem:[%s2 + $0x4c0] sm:$0xf]
  %v520 = vld [vmem:[%s2 + $0x4c4] sm:$0xf]
  %v521 = vld [vmem:[%s2 + $0x4c8] sm:$0xf]
  %v522 = vld [vmem:[%s2 + $0x4cc] sm:$0xf]
  %v523 = vld [vmem:[%s2 + $0x4d0] sm:$0xf]
  %v524 = vld [vmem:[%s2 + $0x4d4] sm:$0xf]
  %v525 = vld [vmem:[%s2 + $0x4d8] sm:$0xf]
  %v526 = vld [vmem:[%s2 + $0x4dc] sm:$0xf]
  %v527 = vld [vmem:[%s2 + $0x4e0] sm:$0xf]
  %v528 = vld [vmem:[%s2 + $0x4e4] sm:$0xf]
  %v529 = vld [vmem:[%s2 + $0x4e8] sm:$0xf]
  %v530 = vld [vmem:[%s2 + $0x4ec] sm:$0xf]
  %v531 = vld [vmem:[%s2 + $0x4f0] sm:$0xf]
  %v532 = vld [vmem:[%s2 + $0x4f4] sm:$0xf]
  %v533 = vld [vmem:[%s2 + $0x4f8] sm:$0xf]
  %v534 = vld [vmem:[%s2 + $0x4fc] sm:$0xf]
  %v535 = vld [vmem:[%s2 + $0x500] sm:$0xf]
  %v536 = vld [vmem:[%s2 + $0x504] sm:$0xf]
  %v537 = vld [vmem:[%s2 + $0x508] sm:$0xf]
  %v538 = vld [vmem:[%s2 + $0x50c] sm:$0xf]
  %v539 = vld [vmem:[%s2 + $0x510] sm:$0xf]
  %v540 = vld [vmem:[%s2 + $0x514] sm:$0xf]
  %v541 = vld [vmem:[%s2 + $0x518] sm:$0xf]
  %v542 = vld [vmem:[%s2 + $0x51c] sm:$0xf]
  %v543 = vld [vmem:[%s2 + $0x520] sm:$0xf]
  %v544 = vld [vmem:[%s2 + $0x524] sm:$0xf]
  %v545 = vld [vmem:[%s2 + $0x528] sm:$0xf]
  %v546 = vld [vmem:[%s2 + $0x52c] sm:$0xf]
  %v547 = vld [vmem:[%s2 + $0x530] sm:$0xf]
  %v548 = vld [vmem:[%s2 + $0x534] sm:$0xf]
  %v549 = vld [vmem:[%s2 + $0x538] sm:$0xf]
  %v550 = vld [vmem:[%s2 + $0x53c] sm:$0xf]
  %v551 = vld [vmem:[%s2 + $0x540] sm:$0xf]
  %v552 = vld [vmem:[%s2 + $0x544] sm:$0xf]
  %v553 = vld [vmem:[%s2 + $0x548] sm:$0xf]
  %v554 = vld [vmem:[%s2 + $0x54c] sm:$0xf]
  %v555 = vld [vmem:[%s2 + $0x550] sm:$0xf]
  %v556 = vld [vmem:[%s2 + $0x554] sm:$0xf]
  %v557 = vld [vmem:[%s2 + $0x558] sm:$0xf]
  %v558 = vld [vmem:[%s2 + $0x55c] sm:$0xf]
  %v559 = vld [vmem:[%s2 + $0x560] sm:$0xf]
  %v560 = vld [vmem:[%s2 + $0x564] sm:$0xf]
  %v561 = vld [vmem:[%s2 + $0x568] sm:$0xf]
  %v562 = vld [vmem:[%s2 + $0x56c] sm:$0xf]
  %v563 = vld [vmem:[%s2 + $0x570] sm:$0xf]
  %v564 = vld [vmem:[%s2 + $0x574] sm:$0xf]
  %v565 = vld [vmem:[%s2 + $0x578] sm:$0xf]
  %v566 = vld [vmem:[%s2 + $0x57c] sm:$0xf]
  %v567 = vld [vmem:[%s2 + $0x580] sm:$0xf]
  %v568 = vld [vmem:[%s2 + $0x584] sm:$0xf]
  %v569 = vld [vmem:[%s2 + $0x588] sm:$0xf]
  %v570 = vld [vmem:[%s2 + $0x58c] sm:$0xf]
  %v571 = vld [vmem:[%s2 + $0x590] sm:$0xf]
  %v572 = vld [vmem:[%s2 + $0x594] sm:$0xf]
  %v573 = vld [vmem:[%s2 + $0x598] sm:$0xf]
  %v574 = vld [vmem:[%s2 + $0x59c] sm:$0xf]
  %v575 = vld [vmem:[%s2 + $0x5a0] sm:$0xf]
  %v576 = vld [vmem:[%s2 + $0x5a4] sm:$0xf]
  %v577 = vld [vmem:[%s2 + $0x5a8] sm:$0xf]
  %v578 = vld [vmem:[%s2 + $0x5ac] sm:$0xf]
  %v579 = vld [vmem:[%s2 + $0x5b0] sm:$0xf]
  %v580 = vld [vmem:[%s2 + $0x5b4] sm:$0xf]
  %v581 = vld [vmem:[%s2 + $0x5b8] sm:$0xf]
  %v582 = vld [vmem:[%s2 + $0x5bc] sm:$0xf]
  %v583 = vld [vmem:[%s2 + $0x5c0] sm:$0xf]
  %v584 = vld [vmem:[%s2 + $0x5c4] sm:$0xf]
  %v585 = vld [vmem:[%s2 + $0x5c8] sm:$0xf]
  %v586 = vld [vmem:[%s2 + $0x5cc] sm:$0xf]
  %v587 = vld [vmem:[%s2 + $0x5d0] sm:$0xf]
  %v588 = vld [vmem:[%s2 + $0x5d4] sm:$0xf]
  %v589 = vld [vmem:[%s2 + $0x5d8] sm:$0xf]
  %v590 = vld [vmem:[%s2 + $0x5dc] sm:$0xf]
  %v591 = vld [vmem:[%s2 + $0x5e0] sm:$0xf]
  %v592 = vld [vmem:[%s2 + $0x5e4] sm:$0xf]
  %v593 = vld [vmem:[%s2 + $0x5e8] sm:$0xf]
  %v594 = vld [vmem:[%s2 + $0x5ec] sm:$0xf]
  %v595 = vld [vmem:[%s2 + $0x5f0] sm:$0xf]
  %v596 = vld [vmem:[%s2 + $0x5f4] sm:$0xf]
  %v597 = vld [vmem:[%s2 + $0x5f8] sm:$0xf]
  %v598 = vld [vmem:[%s2 + $0x5fc] sm:$0xf]
  %v599 = vld [vmem:[%s2 + $0x600] sm:$0xf]
  %v600 = vld [vmem:[%s2 + $0x604] sm:$0xf]
  %v601 = vld [vmem:[%s2 + $0x608] sm:$0xf]
  %v602 = vld [vmem:[%s2 + $0x60c] sm:$0xf]
  %v603 = vld [vmem:[%s2 + $0x610] sm:$0xf]
  %v604 = vld [vmem:[%s2 + $0x614] sm:$0xf]
  %v605 = vld [vmem:[%s2 + $0x618] sm:$0xf]
  %v606 = vld [vmem:[%s2 + $0x61c] sm:$0xf]
  %v607 = vld [vmem:[%s2 + $0x620] sm:$0xf]
  %v608 = vld [vmem:[%s2 + $0x624] sm:$0xf]
  %v609 = vld [vmem:[%s2 + $0x628] sm:$0xf]
  %v610 = vld [vmem:[%s2 + $0x62c] sm:$0xf]
  %v611 = vld [vmem:[%s2 + $0x630] sm:$0xf]
  %v612 = vld [vmem:[%s2 + $0x634] sm:$0xf]
  %v613 = vld [vmem:[%s2 + $0x638] sm:$0xf]
  %v614 = vld [vmem:[%s2 + $0x63c] sm:$0xf]
  %v615 = vld [vmem:[%s2 + $0x640] sm:$0xf]
  %v616 = vld [vmem:[%s2 + $0x644] sm:$0xf]
  %v617 = vld [vmem:[%s2 + $0x648] sm:$0xf]
  %v618 = vld [vmem:[%s2 + $0x64c] sm:$0xf]
  %v619 = vld [vmem:[%s2 + $0x650] sm:$0xf]
  %v620 = vld [vmem:[%s2 + $0x654] sm:$0xf]
  %v621 = vld [vmem:[%s2 + $0x658] sm:$0xf]
  %v622 = vld [vmem:[%s2 + $0x65c] sm:$0xf]
  %v623 = vld [vmem:[%s1] sm:$0x3]
  %v624 = vld [vmem:[%s3] sm:$0x3]
  %626 = vset.pattern.permute.xlu0 0
  %627 = vperm.xlu0 %626, %v623
  %v628 = vpop.permute.xlu0 %627
  %v630 = vlaneseq
  %v631 = vshrl.u32 %v630, 7
  %v632 = vsub.s32 0, %v631
  %v633 = vrot.slane %v624, %v632
  %v634 = vmul.f32 %v628, %v633
  %v1043 = vunpack.c.l.b16 %v215
  %v1044 = vunpack.c.l.b16 %v216
  %v1045 = vunpack.c.l.b16 %v217
  %v1046 = vunpack.c.l.b16 %v218
  %v1047 = vunpack.c.l.b16 %v219
  %v1048 = vunpack.c.l.b16 %v220
  %v1049 = vunpack.c.l.b16 %v221
  %v1050 = vunpack.c.l.b16 %v222
  %v1051 = vunpack.c.l.b16 %v223
  %v1052 = vunpack.c.l.b16 %v224
  %v1053 = vunpack.c.l.b16 %v225
  %v1054 = vunpack.c.l.b16 %v226
  %v1055 = vunpack.c.l.b16 %v227
  %v1056 = vunpack.c.l.b16 %v228
  %v1057 = vunpack.c.l.b16 %v229
  %v1058 = vunpack.c.l.b16 %v230
  %v1059 = vunpack.c.l.b16 %v231
  %v1060 = vunpack.c.l.b16 %v232
  %v1061 = vunpack.c.l.b16 %v233
  %v1062 = vunpack.c.l.b16 %v234
  %v1063 = vunpack.c.l.b16 %v235
  %v1064 = vunpack.c.l.b16 %v236
  %v1065 = vunpack.c.l.b16 %v237
  %v1066 = vunpack.c.l.b16 %v238
  %v1067 = vunpack.c.l.b16 %v239
  %v1068 = vunpack.c.l.b16 %v240
  %v1069 = vunpack.c.l.b16 %v241
  %v1070 = vunpack.c.l.b16 %v242
  %v1071 = vunpack.c.l.b16 %v243
  %v1072 = vunpack.c.l.b16 %v244
  %v1073 = vunpack.c.l.b16 %v245
  %v1074 = vunpack.c.l.b16 %v246
  %v1075 = vunpack.c.l.b16 %v247
  %v1076 = vunpack.c.l.b16 %v248
  %v1077 = vunpack.c.l.b16 %v249
  %v1078 = vunpack.c.l.b16 %v250
  %v1079 = vunpack.c.l.b16 %v251
  %v1080 = vunpack.c.l.b16 %v252
  %v1081 = vunpack.c.l.b16 %v253
  %v1082 = vunpack.c.l.b16 %v254
  %v1083 = vunpack.c.l.b16 %v255
  %v1084 = vunpack.c.l.b16 %v256
  %v1085 = vunpack.c.l.b16 %v257
  %v1086 = vunpack.c.l.b16 %v258
  %v1087 = vunpack.c.l.b16 %v259
  %v1088 = vunpack.c.l.b16 %v260
  %v1089 = vunpack.c.l.b16 %v261
  %v1090 = vunpack.c.l.b16 %v262
  %v1091 = vunpack.c.l.b16 %v263
  %v1092 = vunpack.c.l.b16 %v264
  %v1093 = vunpack.c.l.b16 %v265
  %v1094 = vunpack.c.l.b16 %v266
  %v1095 = vunpack.c.l.b16 %v267
  %v1096 = vunpack.c.l.b16 %v268
  %v1097 = vunpack.c.l.b16 %v269
  %v1098 = vunpack.c.l.b16 %v270
  %v1099 = vunpack.c.l.b16 %v271
  %v1100 = vunpack.c.l.b16 %v272
  %v1101 = vunpack.c.l.b16 %v273
  %v1102 = vunpack.c.l.b16 %v274
  %v1103 = vunpack.c.l.b16 %v275
  %v1104 = vunpack.c.l.b16 %v276
  %v1105 = vunpack.c.l.b16 %v277
  %v1106 = vunpack.c.l.b16 %v278
  %v1107 = vunpack.c.l.b16 %v279
  %v1108 = vunpack.c.l.b16 %v280
  %v1109 = vunpack.c.l.b16 %v281
  %v1110 = vunpack.c.l.b16 %v282
  %v1111 = vunpack.c.l.b16 %v283
  %v1112 = vunpack.c.l.b16 %v284
  %v1113 = vunpack.c.l.b16 %v285
  %v1114 = vunpack.c.l.b16 %v286
  %v1115 = vunpack.c.l.b16 %v287
  %v1116 = vunpack.c.l.b16 %v288
  %v1117 = vunpack.c.l.b16 %v289
  %v1118 = vunpack.c.l.b16 %v290
  %v1119 = vunpack.c.l.b16 %v291
  %v1120 = vunpack.c.l.b16 %v292
  %v1121 = vunpack.c.l.b16 %v293
  %v1122 = vunpack.c.l.b16 %v294
  %v1123 = vunpack.c.l.b16 %v295
  %v1124 = vunpack.c.l.b16 %v296
  %v1125 = vunpack.c.l.b16 %v297
  %v1126 = vunpack.c.l.b16 %v298
  %v1127 = vunpack.c.l.b16 %v299
  %v1128 = vunpack.c.l.b16 %v300
  %v1129 = vunpack.c.l.b16 %v301
  %v1130 = vunpack.c.l.b16 %v302
  %v1131 = vunpack.c.l.b16 %v303
  %v1132 = vunpack.c.l.b16 %v304
  %v1133 = vunpack.c.l.b16 %v305
  %v1134 = vunpack.c.l.b16 %v306
  %v1135 = vunpack.c.l.b16 %v307
  %v1136 = vunpack.c.l.b16 %v308
  %v1137 = vunpack.c.l.b16 %v309
  %v1138 = vunpack.c.l.b16 %v310
  %v1139 = vunpack.c.l.b16 %v311
  %v1140 = vunpack.c.l.b16 %v312
  %v1141 = vunpack.c.l.b16 %v313
  %v1142 = vunpack.c.l.b16 %v314
  %v1143 = vunpack.c.l.b16 %v315
  %v1144 = vunpack.c.l.b16 %v316
  %v1145 = vunpack.c.l.b16 %v317
  %v1146 = vunpack.c.l.b16 %v318
  %v1147 = vunpack.c.l.b16 %v319
  %v1148 = vunpack.c.l.b16 %v320
  %v1149 = vunpack.c.l.b16 %v321
  %v1150 = vunpack.c.l.b16 %v322
  %v1151 = vunpack.c.l.b16 %v323
  %v1152 = vunpack.c.l.b16 %v324
  %v1153 = vunpack.c.l.b16 %v325
  %v1154 = vunpack.c.l.b16 %v326
  %v1155 = vunpack.c.l.b16 %v327
  %v1156 = vunpack.c.l.b16 %v328
  %v1157 = vunpack.c.l.b16 %v329
  %v1158 = vunpack.c.l.b16 %v330
  %v1159 = vunpack.c.l.b16 %v331
  %v1160 = vunpack.c.l.b16 %v332
  %v1161 = vunpack.c.l.b16 %v333
  %v1162 = vunpack.c.l.b16 %v334
  %v1163 = vunpack.c.l.b16 %v335
  %v1164 = vunpack.c.l.b16 %v336
  %v1165 = vunpack.c.l.b16 %v337
  %v1166 = vunpack.c.l.b16 %v338
  %v1167 = vunpack.c.l.b16 %v339
  %v1168 = vunpack.c.l.b16 %v340
  %v1169 = vunpack.c.l.b16 %v341
  %v1170 = vunpack.c.l.b16 %v342
  %v1171 = vunpack.c.l.b16 %v343
  %v1172 = vunpack.c.l.b16 %v344
  %v1173 = vunpack.c.l.b16 %v345
  %v1174 = vunpack.c.l.b16 %v346
  %v1175 = vunpack.c.l.b16 %v347
  %v1176 = vunpack.c.l.b16 %v348
  %v1177 = vunpack.c.l.b16 %v349
  %v1178 = vunpack.c.l.b16 %v350
  %v1179 = vunpack.c.l.b16 %v351
  %v1180 = vunpack.c.l.b16 %v352
  %v1181 = vunpack.c.l.b16 %v353
  %v1182 = vunpack.c.l.b16 %v354
  %v1183 = vunpack.c.l.b16 %v355
  %v1184 = vunpack.c.l.b16 %v356
  %v1185 = vunpack.c.l.b16 %v357
  %v1186 = vunpack.c.l.b16 %v358
  %v1187 = vunpack.c.l.b16 %v359
  %v1188 = vunpack.c.l.b16 %v360
  %v1189 = vunpack.c.l.b16 %v361
  %v1190 = vunpack.c.l.b16 %v362
  %v1191 = vunpack.c.l.b16 %v363
  %v1192 = vunpack.c.l.b16 %v364
  %v1193 = vunpack.c.l.b16 %v365
  %v1194 = vunpack.c.l.b16 %v366
  %v1195 = vunpack.c.l.b16 %v367
  %v1196 = vunpack.c.l.b16 %v368
  %v1197 = vunpack.c.l.b16 %v369
  %v1198 = vunpack.c.l.b16 %v370
  %v1199 = vunpack.c.l.b16 %v371
  %v1200 = vunpack.c.l.b16 %v372
  %v1201 = vunpack.c.l.b16 %v373
  %v1202 = vunpack.c.l.b16 %v374
  %v1203 = vunpack.c.l.b16 %v375
  %v1204 = vunpack.c.l.b16 %v376
  %v1205 = vunpack.c.l.b16 %v377
  %v1206 = vunpack.c.l.b16 %v378
  %v1207 = vunpack.c.l.b16 %v379
  %v1208 = vunpack.c.l.b16 %v380
  %v1209 = vunpack.c.l.b16 %v381
  %v1210 = vunpack.c.l.b16 %v382
  %v1211 = vunpack.c.l.b16 %v383
  %v1212 = vunpack.c.l.b16 %v384
  %v1213 = vunpack.c.l.b16 %v385
  %v1214 = vunpack.c.l.b16 %v386
  %v1215 = vunpack.c.l.b16 %v387
  %v1216 = vunpack.c.l.b16 %v388
  %v1217 = vunpack.c.l.b16 %v389
  %v1218 = vunpack.c.l.b16 %v390
  %v1219 = vunpack.c.l.b16 %v391
  %v1220 = vunpack.c.l.b16 %v392
  %v1221 = vunpack.c.l.b16 %v393
  %v1222 = vunpack.c.l.b16 %v394
  %v1223 = vunpack.c.l.b16 %v395
  %v1224 = vunpack.c.l.b16 %v396
  %v1225 = vunpack.c.l.b16 %v397
  %v1226 = vunpack.c.l.b16 %v398
  %v1227 = vunpack.c.l.b16 %v399
  %v1228 = vunpack.c.l.b16 %v400
  %v1229 = vunpack.c.l.b16 %v401
  %v1230 = vunpack.c.l.b16 %v402
  %v1231 = vunpack.c.l.b16 %v403
  %v1232 = vunpack.c.l.b16 %v404
  %v1233 = vunpack.c.l.b16 %v405
  %v1234 = vunpack.c.l.b16 %v406
  %v1235 = vunpack.c.l.b16 %v407
  %v1236 = vunpack.c.l.b16 %v408
  %v1237 = vunpack.c.l.b16 %v409
  %v1238 = vunpack.c.l.b16 %v410
  %v1239 = vunpack.c.l.b16 %v411
  %v1240 = vunpack.c.l.b16 %v412
  %v1241 = vunpack.c.l.b16 %v413
  %v1242 = vunpack.c.l.b16 %v414
  %v1243 = vunpack.c.l.b16 %v415
  %v1244 = vunpack.c.l.b16 %v416
  %v1245 = vunpack.c.l.b16 %v417
  %v1246 = vunpack.c.l.b16 %v418
  %v1247 = vunpack.c.l.b16 %v419
  %v1248 = vunpack.c.l.b16 %v420
  %v1249 = vunpack.c.l.b16 %v421
  %v1250 = vunpack.c.l.b16 %v422
  %v1251 = vunpack.c.l.b16 %v423
  %v1252 = vunpack.c.l.b16 %v424
  %v1253 = vunpack.c.l.b16 %v425
  %v1254 = vunpack.c.l.b16 %v426
  %v1255 = vunpack.c.l.b16 %v427
  %v1256 = vunpack.c.l.b16 %v428
  %v1257 = vunpack.c.l.b16 %v429
  %v1258 = vunpack.c.l.b16 %v430
  %v1259 = vunpack.c.l.b16 %v431
  %v1260 = vunpack.c.l.b16 %v432
  %v1261 = vunpack.c.l.b16 %v433
  %v1262 = vunpack.c.l.b16 %v434
  %v1263 = vunpack.c.l.b16 %v435
  %v1264 = vunpack.c.l.b16 %v436
  %v1265 = vunpack.c.l.b16 %v437
  %v1266 = vunpack.c.l.b16 %v438
  %v1267 = vunpack.c.l.b16 %v439
  %v1268 = vunpack.c.l.b16 %v440
  %v1269 = vunpack.c.l.b16 %v441
  %v1270 = vunpack.c.l.b16 %v442
  %v1271 = vunpack.c.l.b16 %v443
  %v1272 = vunpack.c.l.b16 %v444
  %v1273 = vunpack.c.l.b16 %v445
  %v1274 = vunpack.c.l.b16 %v446
  %v1275 = vunpack.c.l.b16 %v447
  %v1276 = vunpack.c.l.b16 %v448
  %v1277 = vunpack.c.l.b16 %v449
  %v1278 = vunpack.c.l.b16 %v450
  %v1279 = vunpack.c.l.b16 %v451
  %v1280 = vunpack.c.l.b16 %v452
  %v1281 = vunpack.c.l.b16 %v453
  %v1282 = vunpack.c.l.b16 %v454
  %v1283 = vunpack.c.l.b16 %v455
  %v1284 = vunpack.c.l.b16 %v456
  %v1285 = vunpack.c.l.b16 %v457
  %v1286 = vunpack.c.l.b16 %v458
  %v1287 = vunpack.c.l.b16 %v459
  %v1288 = vunpack.c.l.b16 %v460
  %v1289 = vunpack.c.l.b16 %v461
  %v1290 = vunpack.c.l.b16 %v462
  %v1291 = vunpack.c.l.b16 %v463
  %v1292 = vunpack.c.l.b16 %v464
  %v1293 = vunpack.c.l.b16 %v465
  %v1294 = vunpack.c.l.b16 %v466
  %v1295 = vunpack.c.l.b16 %v467
  %v1296 = vunpack.c.l.b16 %v468
  %v1297 = vunpack.c.l.b16 %v469
  %v1298 = vunpack.c.l.b16 %v470
  %v1299 = vunpack.c.l.b16 %v471
  %v1300 = vunpack.c.l.b16 %v472
  %v1301 = vunpack.c.l.b16 %v473
  %v1302 = vunpack.c.l.b16 %v474
  %v1303 = vunpack.c.l.b16 %v475
  %v1304 = vunpack.c.l.b16 %v476
  %v1305 = vunpack.c.l.b16 %v477
  %v1306 = vunpack.c.l.b16 %v478
  %v1307 = vunpack.c.l.b16 %v479
  %v1308 = vunpack.c.l.b16 %v480
  %v1309 = vunpack.c.l.b16 %v481
  %v1310 = vunpack.c.l.b16 %v482
  %v1311 = vunpack.c.l.b16 %v483
  %v1312 = vunpack.c.l.b16 %v484
  %v1313 = vunpack.c.l.b16 %v485
  %v1314 = vunpack.c.l.b16 %v486
  %v1315 = vunpack.c.l.b16 %v487
  %v1316 = vunpack.c.l.b16 %v488
  %v1317 = vunpack.c.l.b16 %v489
  %v1318 = vunpack.c.l.b16 %v490
  %v1319 = vunpack.c.l.b16 %v491
  %v1320 = vunpack.c.l.b16 %v492
  %v1321 = vunpack.c.l.b16 %v493
  %v1322 = vunpack.c.l.b16 %v494
  %v1323 = vunpack.c.l.b16 %v495
  %v1324 = vunpack.c.l.b16 %v496
  %v1325 = vunpack.c.l.b16 %v497
  %v1326 = vunpack.c.l.b16 %v498
  %v1327 = vunpack.c.l.b16 %v499
  %v1328 = vunpack.c.l.b16 %v500
  %v1329 = vunpack.c.l.b16 %v501
  %v1330 = vunpack.c.l.b16 %v502
  %v1331 = vunpack.c.l.b16 %v503
  %v1332 = vunpack.c.l.b16 %v504
  %v1333 = vunpack.c.l.b16 %v505
  %v1334 = vunpack.c.l.b16 %v506
  %v1335 = vunpack.c.l.b16 %v507
  %v1336 = vunpack.c.l.b16 %v508
  %v1337 = vunpack.c.l.b16 %v509
  %v1338 = vunpack.c.l.b16 %v510
  %v1339 = vunpack.c.l.b16 %v511
  %v1340 = vunpack.c.l.b16 %v512
  %v1341 = vunpack.c.l.b16 %v513
  %v1342 = vunpack.c.l.b16 %v514
  %v1343 = vunpack.c.l.b16 %v515
  %v1344 = vunpack.c.l.b16 %v516
  %v1345 = vunpack.c.l.b16 %v517
  %v1346 = vunpack.c.l.b16 %v518
  %v1347 = vunpack.c.l.b16 %v519
  %v1348 = vunpack.c.l.b16 %v520
  %v1349 = vunpack.c.l.b16 %v521
  %v1350 = vunpack.c.l.b16 %v522
  %v1351 = vunpack.c.l.b16 %v523
  %v1352 = vunpack.c.l.b16 %v524
  %v1353 = vunpack.c.l.b16 %v525
  %v1354 = vunpack.c.l.b16 %v526
  %v1355 = vunpack.c.l.b16 %v527
  %v1356 = vunpack.c.l.b16 %v528
  %v1357 = vunpack.c.l.b16 %v529
  %v1358 = vunpack.c.l.b16 %v530
  %v1359 = vunpack.c.l.b16 %v531
  %v1360 = vunpack.c.l.b16 %v532
  %v1361 = vunpack.c.l.b16 %v533
  %v1362 = vunpack.c.l.b16 %v534
  %v1363 = vunpack.c.l.b16 %v535
  %v1364 = vunpack.c.l.b16 %v536
  %v1365 = vunpack.c.l.b16 %v537
  %v1366 = vunpack.c.l.b16 %v538
  %v1367 = vunpack.c.l.b16 %v539
  %v1368 = vunpack.c.l.b16 %v540
  %v1369 = vunpack.c.l.b16 %v541
  %v1370 = vunpack.c.l.b16 %v542
  %v1371 = vunpack.c.l.b16 %v543
  %v1372 = vunpack.c.l.b16 %v544
  %v1373 = vunpack.c.l.b16 %v545
  %v1374 = vunpack.c.l.b16 %v546
  %v1375 = vunpack.c.l.b16 %v547
  %v1376 = vunpack.c.l.b16 %v548
  %v1377 = vunpack.c.l.b16 %v549
  %v1378 = vunpack.c.l.b16 %v550
  %v1379 = vunpack.c.l.b16 %v551
  %v1380 = vunpack.c.l.b16 %v552
  %v1381 = vunpack.c.l.b16 %v553
  %v1382 = vunpack.c.l.b16 %v554
  %v1383 = vunpack.c.l.b16 %v555
  %v1384 = vunpack.c.l.b16 %v556
  %v1385 = vunpack.c.l.b16 %v557
  %v1386 = vunpack.c.l.b16 %v558
  %v1387 = vunpack.c.l.b16 %v559
  %v1388 = vunpack.c.l.b16 %v560
  %v1389 = vunpack.c.l.b16 %v561
  %v1390 = vunpack.c.l.b16 %v562
  %v1391 = vunpack.c.l.b16 %v563
  %v1392 = vunpack.c.l.b16 %v564
  %v1393 = vunpack.c.l.b16 %v565
  %v1394 = vunpack.c.l.b16 %v566
  %v1395 = vunpack.c.l.b16 %v567
  %v1396 = vunpack.c.l.b16 %v568
  %v1397 = vunpack.c.l.b16 %v569
  %v1398 = vunpack.c.l.b16 %v570
  %v1399 = vunpack.c.l.b16 %v571
  %v1400 = vunpack.c.l.b16 %v572
  %v1401 = vunpack.c.l.b16 %v573
  %v1402 = vunpack.c.l.b16 %v574
  %v1403 = vunpack.c.l.b16 %v575
  %v1404 = vunpack.c.l.b16 %v576
  %v1405 = vunpack.c.l.b16 %v577
  %v1406 = vunpack.c.l.b16 %v578
  %v1407 = vunpack.c.l.b16 %v579
  %v1408 = vunpack.c.l.b16 %v580
  %v1409 = vunpack.c.l.b16 %v581
  %v1410 = vunpack.c.l.b16 %v582
  %v1411 = vunpack.c.l.b16 %v583
  %v1412 = vunpack.c.l.b16 %v584
  %v1413 = vunpack.c.l.b16 %v585
  %v1414 = vunpack.c.l.b16 %v586
  %v1415 = vunpack.c.l.b16 %v587
  %v1416 = vunpack.c.l.b16 %v588
  %v1417 = vunpack.c.l.b16 %v589
  %v1418 = vunpack.c.l.b16 %v590
  %v1419 = vunpack.c.l.b16 %v591
  %v1420 = vunpack.c.l.b16 %v592
  %v1421 = vunpack.c.l.b16 %v593
  %v1422 = vunpack.c.l.b16 %v594
  %v1423 = vunpack.c.l.b16 %v595
  %v1424 = vunpack.c.l.b16 %v596
  %v1425 = vunpack.c.l.b16 %v597
  %v1426 = vunpack.c.l.b16 %v598
  %v1427 = vunpack.c.l.b16 %v599
  %v1428 = vunpack.c.l.b16 %v600
  %v1429 = vunpack.c.l.b16 %v601
  %v1430 = vunpack.c.l.b16 %v602
  %v1431 = vunpack.c.l.b16 %v603
  %v1432 = vunpack.c.l.b16 %v604
  %v1433 = vunpack.c.l.b16 %v605
  %v1434 = vunpack.c.l.b16 %v606
  %v1435 = vunpack.c.l.b16 %v607
  %v1436 = vunpack.c.l.b16 %v608
  %v1437 = vunpack.c.l.b16 %v609
  %v1438 = vunpack.c.l.b16 %v610
  %v1439 = vunpack.c.l.b16 %v611
  %v1440 = vunpack.c.l.b16 %v612
  %v1441 = vunpack.c.l.b16 %v613
  %v1442 = vunpack.c.l.b16 %v614
  %v1443 = vunpack.c.l.b16 %v615
  %v1444 = vunpack.c.l.b16 %v616
  %v1445 = vunpack.c.l.b16 %v617
  %v1446 = vunpack.c.l.b16 %v618
  %v1447 = vunpack.c.l.b16 %v619
  %v1448 = vunpack.c.l.b16 %v620
  %v1449 = vunpack.c.l.b16 %v621
  %v1450 = vunpack.c.l.b16 %v622
  %v1451 = vpack.c.b16 %v1044, %v1043
  %v1452 = vpack.c.b16 %v1046, %v1045
  %v1453 = vpack.c.b16 %v1048, %v1047
  %v1454 = vpack.c.b16 %v1050, %v1049
  %v1455 = vpack.c.b16 %v1052, %v1051
  %v1456 = vpack.c.b16 %v1054, %v1053
  %v1457 = vpack.c.b16 %v1056, %v1055
  %v1458 = vpack.c.b16 %v1058, %v1057
  %v1459 = vpack.c.b16 %v1060, %v1059
  %v1460 = vpack.c.b16 %v1062, %v1061
  %v1461 = vpack.c.b16 %v1064, %v1063
  %v1462 = vpack.c.b16 %v1066, %v1065
  %v1463 = vpack.c.b16 %v1068, %v1067
  %v1464 = vpack.c.b16 %v1070, %v1069
  %v1465 = vpack.c.b16 %v1072, %v1071
  %v1466 = vpack.c.b16 %v1074, %v1073
  %v1467 = vpack.c.b16 %v1076, %v1075
  %v1468 = vpack.c.b16 %v1078, %v1077
  %v1469 = vpack.c.b16 %v1080, %v1079
  %v1470 = vpack.c.b16 %v1082, %v1081
  %v1471 = vpack.c.b16 %v1084, %v1083
  %v1472 = vpack.c.b16 %v1086, %v1085
  %v1473 = vpack.c.b16 %v1088, %v1087
  %v1474 = vpack.c.b16 %v1090, %v1089
  %v1475 = vpack.c.b16 %v1092, %v1091
  %v1476 = vpack.c.b16 %v1094, %v1093
  %v1477 = vpack.c.b16 %v1096, %v1095
  %v1478 = vpack.c.b16 %v1098, %v1097
  %v1479 = vpack.c.b16 %v1100, %v1099
  %v1480 = vpack.c.b16 %v1102, %v1101
  %v1481 = vpack.c.b16 %v1104, %v1103
  %v1482 = vpack.c.b16 %v1106, %v1105
  %v1483 = vpack.c.b16 %v1108, %v1107
  %v1484 = vpack.c.b16 %v1110, %v1109
  %v1485 = vpack.c.b16 %v1112, %v1111
  %v1486 = vpack.c.b16 %v1114, %v1113
  %v1487 = vpack.c.b16 %v1116, %v1115
  %v1488 = vpack.c.b16 %v1118, %v1117
  %v1489 = vpack.c.b16 %v1120, %v1119
  %v1490 = vpack.c.b16 %v1122, %v1121
  %v1491 = vpack.c.b16 %v1124, %v1123
  %v1492 = vpack.c.b16 %v1126, %v1125
  %v1493 = vpack.c.b16 %v1128, %v1127
  %v1494 = vpack.c.b16 %v1130, %v1129
  %v1495 = vpack.c.b16 %v1132, %v1131
  %v1496 = vpack.c.b16 %v1134, %v1133
  %v1497 = vpack.c.b16 %v1136, %v1135
  %v1498 = vpack.c.b16 %v1138, %v1137
  %v1499 = vpack.c.b16 %v1140, %v1139
  %v1500 = vpack.c.b16 %v1142, %v1141
  %v1501 = vpack.c.b16 %v1144, %v1143
  %v1502 = vpack.c.b16 %v1146, %v1145
  %v1503 = vpack.c.b16 %v1148, %v1147
  %v1504 = vpack.c.b16 %v1150, %v1149
  %v1505 = vpack.c.b16 %v1152, %v1151
  %v1506 = vpack.c.b16 %v1154, %v1153
  %v1507 = vpack.c.b16 %v1156, %v1155
  %v1508 = vpack.c.b16 %v1158, %v1157
  %v1509 = vpack.c.b16 %v1160, %v1159
  %v1510 = vpack.c.b16 %v1162, %v1161
  %v1511 = vpack.c.b16 %v1164, %v1163
  %v1512 = vpack.c.b16 %v1166, %v1165
  %v1513 = vpack.c.b16 %v1168, %v1167
  %v1514 = vpack.c.b16 %v1170, %v1169
  %v1515 = vpack.c.b16 %v1172, %v1171
  %v1516 = vpack.c.b16 %v1174, %v1173
  %v1517 = vpack.c.b16 %v1176, %v1175
  %v1518 = vpack.c.b16 %v1178, %v1177
  %v1519 = vpack.c.b16 %v1180, %v1179
  %v1520 = vpack.c.b16 %v1182, %v1181
  %v1521 = vpack.c.b16 %v1184, %v1183
  %v1522 = vpack.c.b16 %v1186, %v1185
  %v1523 = vpack.c.b16 %v1188, %v1187
  %v1524 = vpack.c.b16 %v1190, %v1189
  %v1525 = vpack.c.b16 %v1192, %v1191
  %v1526 = vpack.c.b16 %v1194, %v1193
  %v1527 = vpack.c.b16 %v1196, %v1195
  %v1528 = vpack.c.b16 %v1198, %v1197
  %v1529 = vpack.c.b16 %v1200, %v1199
  %v1530 = vpack.c.b16 %v1202, %v1201
  %v1531 = vpack.c.b16 %v1204, %v1203
  %v1532 = vpack.c.b16 %v1206, %v1205
  %v1533 = vpack.c.b16 %v1208, %v1207
  %v1534 = vpack.c.b16 %v1210, %v1209
  %v1535 = vpack.c.b16 %v1212, %v1211
  %v1536 = vpack.c.b16 %v1214, %v1213
  %v1537 = vpack.c.b16 %v1216, %v1215
  %v1538 = vpack.c.b16 %v1218, %v1217
  %v1539 = vpack.c.b16 %v1220, %v1219
  %v1540 = vpack.c.b16 %v1222, %v1221
  %v1541 = vpack.c.b16 %v1224, %v1223
  %v1542 = vpack.c.b16 %v1226, %v1225
  %v1543 = vpack.c.b16 %v1228, %v1227
  %v1544 = vpack.c.b16 %v1230, %v1229
  %v1545 = vpack.c.b16 %v1232, %v1231
  %v1546 = vpack.c.b16 %v1234, %v1233
  %v1547 = vpack.c.b16 %v1236, %v1235
  %v1548 = vpack.c.b16 %v1238, %v1237
  %v1549 = vpack.c.b16 %v1240, %v1239
  %v1550 = vpack.c.b16 %v1242, %v1241
  %v1551 = vpack.c.b16 %v1244, %v1243
  %v1552 = vpack.c.b16 %v1246, %v1245
  %v1553 = vpack.c.b16 %v1248, %v1247
  %v1554 = vpack.c.b16 %v1250, %v1249
  %v1555 = vpack.c.b16 %v1252, %v1251
  %v1556 = vpack.c.b16 %v1254, %v1253
  %v1557 = vpack.c.b16 %v1256, %v1255
  %v1558 = vpack.c.b16 %v1258, %v1257
  %v1559 = vpack.c.b16 %v1260, %v1259
  %v1560 = vpack.c.b16 %v1262, %v1261
  %v1561 = vpack.c.b16 %v1264, %v1263
  %v1562 = vpack.c.b16 %v1266, %v1265
  %v1563 = vpack.c.b16 %v1268, %v1267
  %v1564 = vpack.c.b16 %v1270, %v1269
  %v1565 = vpack.c.b16 %v1272, %v1271
  %v1566 = vpack.c.b16 %v1274, %v1273
  %v1567 = vpack.c.b16 %v1276, %v1275
  %v1568 = vpack.c.b16 %v1278, %v1277
  %v1569 = vpack.c.b16 %v1280, %v1279
  %v1570 = vpack.c.b16 %v1282, %v1281
  %v1571 = vpack.c.b16 %v1284, %v1283
  %v1572 = vpack.c.b16 %v1286, %v1285
  %v1573 = vpack.c.b16 %v1288, %v1287
  %v1574 = vpack.c.b16 %v1290, %v1289
  %v1575 = vpack.c.b16 %v1292, %v1291
  %v1576 = vpack.c.b16 %v1294, %v1293
  %v1577 = vpack.c.b16 %v1296, %v1295
  %v1578 = vpack.c.b16 %v1298, %v1297
  %v1579 = vpack.c.b16 %v1300, %v1299
  %v1580 = vpack.c.b16 %v1302, %v1301
  %v1581 = vpack.c.b16 %v1304, %v1303
  %v1582 = vpack.c.b16 %v1306, %v1305
  %v1583 = vpack.c.b16 %v1308, %v1307
  %v1584 = vpack.c.b16 %v1310, %v1309
  %v1585 = vpack.c.b16 %v1312, %v1311
  %v1586 = vpack.c.b16 %v1314, %v1313
  %v1587 = vpack.c.b16 %v1316, %v1315
  %v1588 = vpack.c.b16 %v1318, %v1317
  %v1589 = vpack.c.b16 %v1320, %v1319
  %v1590 = vpack.c.b16 %v1322, %v1321
  %v1591 = vpack.c.b16 %v1324, %v1323
  %v1592 = vpack.c.b16 %v1326, %v1325
  %v1593 = vpack.c.b16 %v1328, %v1327
  %v1594 = vpack.c.b16 %v1330, %v1329
  %v1595 = vpack.c.b16 %v1332, %v1331
  %v1596 = vpack.c.b16 %v1334, %v1333
  %v1597 = vpack.c.b16 %v1336, %v1335
  %v1598 = vpack.c.b16 %v1338, %v1337
  %v1599 = vpack.c.b16 %v1340, %v1339
  %v1600 = vpack.c.b16 %v1342, %v1341
  %v1601 = vpack.c.b16 %v1344, %v1343
  %v1602 = vpack.c.b16 %v1346, %v1345
  %v1603 = vpack.c.b16 %v1348, %v1347
  %v1604 = vpack.c.b16 %v1350, %v1349
  %v1605 = vpack.c.b16 %v1352, %v1351
  %v1606 = vpack.c.b16 %v1354, %v1353
  %v1607 = vpack.c.b16 %v1356, %v1355
  %v1608 = vpack.c.b16 %v1358, %v1357
  %v1609 = vpack.c.b16 %v1360, %v1359
  %v1610 = vpack.c.b16 %v1362, %v1361
  %v1611 = vpack.c.b16 %v1364, %v1363
  %v1612 = vpack.c.b16 %v1366, %v1365
  %v1613 = vpack.c.b16 %v1368, %v1367
  %v1614 = vpack.c.b16 %v1370, %v1369
  %v1615 = vpack.c.b16 %v1372, %v1371
  %v1616 = vpack.c.b16 %v1374, %v1373
  %v1617 = vpack.c.b16 %v1376, %v1375
  %v1618 = vpack.c.b16 %v1378, %v1377
  %v1619 = vpack.c.b16 %v1380, %v1379
  %v1620 = vpack.c.b16 %v1382, %v1381
  %v1621 = vpack.c.b16 %v1384, %v1383
  %v1622 = vpack.c.b16 %v1386, %v1385
  %v1623 = vpack.c.b16 %v1388, %v1387
  %v1624 = vpack.c.b16 %v1390, %v1389
  %v1625 = vpack.c.b16 %v1392, %v1391
  %v1626 = vpack.c.b16 %v1394, %v1393
  %v1627 = vpack.c.b16 %v1396, %v1395
  %v1628 = vpack.c.b16 %v1398, %v1397
  %v1629 = vpack.c.b16 %v1400, %v1399
  %v1630 = vpack.c.b16 %v1402, %v1401
  %v1631 = vpack.c.b16 %v1404, %v1403
  %v1632 = vpack.c.b16 %v1406, %v1405
  %v1633 = vpack.c.b16 %v1408, %v1407
  %v1634 = vpack.c.b16 %v1410, %v1409
  %v1635 = vpack.c.b16 %v1412, %v1411
  %v1636 = vpack.c.b16 %v1414, %v1413
  %v1637 = vpack.c.b16 %v1416, %v1415
  %v1638 = vpack.c.b16 %v1418, %v1417
  %v1639 = vpack.c.b16 %v1420, %v1419
  %v1640 = vpack.c.b16 %v1422, %v1421
  %v1641 = vpack.c.b16 %v1424, %v1423
  %v1642 = vpack.c.b16 %v1426, %v1425
  %v1643 = vpack.c.b16 %v1428, %v1427
  %v1644 = vpack.c.b16 %v1430, %v1429
  %v1645 = vpack.c.b16 %v1432, %v1431
  %v1646 = vpack.c.b16 %v1434, %v1433
  %v1647 = vpack.c.b16 %v1436, %v1435
  %v1648 = vpack.c.b16 %v1438, %v1437
  %v1649 = vpack.c.b16 %v1440, %v1439
  %v1650 = vpack.c.b16 %v1442, %v1441
  %v1651 = vpack.c.b16 %v1444, %v1443
  %v1652 = vpack.c.b16 %v1446, %v1445
  %v1653 = vpack.c.b16 %v1448, %v1447
  %v1654 = vpack.c.b16 %v1450, %v1449
  %vm1859 = vcmask 523264
  %v1861 = vsel %vm1859, %v214, 0
  %1863 = vmatprep.subr.bf16.mxu0 0
  %1864 = vmatpush1.bf16.msra.mxu0 %v1451
  %1865 = vmatprep.subr.bf16.mxu0 0
  %1866 = vmatpush1.bf16.msra.mxu0 %v1452
  %1867 = vmatprep.subr.bf16.mxu0 0
  %1868 = vmatpush1.bf16.msra.mxu0 %v1453
  %1869 = vmatprep.subr.bf16.mxu0 0
  %1870 = vmatpush1.bf16.msra.mxu0 %v1454
  %1871 = vmatprep.subr.bf16.mxu0 0
  %1872 = vmatpush1.bf16.msra.mxu0 %v1455
  %1873 = vmatprep.subr.bf16.mxu0 0
  %1874 = vmatpush1.bf16.msra.mxu0 %v1456
  %1875 = vmatprep.subr.bf16.mxu0 0
  %1876 = vmatpush1.bf16.msra.mxu0 %v1457
  %1877 = vmatprep.subr.bf16.mxu0 0
  %1878 = vmatpush1.bf16.msra.mxu0 %v1458
  %1879 = vmatprep.subr.bf16.mxu0 0
  %1880 = vmatpush1.bf16.msra.mxu0 %v1459
  %1881 = vmatprep.subr.bf16.mxu0 0
  %1882 = vmatpush1.bf16.msra.mxu0 %v1460
  %1883 = vmatprep.subr.bf16.mxu0 0
  %1884 = vmatpush1.bf16.msra.mxu0 %v1461
  %1885 = vmatprep.subr.bf16.mxu0 0
  %1886 = vmatpush1.bf16.msra.mxu0 %v1462
  %1887 = vmatprep.subr.bf16.mxu0 0
  %1888 = vmatpush1.bf16.msra.mxu0 %v1463
  %1889 = vmatprep.subr.bf16.mxu0 0
  %1890 = vmatpush1.bf16.msra.mxu0 %v1464
  %1891 = vmatprep.subr.bf16.mxu0 0
  %1892 = vmatpush1.bf16.msra.mxu0 %v1465
  %1893 = vmatprep.subr.bf16.mxu0 0
  %1894 = vmatpush1.bf16.msra.mxu0 %v1466
  %1895 = vmatprep.mubr.bf16.mxu0 %v190
  %1896 = vmatmul.mubr.bf16.gmra.mrb[0].mxu0 %v189
  %v1897 = vpop.f32.mrb[0].mxu0
  %v1898 = vadd.f32 %v634, %v1897
  %v1899 = vpop.f32.mrb[0].mxu0
  %v1900 = vpop.f32.mrb[0].mxu0
  %v1901 = vpop.f32.mrb[0].mxu0
  %1902 = vdwg.mxu0
  %1903 = vmatprep.subr.bf16.mxu0 0
  %1904 = vmatpush1.bf16.msra.mxu0 %v1467
  %1905 = vmatprep.subr.bf16.mxu0 0
  %1906 = vmatpush1.bf16.msra.mxu0 %v1468
  %1907 = vmatprep.subr.bf16.mxu0 0
  %1908 = vmatpush1.bf16.msra.mxu0 %v1469
  %1909 = vmatprep.subr.bf16.mxu0 0
  %1910 = vmatpush1.bf16.msra.mxu0 %v1470
  %1911 = vmatprep.subr.bf16.mxu0 0
  %1912 = vmatpush1.bf16.msra.mxu0 %v1471
  %1913 = vmatprep.subr.bf16.mxu0 0
  %1914 = vmatpush1.bf16.msra.mxu0 %v1472
  %1915 = vmatprep.subr.bf16.mxu0 0
  %1916 = vmatpush1.bf16.msra.mxu0 %v1473
  %1917 = vmatprep.subr.bf16.mxu0 0
  %1918 = vmatpush1.bf16.msra.mxu0 %v1474
  %1919 = vmatprep.subr.bf16.mxu0 0
  %1920 = vmatpush1.bf16.msra.mxu0 %v1475
  %1921 = vmatprep.subr.bf16.mxu0 0
  %1922 = vmatpush1.bf16.msra.mxu0 %v1476
  %1923 = vmatprep.subr.bf16.mxu0 0
  %1924 = vmatpush1.bf16.msra.mxu0 %v1477
  %1925 = vmatprep.subr.bf16.mxu0 0
  %1926 = vmatpush1.bf16.msra.mxu0 %v1478
  %1927 = vmatprep.subr.bf16.mxu0 0
  %1928 = vmatpush1.bf16.msra.mxu0 %v1479
  %1929 = vmatprep.subr.bf16.mxu0 0
  %1930 = vmatpush1.bf16.msra.mxu0 %v1480
  %1931 = vmatprep.subr.bf16.mxu0 0
  %1932 = vmatpush1.bf16.msra.mxu0 %v1481
  %1933 = vmatprep.subr.bf16.mxu0 0
  %1934 = vmatpush1.bf16.msra.mxu0 %v1482
  %1935 = vmatprep.mubr.bf16.mxu0 %v192
  %1936 = vmatmul.mubr.bf16.gmra.mrb[0].mxu0 %v191
  %v1937 = vpop.f32.mrb[0].mxu0
  %v1938 = vadd.f32 %v1898, %v1937
  %v1939 = vpop.f32.mrb[0].mxu0
  %v1940 = vpop.f32.mrb[0].mxu0
  %v1941 = vpop.f32.mrb[0].mxu0
  %1942 = vdwg.mxu0
  %1943 = vmatprep.subr.bf16.mxu0 0
  %1944 = vmatpush1.bf16.msra.mxu0 %v1483
  %1945 = vmatprep.subr.bf16.mxu0 0
  %1946 = vmatpush1.bf16.msra.mxu0 %v1484
  %1947 = vmatprep.subr.bf16.mxu0 0
  %1948 = vmatpush1.bf16.msra.mxu0 %v1485
  %1949 = vmatprep.subr.bf16.mxu0 0
  %1950 = vmatpush1.bf16.msra.mxu0 %v1486
  %1951 = vmatprep.subr.bf16.mxu0 0
  %1952 = vmatpush1.bf16.msra.mxu0 %v1487
  %1953 = vmatprep.subr.bf16.mxu0 0
  %1954 = vmatpush1.bf16.msra.mxu0 %v1488
  %1955 = vmatprep.subr.bf16.mxu0 0
  %1956 = vmatpush1.bf16.msra.mxu0 %v1489
  %1957 = vmatprep.subr.bf16.mxu0 0
  %1958 = vmatpush1.bf16.msra.mxu0 %v1490
  %1959 = vmatprep.subr.bf16.mxu0 0
  %1960 = vmatpush1.bf16.msra.mxu0 %v1491
  %1961 = vmatprep.subr.bf16.mxu0 0
  %1962 = vmatpush1.bf16.msra.mxu0 %v1492
  %1963 = vmatprep.subr.bf16.mxu0 0
  %1964 = vmatpush1.bf16.msra.mxu0 %v1493
  %1965 = vmatprep.subr.bf16.mxu0 0
  %1966 = vmatpush1.bf16.msra.mxu0 %v1494
  %1967 = vmatprep.subr.bf16.mxu0 0
  %1968 = vmatpush1.bf16.msra.mxu0 %v1495
  %1969 = vmatprep.subr.bf16.mxu0 0
  %1970 = vmatpush1.bf16.msra.mxu0 %v1496
  %1971 = vmatprep.subr.bf16.mxu0 0
  %1972 = vmatpush1.bf16.msra.mxu0 %v1497
  %1973 = vmatprep.subr.bf16.mxu0 0
  %1974 = vmatpush1.bf16.msra.mxu0 %v1498
  %1975 = vmatprep.mubr.bf16.mxu0 %v194
  %1976 = vmatmul.mubr.bf16.gmra.mrb[0].mxu0 %v193
  %v1977 = vpop.f32.mrb[0].mxu0
  %v1978 = vadd.f32 %v1938, %v1977
  %v1979 = vpop.f32.mrb[0].mxu0
  %v1980 = vpop.f32.mrb[0].mxu0
  %v1981 = vpop.f32.mrb[0].mxu0
  %1982 = vdwg.mxu0
  %1983 = vmatprep.subr.bf16.mxu0 0
  %1984 = vmatpush1.bf16.msra.mxu0 %v1499
  %1985 = vmatprep.subr.bf16.mxu0 0
  %1986 = vmatpush1.bf16.msra.mxu0 %v1500
  %1987 = vmatprep.subr.bf16.mxu0 0
  %1988 = vmatpush1.bf16.msra.mxu0 %v1501
  %1989 = vmatprep.subr.bf16.mxu0 0
  %1990 = vmatpush1.bf16.msra.mxu0 %v1502
  %1991 = vmatprep.subr.bf16.mxu0 0
  %1992 = vmatpush1.bf16.msra.mxu0 %v1503
  %1993 = vmatprep.subr.bf16.mxu0 0
  %1994 = vmatpush1.bf16.msra.mxu0 %v1504
  %1995 = vmatprep.subr.bf16.mxu0 0
  %1996 = vmatpush1.bf16.msra.mxu0 %v1505
  %1997 = vmatprep.subr.bf16.mxu0 0
  %1998 = vmatpush1.bf16.msra.mxu0 %v1506
  %1999 = vmatprep.subr.bf16.mxu0 0
  %2000 = vmatpush1.bf16.msra.mxu0 %v1507
  %2001 = vmatprep.subr.bf16.mxu0 0
  %2002 = vmatpush1.bf16.msra.mxu0 %v1508
  %2003 = vmatprep.subr.bf16.mxu0 0
  %2004 = vmatpush1.bf16.msra.mxu0 %v1509
  %2005 = vmatprep.subr.bf16.mxu0 0
  %2006 = vmatpush1.bf16.msra.mxu0 %v1510
  %2007 = vmatprep.subr.bf16.mxu0 0
  %2008 = vmatpush1.bf16.msra.mxu0 %v1511
  %2009 = vmatprep.subr.bf16.mxu0 0
  %2010 = vmatpush1.bf16.msra.mxu0 %v1512
  %2011 = vmatprep.subr.bf16.mxu0 0
  %2012 = vmatpush1.bf16.msra.mxu0 %v1513
  %2013 = vmatprep.subr.bf16.mxu0 0
  %2014 = vmatpush1.bf16.msra.mxu0 %v1514
  %2015 = vmatprep.mubr.bf16.mxu0 %v196
  %2016 = vmatmul.mubr.bf16.gmra.mrb[0].mxu0 %v195
  %v2017 = vpop.f32.mrb[0].mxu0
  %v2018 = vadd.f32 %v1978, %v2017
  %v2019 = vpop.f32.mrb[0].mxu0
  %v2020 = vpop.f32.mrb[0].mxu0
  %v2021 = vpop.f32.mrb[0].mxu0
  %2022 = vdwg.mxu0
  %2023 = vmatprep.subr.bf16.mxu0 0
  %2024 = vmatpush1.bf16.msra.mxu0 %v1515
  %2025 = vmatprep.subr.bf16.mxu0 0
  %2026 = vmatpush1.bf16.msra.mxu0 %v1516
  %2027 = vmatprep.subr.bf16.mxu0 0
  %2028 = vmatpush1.bf16.msra.mxu0 %v1517
  %2029 = vmatprep.subr.bf16.mxu0 0
  %2030 = vmatpush1.bf16.msra.mxu0 %v1518
  %2031 = vmatprep.subr.bf16.mxu0 0
  %2032 = vmatpush1.bf16.msra.mxu0 %v1519
  %2033 = vmatprep.subr.bf16.mxu0 0
  %2034 = vmatpush1.bf16.msra.mxu0 %v1520
  %2035 = vmatprep.subr.bf16.mxu0 0
  %2036 = vmatpush1.bf16.msra.mxu0 %v1521
  %2037 = vmatprep.subr.bf16.mxu0 0
  %2038 = vmatpush1.bf16.msra.mxu0 %v1522
  %2039 = vmatprep.subr.bf16.mxu0 0
  %2040 = vmatpush1.bf16.msra.mxu0 %v1523
  %2041 = vmatprep.subr.bf16.mxu0 0
  %2042 = vmatpush1.bf16.msra.mxu0 %v1524
  %2043 = vmatprep.subr.bf16.mxu0 0
  %2044 = vmatpush1.bf16.msra.mxu0 %v1525
  %2045 = vmatprep.subr.bf16.mxu0 0
  %2046 = vmatpush1.bf16.msra.mxu0 %v1526
  %2047 = vmatprep.subr.bf16.mxu0 0
  %2048 = vmatpush1.bf16.msra.mxu0 %v1527
  %2049 = vmatprep.subr.bf16.mxu0 0
  %2050 = vmatpush1.bf16.msra.mxu0 %v1528
  %2051 = vmatprep.subr.bf16.mxu0 0
  %2052 = vmatpush1.bf16.msra.mxu0 %v1529
  %2053 = vmatprep.subr.bf16.mxu0 0
  %2054 = vmatpush1.bf16.msra.mxu0 %v1530
  %2055 = vmatprep.mubr.bf16.mxu0 %v198
  %2056 = vmatmul.mubr.bf16.gmra.mrb[0].mxu0 %v197
  %v2057 = vpop.f32.mrb[0].mxu0
  %v2058 = vadd.f32 %v2018, %v2057
  %v2059 = vpop.f32.mrb[0].mxu0
  %v2060 = vpop.f32.mrb[0].mxu0
  %v2061 = vpop.f32.mrb[0].mxu0
  %2062 = vdwg.mxu0
  %2063 = vmatprep.subr.bf16.mxu0 0
  %2064 = vmatpush1.bf16.msra.mxu0 %v1531
  %2065 = vmatprep.subr.bf16.mxu0 0
  %2066 = vmatpush1.bf16.msra.mxu0 %v1532
  %2067 = vmatprep.subr.bf16.mxu0 0
  %2068 = vmatpush1.bf16.msra.mxu0 %v1533
  %2069 = vmatprep.subr.bf16.mxu0 0
  %2070 = vmatpush1.bf16.msra.mxu0 %v1534
  %2071 = vmatprep.subr.bf16.mxu0 0
  %2072 = vmatpush1.bf16.msra.mxu0 %v1535
  %2073 = vmatprep.subr.bf16.mxu0 0
  %2074 = vmatpush1.bf16.msra.mxu0 %v1536
  %2075 = vmatprep.subr.bf16.mxu0 0
  %2076 = vmatpush1.bf16.msra.mxu0 %v1537
  %2077 = vmatprep.subr.bf16.mxu0 0
  %2078 = vmatpush1.bf16.msra.mxu0 %v1538
  %2079 = vmatprep.subr.bf16.mxu0 0
  %2080 = vmatpush1.bf16.msra.mxu0 %v1539
  %2081 = vmatprep.subr.bf16.mxu0 0
  %2082 = vmatpush1.bf16.msra.mxu0 %v1540
  %2083 = vmatprep.subr.bf16.mxu0 0
  %2084 = vmatpush1.bf16.msra.mxu0 %v1541
  %2085 = vmatprep.subr.bf16.mxu0 0
  %2086 = vmatpush1.bf16.msra.mxu0 %v1542
  %2087 = vmatprep.subr.bf16.mxu0 0
  %2088 = vmatpush1.bf16.msra.mxu0 %v1543
  %2089 = vmatprep.subr.bf16.mxu0 0
  %2090 = vmatpush1.bf16.msra.mxu0 %v1544
  %2091 = vmatprep.subr.bf16.mxu0 0
  %2092 = vmatpush1.bf16.msra.mxu0 %v1545
  %2093 = vmatprep.subr.bf16.mxu0 0
  %2094 = vmatpush1.bf16.msra.mxu0 %v1546
  %2095 = vmatprep.mubr.bf16.mxu0 %v200
  %2096 = vmatmul.mubr.bf16.gmra.mrb[0].mxu0 %v199
  %v2097 = vpop.f32.mrb[0].mxu0
  %v2098 = vadd.f32 %v2058, %v2097
  %v2099 = vpop.f32.mrb[0].mxu0
  %v2100 = vpop.f32.mrb[0].mxu0
  %v2101 = vpop.f32.mrb[0].mxu0
  %2102 = vdwg.mxu0
  %2103 = vmatprep.subr.bf16.mxu0 0
  %2104 = vmatpush1.bf16.msra.mxu0 %v1547
  %2105 = vmatprep.subr.bf16.mxu0 0
  %2106 = vmatpush1.bf16.msra.mxu0 %v1548
  %2107 = vmatprep.subr.bf16.mxu0 0
  %2108 = vmatpush1.bf16.msra.mxu0 %v1549
  %2109 = vmatprep.subr.bf16.mxu0 0
  %2110 = vmatpush1.bf16.msra.mxu0 %v1550
  %2111 = vmatprep.subr.bf16.mxu0 0
  %2112 = vmatpush1.bf16.msra.mxu0 %v1551
  %2113 = vmatprep.subr.bf16.mxu0 0
  %2114 = vmatpush1.bf16.msra.mxu0 %v1552
  %2115 = vmatprep.subr.bf16.mxu0 0
  %2116 = vmatpush1.bf16.msra.mxu0 %v1553
  %2117 = vmatprep.subr.bf16.mxu0 0
  %2118 = vmatpush1.bf16.msra.mxu0 %v1554
  %2119 = vmatprep.subr.bf16.mxu0 0
  %2120 = vmatpush1.bf16.msra.mxu0 %v1555
  %2121 = vmatprep.subr.bf16.mxu0 0
  %2122 = vmatpush1.bf16.msra.mxu0 %v1556
  %2123 = vmatprep.subr.bf16.mxu0 0
  %2124 = vmatpush1.bf16.msra.mxu0 %v1557
  %2125 = vmatprep.subr.bf16.mxu0 0
  %2126 = vmatpush1.bf16.msra.mxu0 %v1558
  %2127 = vmatprep.subr.bf16.mxu0 0
  %2128 = vmatpush1.bf16.msra.mxu0 %v1559
  %2129 = vmatprep.subr.bf16.mxu0 0
  %2130 = vmatpush1.bf16.msra.mxu0 %v1560
  %2131 = vmatprep.subr.bf16.mxu0 0
  %2132 = vmatpush1.bf16.msra.mxu0 %v1561
  %2133 = vmatprep.subr.bf16.mxu0 0
  %2134 = vmatpush1.bf16.msra.mxu0 %v1562
  %2135 = vmatprep.mubr.bf16.mxu0 %v202
  %2136 = vmatmul.mubr.bf16.gmra.mrb[0].mxu0 %v201
  %v2137 = vpop.f32.mrb[0].mxu0
  %v2138 = vadd.f32 %v2098, %v2137
  %v2139 = vpop.f32.mrb[0].mxu0
  %v2140 = vpop.f32.mrb[0].mxu0
  %v2141 = vpop.f32.mrb[0].mxu0
  %2142 = vdwg.mxu0
  %2143 = vmatprep.subr.bf16.mxu0 0
  %2144 = vmatpush1.bf16.msra.mxu0 %v1563
  %2145 = vmatprep.subr.bf16.mxu0 0
  %2146 = vmatpush1.bf16.msra.mxu0 %v1564
  %2147 = vmatprep.subr.bf16.mxu0 0
  %2148 = vmatpush1.bf16.msra.mxu0 %v1565
  %2149 = vmatprep.subr.bf16.mxu0 0
  %2150 = vmatpush1.bf16.msra.mxu0 %v1566
  %2151 = vmatprep.subr.bf16.mxu0 0
  %2152 = vmatpush1.bf16.msra.mxu0 %v1567
  %2153 = vmatprep.subr.bf16.mxu0 0
  %2154 = vmatpush1.bf16.msra.mxu0 %v1568
  %2155 = vmatprep.subr.bf16.mxu0 0
  %2156 = vmatpush1.bf16.msra.mxu0 %v1569
  %2157 = vmatprep.subr.bf16.mxu0 0
  %2158 = vmatpush1.bf16.msra.mxu0 %v1570
  %2159 = vmatprep.subr.bf16.mxu0 0
  %2160 = vmatpush1.bf16.msra.mxu0 %v1571
  %2161 = vmatprep.subr.bf16.mxu0 0
  %2162 = vmatpush1.bf16.msra.mxu0 %v1572
  %2163 = vmatprep.subr.bf16.mxu0 0
  %2164 = vmatpush1.bf16.msra.mxu0 %v1573
  %2165 = vmatprep.subr.bf16.mxu0 0
  %2166 = vmatpush1.bf16.msra.mxu0 %v1574
  %2167 = vmatprep.subr.bf16.mxu0 0
  %2168 = vmatpush1.bf16.msra.mxu0 %v1575
  %2169 = vmatprep.subr.bf16.mxu0 0
  %2170 = vmatpush1.bf16.msra.mxu0 %v1576
  %2171 = vmatprep.subr.bf16.mxu0 0
  %2172 = vmatpush1.bf16.msra.mxu0 %v1577
  %2173 = vmatprep.subr.bf16.mxu0 0
  %2174 = vmatpush1.bf16.msra.mxu0 %v1578
  %2175 = vmatprep.mubr.bf16.mxu0 %v204
  %2176 = vmatmul.mubr.bf16.gmra.mrb[0].mxu0 %v203
  %v2177 = vpop.f32.mrb[0].mxu0
  %v2178 = vadd.f32 %v2138, %v2177
  %v2179 = vpop.f32.mrb[0].mxu0
  %v2180 = vpop.f32.mrb[0].mxu0
  %v2181 = vpop.f32.mrb[0].mxu0
  %2182 = vdwg.mxu0
  %2183 = vmatprep.subr.bf16.mxu0 0
  %2184 = vmatpush1.bf16.msra.mxu0 %v1579
  %2185 = vmatprep.subr.bf16.mxu0 0
  %2186 = vmatpush1.bf16.msra.mxu0 %v1580
  %2187 = vmatprep.subr.bf16.mxu0 0
  %2188 = vmatpush1.bf16.msra.mxu0 %v1581
  %2189 = vmatprep.subr.bf16.mxu0 0
  %2190 = vmatpush1.bf16.msra.mxu0 %v1582
  %2191 = vmatprep.subr.bf16.mxu0 0
  %2192 = vmatpush1.bf16.msra.mxu0 %v1583
  %2193 = vmatprep.subr.bf16.mxu0 0
  %2194 = vmatpush1.bf16.msra.mxu0 %v1584
  %2195 = vmatprep.subr.bf16.mxu0 0
  %2196 = vmatpush1.bf16.msra.mxu0 %v1585
  %2197 = vmatprep.subr.bf16.mxu0 0
  %2198 = vmatpush1.bf16.msra.mxu0 %v1586
  %2199 = vmatprep.subr.bf16.mxu0 0
  %2200 = vmatpush1.bf16.msra.mxu0 %v1587
  %2201 = vmatprep.subr.bf16.mxu0 0
  %2202 = vmatpush1.bf16.msra.mxu0 %v1588
  %2203 = vmatprep.subr.bf16.mxu0 0
  %2204 = vmatpush1.bf16.msra.mxu0 %v1589
  %2205 = vmatprep.subr.bf16.mxu0 0
  %2206 = vmatpush1.bf16.msra.mxu0 %v1590
  %2207 = vmatprep.subr.bf16.mxu0 0
  %2208 = vmatpush1.bf16.msra.mxu0 %v1591
  %2209 = vmatprep.subr.bf16.mxu0 0
  %2210 = vmatpush1.bf16.msra.mxu0 %v1592
  %2211 = vmatprep.subr.bf16.mxu0 0
  %2212 = vmatpush1.bf16.msra.mxu0 %v1593
  %2213 = vmatprep.subr.bf16.mxu0 0
  %2214 = vmatpush1.bf16.msra.mxu0 %v1594
  %2215 = vmatprep.mubr.bf16.mxu0 %v206
  %2216 = vmatmul.mubr.bf16.gmra.mrb[0].mxu0 %v205
  %v2217 = vpop.f32.mrb[0].mxu0
  %v2218 = vadd.f32 %v2178, %v2217
  %v2219 = vpop.f32.mrb[0].mxu0
  %v2220 = vpop.f32.mrb[0].mxu0
  %v2221 = vpop.f32.mrb[0].mxu0
  %2222 = vdwg.mxu0
  %2223 = vmatprep.subr.bf16.mxu0 0
  %2224 = vmatpush1.bf16.msra.mxu0 %v1595
  %2225 = vmatprep.subr.bf16.mxu0 0
  %2226 = vmatpush1.bf16.msra.mxu0 %v1596
  %2227 = vmatprep.subr.bf16.mxu0 0
  %2228 = vmatpush1.bf16.msra.mxu0 %v1597
  %2229 = vmatprep.subr.bf16.mxu0 0
  %2230 = vmatpush1.bf16.msra.mxu0 %v1598
  %2231 = vmatprep.subr.bf16.mxu0 0
  %2232 = vmatpush1.bf16.msra.mxu0 %v1599
  %2233 = vmatprep.subr.bf16.mxu0 0
  %2234 = vmatpush1.bf16.msra.mxu0 %v1600
  %2235 = vmatprep.subr.bf16.mxu0 0
  %2236 = vmatpush1.bf16.msra.mxu0 %v1601
  %2237 = vmatprep.subr.bf16.mxu0 0
  %2238 = vmatpush1.bf16.msra.mxu0 %v1602
  %2239 = vmatprep.subr.bf16.mxu0 0
  %2240 = vmatpush1.bf16.msra.mxu0 %v1603
  %2241 = vmatprep.subr.bf16.mxu0 0
  %2242 = vmatpush1.bf16.msra.mxu0 %v1604
  %2243 = vmatprep.subr.bf16.mxu0 0
  %2244 = vmatpush1.bf16.msra.mxu0 %v1605
  %2245 = vmatprep.subr.bf16.mxu0 0
  %2246 = vmatpush1.bf16.msra.mxu0 %v1606
  %2247 = vmatprep.subr.bf16.mxu0 0
  %2248 = vmatpush1.bf16.msra.mxu0 %v1607
  %2249 = vmatprep.subr.bf16.mxu0 0
  %2250 = vmatpush1.bf16.msra.mxu0 %v1608
  %2251 = vmatprep.subr.bf16.mxu0 0
  %2252 = vmatpush1.bf16.msra.mxu0 %v1609
  %2253 = vmatprep.subr.bf16.mxu0 0
  %2254 = vmatpush1.bf16.msra.mxu0 %v1610
  %2255 = vmatprep.mubr.bf16.mxu0 %v208
  %2256 = vmatmul.mubr.bf16.gmra.mrb[0].mxu0 %v207
  %v2257 = vpop.f32.mrb[0].mxu0
  %v2258 = vadd.f32 %v2218, %v2257
  %v2259 = vpop.f32.mrb[0].mxu0
  %v2260 = vpop.f32.mrb[0].mxu0
  %v2261 = vpop.f32.mrb[0].mxu0
  %2262 = vdwg.mxu0
  %2263 = vmatprep.subr.bf16.mxu0 0
  %2264 = vmatpush1.bf16.msra.mxu0 %v1611
  %2265 = vmatprep.subr.bf16.mxu0 0
  %2266 = vmatpush1.bf16.msra.mxu0 %v1612
  %2267 = vmatprep.subr.bf16.mxu0 0
  %2268 = vmatpush1.bf16.msra.mxu0 %v1613
  %2269 = vmatprep.subr.bf16.mxu0 0
  %2270 = vmatpush1.bf16.msra.mxu0 %v1614
  %2271 = vmatprep.subr.bf16.mxu0 0
  %2272 = vmatpush1.bf16.msra.mxu0 %v1615
  %2273 = vmatprep.subr.bf16.mxu0 0
  %2274 = vmatpush1.bf16.msra.mxu0 %v1616
  %2275 = vmatprep.subr.bf16.mxu0 0
  %2276 = vmatpush1.bf16.msra.mxu0 %v1617
  %2277 = vmatprep.subr.bf16.mxu0 0
  %2278 = vmatpush1.bf16.msra.mxu0 %v1618
  %2279 = vmatprep.subr.bf16.mxu0 0
  %2280 = vmatpush1.bf16.msra.mxu0 %v1619
  %2281 = vmatprep.subr.bf16.mxu0 0
  %2282 = vmatpush1.bf16.msra.mxu0 %v1620
  %2283 = vmatprep.subr.bf16.mxu0 0
  %2284 = vmatpush1.bf16.msra.mxu0 %v1621
  %2285 = vmatprep.subr.bf16.mxu0 0
  %2286 = vmatpush1.bf16.msra.mxu0 %v1622
  %2287 = vmatprep.subr.bf16.mxu0 0
  %2288 = vmatpush1.bf16.msra.mxu0 %v1623
  %2289 = vmatprep.subr.bf16.mxu0 0
  %2290 = vmatpush1.bf16.msra.mxu0 %v1624
  %2291 = vmatprep.subr.bf16.mxu0 0
  %2292 = vmatpush1.bf16.msra.mxu0 %v1625
  %2293 = vmatprep.subr.bf16.mxu0 0
  %2294 = vmatpush1.bf16.msra.mxu0 %v1626
  %2295 = vmatprep.mubr.bf16.mxu0 %v210
  %2296 = vmatmul.mubr.bf16.gmra.mrb[0].mxu0 %v209
  %v2297 = vpop.f32.mrb[0].mxu0
  %v2298 = vadd.f32 %v2258, %v2297
  %v2299 = vpop.f32.mrb[0].mxu0
  %v2300 = vpop.f32.mrb[0].mxu0
  %v2301 = vpop.f32.mrb[0].mxu0
  %2302 = vdwg.mxu0
  %2303 = vmatprep.subr.bf16.mxu0 0
  %2304 = vmatpush1.bf16.msra.mxu0 %v1627
  %2305 = vmatprep.subr.bf16.mxu0 0
  %2306 = vmatpush1.bf16.msra.mxu0 %v1628
  %2307 = vmatprep.subr.bf16.mxu0 0
  %2308 = vmatpush1.bf16.msra.mxu0 %v1629
  %2309 = vmatprep.subr.bf16.mxu0 0
  %2310 = vmatpush1.bf16.msra.mxu0 %v1630
  %2311 = vmatprep.subr.bf16.mxu0 0
  %2312 = vmatpush1.bf16.msra.mxu0 %v1631
  %2313 = vmatprep.subr.bf16.mxu0 0
  %2314 = vmatpush1.bf16.msra.mxu0 %v1632
  %2315 = vmatprep.subr.bf16.mxu0 0
  %2316 = vmatpush1.bf16.msra.mxu0 %v1633
  %2317 = vmatprep.subr.bf16.mxu0 0
  %2318 = vmatpush1.bf16.msra.mxu0 %v1634
  %2319 = vmatprep.subr.bf16.mxu0 0
  %2320 = vmatpush1.bf16.msra.mxu0 %v1635
  %2321 = vmatprep.subr.bf16.mxu0 0
  %2322 = vmatpush1.bf16.msra.mxu0 %v1636
  %2323 = vmatprep.subr.bf16.mxu0 0
  %2324 = vmatpush1.bf16.msra.mxu0 %v1637
  %2325 = vmatprep.subr.bf16.mxu0 0
  %2326 = vmatpush1.bf16.msra.mxu0 %v1638
  %2327 = vmatprep.subr.bf16.mxu0 0
  %2328 = vmatpush1.bf16.msra.mxu0 %v1639
  %2329 = vmatprep.subr.bf16.mxu0 0
  %2330 = vmatpush1.bf16.msra.mxu0 %v1640
  %2331 = vmatprep.subr.bf16.mxu0 0
  %2332 = vmatpush1.bf16.msra.mxu0 %v1641
  %2333 = vmatprep.subr.bf16.mxu0 0
  %2334 = vmatpush1.bf16.msra.mxu0 %v1642
  %2335 = vmatprep.mubr.bf16.mxu0 %v212
  %2336 = vmatmul.mubr.bf16.gmra.mrb[0].mxu0 %v211
  %v2337 = vpop.f32.mrb[0].mxu0
  %v2338 = vadd.f32 %v2298, %v2337
  %v2339 = vpop.f32.mrb[0].mxu0
  %v2340 = vpop.f32.mrb[0].mxu0
  %v2341 = vpop.f32.mrb[0].mxu0
  %2342 = vdwg.mxu0
  %2343 = vmatprep.subr.bf16.mxu0 0
  %2344 = vmatpush1.bf16.msra.mxu0 %v1643
  %2345 = vmatprep.subr.bf16.mxu0 0
  %2346 = vmatpush1.bf16.msra.mxu0 %v1644
  %2347 = vmatprep.subr.bf16.mxu0 0
  %2348 = vmatpush1.bf16.msra.mxu0 %v1645
  %2349 = vmatprep.subr.bf16.mxu0 0
  %2350 = vmatpush1.bf16.msra.mxu0 %v1646
  %2351 = vmatprep.subr.bf16.mxu0 0
  %2352 = vmatpush1.bf16.msra.mxu0 %v1647
  %2353 = vmatprep.subr.bf16.mxu0 0
  %2354 = vmatpush1.bf16.msra.mxu0 %v1648
  %2355 = vmatprep.subr.bf16.mxu0 0
  %2356 = vmatpush1.bf16.msra.mxu0 %v1649
  %2357 = vmatprep.subr.bf16.mxu0 0
  %2358 = vmatpush1.bf16.msra.mxu0 %v1650
  %2359 = vmatprep.subr.bf16.mxu0 0
  %2360 = vmatpush1.bf16.msra.mxu0 %v1651
  %2361 = vmatprep.subr.bf16.mxu0 0
  %2362 = vmatpush1.bf16.msra.mxu0 %v1652
  %2363 = vmatprep.subr.bf16.mxu0 0
  %2364 = vmatpush1.bf16.msra.mxu0 %v1653
  %2365 = vmatprep.subr.bf16.mxu0 0
  %2366 = vmatpush1.bf16.msra.mxu0 %v1654
  %2367 = vmatprep.subr.bf16.mxu0 0
  %2368 = vmatpush1.bf16.msra.mxu0 0
  %2369 = vmatprep.subr.bf16.mxu0 0
  %2370 = vmatpush1.bf16.msra.mxu0 0
  %2371 = vmatprep.subr.bf16.mxu0 0
  %2372 = vmatpush1.bf16.msra.mxu0 0
  %2373 = vmatprep.subr.bf16.mxu0 0
  %2374 = vmatpush1.bf16.msra.mxu0 0
  %2375 = vmatprep.mubr.bf16.mxu0 %v1861
  %2376 = vmatmul.mubr.bf16.gmra.mrb[0].mxu0 %v213
  %v2377 = vpop.f32.mrb[0].mxu0
  %v2378 = vadd.f32 %v2338, %v2377
  %v2379 = vpop.f32.mrb[0].mxu0
  %v2380 = vpop.f32.mrb[0].mxu0
  %v2381 = vpop.f32.mrb[0].mxu0
  %2382 = vdwg.mxu0
  %2383 = vset.pattern.permute.xlu0 1
  %2384 = vperm.xlu0 %2383, %v623
  %v2385 = vpop.permute.xlu0 %2384
  %v2387 = vlaneseq
  %v2388 = vshrl.u32 %v2387, 7
  %v2389 = vsub.s32 1, %v2388
  %v2390 = vrot.slane %v624, %v2389
  %v2391 = vmul.f32 %v2385, %v2390
  %v2392 = vadd.f32 %v2378, %v2391
  %v2393 = vld [vmem:[%s4] sm:$0x1]
  %v2395 = vlaneseq
  %v2396 = vshrl.u32 %v2395, 7
  %v2397 = vsub.s32 0, %v2396
  %v2398 = vrot.slane %v2393, %v2397
  %v2400 = vadd.f32 %v2392, %v2398
  %v2401 = vmax.f32 %v2400, 0.0
  %v2402 = vld [vmem:[%s5] sm:$0xff]
  %v2403 = vld [vmem:[%s5 + $0x8] sm:$0xff]
  %v2404 = vld [vmem:[%s5 + $0x10] sm:$0xff]
  %v2405 = vld [vmem:[%s5 + $0x18] sm:$0xff]
  %v2406 = vld [vmem:[%s5 + $0x20] sm:$0xff]
  %v2407 = vld [vmem:[%s5 + $0x28] sm:$0xff]
  %v2408 = vld [vmem:[%s5 + $0x30] sm:$0xff]
  %v2409 = vld [vmem:[%s5 + $0x38] sm:$0xff]
  %v2410 = vld [vmem:[%s5 + $0x40] sm:$0xff]
  %v2411 = vld [vmem:[%s5 + $0x48] sm:$0xff]
  %v2412 = vld [vmem:[%s5 + $0x50] sm:$0xff]
  %v2413 = vld [vmem:[%s5 + $0x58] sm:$0xff]
  %v2414 = vld [vmem:[%s5 + $0x60] sm:$0xff]
  %v2415 = vld [vmem:[%s5 + $0x68] sm:$0xff]
  %v2416 = vld [vmem:[%s5 + $0x70] sm:$0xff]
  %v2417 = vld [vmem:[%s5 + $0x78] sm:$0xff]
  %v2418 = vld [vmem:[%s6] sm:$0x1]
  %v2420 = vlaneseq
  %v2421 = vshrl.u32 %v2420, 7
  %v2422 = vsub.s32 0, %v2421
  %v2423 = vrot.slane %v2418, %v2422
  %2425 = vmatprep.subr.mxu0 0.0
  %2426 = vmatpush1.msra.mxu0 %v2402
  %2427 = vmatprep.subr.mxu0 0.0
  %2428 = vmatpush1.msra.mxu0 %v2403
  %2429 = vmatprep.subr.mxu0 0.0
  %2430 = vmatpush1.msra.mxu0 %v2404
  %2431 = vmatprep.subr.mxu0 0.0
  %2432 = vmatpush1.msra.mxu0 %v2405
  %2433 = vmatprep.subr.mxu0 0.0
  %2434 = vmatpush1.msra.mxu0 %v2406
  %2435 = vmatprep.subr.mxu0 0.0
  %2436 = vmatpush1.msra.mxu0 %v2407
  %2437 = vmatprep.subr.mxu0 0.0
  %2438 = vmatpush1.msra.mxu0 %v2408
  %2439 = vmatprep.subr.mxu0 0.0
  %2440 = vmatpush1.msra.mxu0 %v2409
  %2441 = vmatprep.subr.mxu0 0.0
  %2442 = vmatpush1.msra.mxu0 %v2410
  %2443 = vmatprep.subr.mxu0 0.0
  %2444 = vmatpush1.msra.mxu0 %v2411
  %2445 = vmatprep.subr.mxu0 0.0
  %2446 = vmatpush1.msra.mxu0 %v2412
  %2447 = vmatprep.subr.mxu0 0.0
  %2448 = vmatpush1.msra.mxu0 %v2413
  %2449 = vmatprep.subr.mxu0 0.0
  %2450 = vmatpush1.msra.mxu0 %v2414
  %2451 = vmatprep.subr.mxu0 0.0
  %2452 = vmatpush1.msra.mxu0 %v2415
  %2453 = vmatprep.subr.mxu0 0.0
  %2454 = vmatpush1.msra.mxu0 %v2416
  %2455 = vmatprep.subr.mxu0 0.0
  %2456 = vmatpush1.msra.mxu0 %v2417
  %2457 = vmatprep.subr.mxu0 0.0
  %2458 = vmatpush1.msra.mxu0 0.0
  %2459 = vmatprep.subr.mxu0 0.0
  %2460 = vmatpush1.msra.mxu0 0.0
  %2461 = vmatprep.subr.mxu0 0.0
  %2462 = vmatpush1.msra.mxu0 0.0
  %2463 = vmatprep.subr.mxu0 0.0
  %2464 = vmatpush1.msra.mxu0 0.0
  %2465 = vmatprep.subr.mxu0 0.0
  %2466 = vmatpush1.msra.mxu0 0.0
  %2467 = vmatprep.subr.mxu0 0.0
  %2468 = vmatpush1.msra.mxu0 0.0
  %2469 = vmatprep.subr.mxu0 0.0
  %2470 = vmatpush1.msra.mxu0 0.0
  %2471 = vmatprep.subr.mxu0 0.0
  %2472 = vmatpush1.msra.mxu0 0.0
  %2473 = vmatprep.subr.mxu0 0.0
  %2474 = vmatpush1.msra.mxu0 0.0
  %2475 = vmatprep.subr.mxu0 0.0
  %2476 = vmatpush1.msra.mxu0 0.0
  %2477 = vmatprep.subr.mxu0 0.0
  %2478 = vmatpush1.msra.mxu0 0.0
  %2479 = vmatprep.subr.mxu0 0.0
  %2480 = vmatpush1.msra.mxu0 0.0
  %2481 = vmatprep.subr.mxu0 0.0
  %2482 = vmatpush1.msra.mxu0 0.0
  %2483 = vmatprep.subr.mxu0 0.0
  %2484 = vmatpush1.msra.mxu0 0.0
  %2485 = vmatprep.subr.mxu0 0.0
  %2486 = vmatpush1.msra.mxu0 0.0
  %2487 = vmatprep.subr.mxu0 0.0
  %2488 = vmatpush1.msra.mxu0 0.0
  %2489 = vmatprep.mubr.f32.mxu0 0.0
  %2490 = vmatmul.mubr.f32.gmra.mrb[0].mxu0 %v2401
  %v2491 = vpop.f32.mrb[0].mxu0
  %v2492 = vadd.f32 %v2423, %v2491
  %v2493 = vpop.f32.mrb[0].mxu0
  %2494 = vdwg.mxu0
  %v2495 = vmax.f32 %v2492, 0.0
  %v2496 = vld [vmem:[%s7] sm:$0xff]
  %v2497 = vld [vmem:[%s7 + $0x8] sm:$0xff]
  %v2498 = vld [vmem:[%s7 + $0x10] sm:$0xff]
  %v2499 = vld [vmem:[%s7 + $0x18] sm:$0xff]
  %v2500 = vld [vmem:[%s7 + $0x20] sm:$0xff]
  %v2501 = vld [vmem:[%s7 + $0x28] sm:$0xff]
  %v2502 = vld [vmem:[%s7 + $0x30] sm:$0xff]
  %v2503 = vld [vmem:[%s7 + $0x38] sm:$0xff]
  %v2504 = vld [vmem:[%s7 + $0x40] sm:$0xff]
  %v2505 = vld [vmem:[%s7 + $0x48] sm:$0xff]
  %v2506 = vld [vmem:[%s7 + $0x50] sm:$0xff]
  %v2507 = vld [vmem:[%s7 + $0x58] sm:$0xff]
  %v2508 = vld [vmem:[%s7 + $0x60] sm:$0xff]
  %v2509 = vld [vmem:[%s7 + $0x68] sm:$0xff]
  %v2510 = vld [vmem:[%s7 + $0x70] sm:$0xff]
  %v2511 = vld [vmem:[%s7 + $0x78] sm:$0xff]
  %v2512 = vld [vmem:[%s8] sm:$0x1]
  %v2514 = vlaneseq
  %v2515 = vshrl.u32 %v2514, 7
  %v2516 = vsub.s32 0, %v2515
  %v2517 = vrot.slane %v2512, %v2516
  %2519 = vmatprep.subr.mxu0 0.0
  %2520 = vmatpush1.msra.mxu0 %v2496
  %2521 = vmatprep.subr.mxu0 0.0
  %2522 = vmatpush1.msra.mxu0 %v2497
  %2523 = vmatprep.subr.mxu0 0.0
  %2524 = vmatpush1.msra.mxu0 %v2498
  %2525 = vmatprep.subr.mxu0 0.0
  %2526 = vmatpush1.msra.mxu0 %v2499
  %2527 = vmatprep.subr.mxu0 0.0
  %2528 = vmatpush1.msra.mxu0 %v2500
  %2529 = vmatprep.subr.mxu0 0.0
  %2530 = vmatpush1.msra.mxu0 %v2501
  %2531 = vmatprep.subr.mxu0 0.0
  %2532 = vmatpush1.msra.mxu0 %v2502
  %2533 = vmatprep.subr.mxu0 0.0
  %2534 = vmatpush1.msra.mxu0 %v2503
  %2535 = vmatprep.subr.mxu0 0.0
  %2536 = vmatpush1.msra.mxu0 %v2504
  %2537 = vmatprep.subr.mxu0 0.0
  %2538 = vmatpush1.msra.mxu0 %v2505
  %2539 = vmatprep.subr.mxu0 0.0
  %2540 = vmatpush1.msra.mxu0 %v2506
  %2541 = vmatprep.subr.mxu0 0.0
  %2542 = vmatpush1.msra.mxu0 %v2507
  %2543 = vmatprep.subr.mxu0 0.0
  %2544 = vmatpush1.msra.mxu0 %v2508
  %2545 = vmatprep.subr.mxu0 0.0
  %2546 = vmatpush1.msra.mxu0 %v2509
  %2547 = vmatprep.subr.mxu0 0.0
  %2548 = vmatpush1.msra.mxu0 %v2510
  %2549 = vmatprep.subr.mxu0 0.0
  %2550 = vmatpush1.msra.mxu0 %v2511
  %2551 = vmatprep.subr.mxu0 0.0
  %2552 = vmatpush1.msra.mxu0 0.0
  %2553 = vmatprep.subr.mxu0 0.0
  %2554 = vmatpush1.msra.mxu0 0.0
  %2555 = vmatprep.subr.mxu0 0.0
  %2556 = vmatpush1.msra.mxu0 0.0
  %2557 = vmatprep.subr.mxu0 0.0
  %2558 = vmatpush1.msra.mxu0 0.0
  %2559 = vmatprep.subr.mxu0 0.0
  %2560 = vmatpush1.msra.mxu0 0.0
  %2561 = vmatprep.subr.mxu0 0.0
  %2562 = vmatpush1.msra.mxu0 0.0
  %2563 = vmatprep.subr.mxu0 0.0
  %2564 = vmatpush1.msra.mxu0 0.0
  %2565 = vmatprep.subr.mxu0 0.0
  %2566 = vmatpush1.msra.mxu0 0.0
  %2567 = vmatprep.subr.mxu0 0.0
  %2568 = vmatpush1.msra.mxu0 0.0
  %2569 = vmatprep.subr.mxu0 0.0
  %2570 = vmatpush1.msra.mxu0 0.0
  %2571 = vmatprep.subr.mxu0 0.0
  %2572 = vmatpush1.msra.mxu0 0.0
  %2573 = vmatprep.subr.mxu0 0.0
  %2574 = vmatpush1.msra.mxu0 0.0
  %2575 = vmatprep.subr.mxu0 0.0
  %2576 = vmatpush1.msra.mxu0 0.0
  %2577 = vmatprep.subr.mxu0 0.0
  %2578 = vmatpush1.msra.mxu0 0.0
  %2579 = vmatprep.subr.mxu0 0.0
  %2580 = vmatpush1.msra.mxu0 0.0
  %2581 = vmatprep.subr.mxu0 0.0
  %2582 = vmatpush1.msra.mxu0 0.0
  %2583 = vmatprep.mubr.f32.mxu0 0.0
  %2584 = vmatmul.mubr.f32.gmra.mrb[0].mxu0 %v2495
  %v2585 = vpop.f32.mrb[0].mxu0
  %v2586 = vadd.f32 %v2517, %v2585
  %v2587 = vpop.f32.mrb[0].mxu0
  %2588 = vdwg.mxu0
  %v2589 = vmax.f32 %v2586, 0.0
  %v2590 = vpack.c.bf16 %v2589, %v2589
  %v2591 = vld [vmem:[%s9] sm:$0xff]
  %v2592 = vld [vmem:[%s9 + $0x8] sm:$0xff]
  %v2593 = vld [vmem:[%s9 + $0x10] sm:$0xff]
  %v2594 = vld [vmem:[%s9 + $0x18] sm:$0xff]
  %v2595 = vld [vmem:[%s9 + $0x20] sm:$0xff]
  %v2596 = vld [vmem:[%s9 + $0x28] sm:$0xff]
  %v2597 = vld [vmem:[%s9 + $0x30] sm:$0xff]
  %v2598 = vld [vmem:[%s9 + $0x38] sm:$0xff]
  %v2599 = vld [vmem:[%s9 + $0x40] sm:$0xff]
  %v2600 = vld [vmem:[%s9 + $0x48] sm:$0xff]
  %v2601 = vld [vmem:[%s9 + $0x50] sm:$0xff]
  %v2602 = vld [vmem:[%s9 + $0x58] sm:$0xff]
  %v2603 = vld [vmem:[%s9 + $0x60] sm:$0xff]
  %v2604 = vld [vmem:[%s9 + $0x68] sm:$0xff]
  %v2605 = vld [vmem:[%s9 + $0x70] sm:$0xff]
  %v2606 = vld [vmem:[%s9 + $0x78] sm:$0xff]
  %v2607 = vld [vmem:[%s9 + $0x80] sm:$0xff]
  %v2608 = vld [vmem:[%s9 + $0x88] sm:$0xff]
  %v2609 = vld [vmem:[%s9 + $0x90] sm:$0xff]
  %v2610 = vld [vmem:[%s9 + $0x98] sm:$0xff]
  %v2611 = vld [vmem:[%s9 + $0xa0] sm:$0xff]
  %v2612 = vld [vmem:[%s9 + $0xa8] sm:$0xff]
  %v2613 = vld [vmem:[%s9 + $0xb0] sm:$0xff]
  %v2614 = vld [vmem:[%s9 + $0xb8] sm:$0xff]
  %v2615 = vld [vmem:[%s9 + $0xc0] sm:$0xff]
  %v2616 = vld [vmem:[%s9 + $0xc8] sm:$0xff]
  %v2617 = vld [vmem:[%s9 + $0xd0] sm:$0xff]
  %v2618 = vld [vmem:[%s9 + $0xd8] sm:$0xff]
  %v2619 = vld [vmem:[%s9 + $0xe0] sm:$0xff]
  %v2620 = vld [vmem:[%s9 + $0xe8] sm:$0xff]
  %v2621 = vld [vmem:[%s9 + $0xf0] sm:$0xff]
  %v2622 = vld [vmem:[%s9 + $0xf8] sm:$0xff]
  %v2623 = vld [vmem:[%s9 + $0x100] sm:$0xff]
  %v2624 = vld [vmem:[%s9 + $0x108] sm:$0xff]
  %v2625 = vld [vmem:[%s9 + $0x110] sm:$0xff]
  %v2626 = vld [vmem:[%s9 + $0x118] sm:$0xff]
  %v2627 = vld [vmem:[%s9 + $0x120] sm:$0xff]
  %v2628 = vld [vmem:[%s9 + $0x128] sm:$0xff]
  %v2629 = vld [vmem:[%s9 + $0x130] sm:$0xff]
  %v2630 = vld [vmem:[%s9 + $0x138] sm:$0xff]
  %v2631 = vld [vmem:[%s9 + $0x140] sm:$0xff]
  %v2632 = vld [vmem:[%s9 + $0x148] sm:$0xff]
  %v2633 = vld [vmem:[%s9 + $0x150] sm:$0xff]
  %v2634 = vld [vmem:[%s9 + $0x158] sm:$0xff]
  %v2635 = vld [vmem:[%s9 + $0x160] sm:$0xff]
  %v2636 = vld [vmem:[%s9 + $0x168] sm:$0xff]
  %v2637 = vld [vmem:[%s9 + $0x170] sm:$0xff]
  %v2638 = vld [vmem:[%s9 + $0x178] sm:$0xff]
  %v2639 = vld [vmem:[%s9 + $0x180] sm:$0xff]
  %v2640 = vld [vmem:[%s9 + $0x188] sm:$0xff]
  %v2641 = vld [vmem:[%s9 + $0x190] sm:$0xff]
  %v2642 = vld [vmem:[%s9 + $0x198] sm:$0xff]
  %v2643 = vld [vmem:[%s9 + $0x1a0] sm:$0xff]
  %v2644 = vld [vmem:[%s9 + $0x1a8] sm:$0xff]
  %v2645 = vld [vmem:[%s9 + $0x1b0] sm:$0xff]
  %v2646 = vld [vmem:[%s9 + $0x1b8] sm:$0xff]
  %v2647 = vld [vmem:[%s9 + $0x1c0] sm:$0xff]
  %v2648 = vld [vmem:[%s9 + $0x1c8] sm:$0xff]
  %v2649 = vld [vmem:[%s9 + $0x1d0] sm:$0xff]
  %v2650 = vld [vmem:[%s9 + $0x1d8] sm:$0xff]
  %v2651 = vld [vmem:[%s9 + $0x1e0] sm:$0xff]
  %v2652 = vld [vmem:[%s9 + $0x1e8] sm:$0xff]
  %v2653 = vld [vmem:[%s9 + $0x1f0] sm:$0xff]
  %v2654 = vld [vmem:[%s9 + $0x1f8] sm:$0xff]
  %v2655 = vld [vmem:[%s9 + $0x200] sm:$0xff]
  %v2656 = vld [vmem:[%s9 + $0x208] sm:$0xff]
  %v2657 = vld [vmem:[%s9 + $0x210] sm:$0xff]
  %v2658 = vld [vmem:[%s9 + $0x218] sm:$0xff]
  %v2659 = vld [vmem:[%s9 + $0x220] sm:$0xff]
  %v2660 = vld [vmem:[%s9 + $0x228] sm:$0xff]
  %v2661 = vld [vmem:[%s9 + $0x230] sm:$0xff]
  %v2662 = vld [vmem:[%s9 + $0x238] sm:$0xff]
  %v2663 = vld [vmem:[%s9 + $0x240] sm:$0xff]
  %v2664 = vld [vmem:[%s9 + $0x248] sm:$0xff]
  %v2665 = vld [vmem:[%s9 + $0x250] sm:$0xff]
  %v2666 = vld [vmem:[%s9 + $0x258] sm:$0xff]
  %v2667 = vld [vmem:[%s9 + $0x260] sm:$0xff]
  %v2668 = vld [vmem:[%s9 + $0x268] sm:$0xff]
  %v2669 = vld [vmem:[%s9 + $0x270] sm:$0xff]
  %v2670 = vld [vmem:[%s9 + $0x278] sm:$0xff]
  %v2671 = vld [vmem:[%s9 + $0x280] sm:$0xff]
  %v2672 = vld [vmem:[%s9 + $0x288] sm:$0xff]
  %v2673 = vld [vmem:[%s9 + $0x290] sm:$0xff]
  %v2674 = vld [vmem:[%s9 + $0x298] sm:$0xff]
  %v2675 = vld [vmem:[%s9 + $0x2a0] sm:$0xff]
  %v2676 = vld [vmem:[%s9 + $0x2a8] sm:$0xff]
  %v2677 = vld [vmem:[%s9 + $0x2b0] sm:$0xff]
  %v2678 = vld [vmem:[%s9 + $0x2b8] sm:$0xff]
  %v2679 = vld [vmem:[%s9 + $0x2c0] sm:$0xff]
  %v2680 = vld [vmem:[%s9 + $0x2c8] sm:$0xff]
  %v2681 = vld [vmem:[%s9 + $0x2d0] sm:$0xff]
  %v2682 = vld [vmem:[%s9 + $0x2d8] sm:$0xff]
  %v2683 = vld [vmem:[%s9 + $0x2e0] sm:$0xff]
  %v2684 = vld [vmem:[%s9 + $0x2e8] sm:$0xff]
  %v2685 = vld [vmem:[%s9 + $0x2f0] sm:$0xff]
  %v2686 = vld [vmem:[%s9 + $0x2f8] sm:$0xff]
  %v2687 = vld [vmem:[%s9 + $0x300] sm:$0xff]
  %v2688 = vld [vmem:[%s9 + $0x308] sm:$0xff]
  %v2689 = vld [vmem:[%s9 + $0x310] sm:$0xff]
  %v2690 = vld [vmem:[%s9 + $0x318] sm:$0xff]
  %v2691 = vld [vmem:[%s9 + $0x320] sm:$0xff]
  %v2692 = vld [vmem:[%s9 + $0x328] sm:$0xff]
  %v2693 = vld [vmem:[%s9 + $0x330] sm:$0xff]
  %v2694 = vld [vmem:[%s9 + $0x338] sm:$0xff]
  %v2695 = vld [vmem:[%s9 + $0x340] sm:$0xff]
  %v2696 = vld [vmem:[%s9 + $0x348] sm:$0xff]
  %v2697 = vld [vmem:[%s9 + $0x350] sm:$0xff]
  %v2698 = vld [vmem:[%s9 + $0x358] sm:$0xff]
  %v2699 = vld [vmem:[%s9 + $0x360] sm:$0xff]
  %v2700 = vld [vmem:[%s9 + $0x368] sm:$0xff]
  %v2701 = vld [vmem:[%s9 + $0x370] sm:$0xff]
  %v2702 = vld [vmem:[%s9 + $0x378] sm:$0xff]
  %v2703 = vld [vmem:[%s9 + $0x380] sm:$0xff]
  %v2704 = vld [vmem:[%s9 + $0x388] sm:$0xff]
  %v2705 = vld [vmem:[%s9 + $0x390] sm:$0xff]
  %v2706 = vld [vmem:[%s9 + $0x398] sm:$0xff]
  %v2707 = vld [vmem:[%s9 + $0x3a0] sm:$0xff]
  %v2708 = vld [vmem:[%s9 + $0x3a8] sm:$0xff]
  %v2709 = vld [vmem:[%s9 + $0x3b0] sm:$0xff]
  %v2710 = vld [vmem:[%s9 + $0x3b8] sm:$0xff]
  %v2711 = vld [vmem:[%s9 + $0x3c0] sm:$0xff]
  %v2712 = vld [vmem:[%s9 + $0x3c8] sm:$0xff]
  %v2713 = vld [vmem:[%s9 + $0x3d0] sm:$0xff]
  %v2714 = vld [vmem:[%s9 + $0x3d8] sm:$0xff]
  %v2715 = vld [vmem:[%s9 + $0x3e0] sm:$0xff]
  %v2716 = vld [vmem:[%s9 + $0x3e8] sm:$0xff]
  %v2717 = vld [vmem:[%s9 + $0x3f0] sm:$0xff]
  %v2718 = vld [vmem:[%s9 + $0x3f8] sm:$0xff]
  %v2719 = vld [vmem:[%s9 + $0x400] sm:$0xff]
  %v2720 = vld [vmem:[%s9 + $0x408] sm:$0xff]
  %v2721 = vld [vmem:[%s9 + $0x410] sm:$0xff]
  %v2722 = vld [vmem:[%s9 + $0x418] sm:$0xff]
  %v2723 = vld [vmem:[%s9 + $0x420] sm:$0xff]
  %v2724 = vld [vmem:[%s9 + $0x428] sm:$0xff]
  %v2725 = vld [vmem:[%s9 + $0x430] sm:$0xff]
  %v2726 = vld [vmem:[%s9 + $0x438] sm:$0xff]
  %v2727 = vld [vmem:[%s9 + $0x440] sm:$0xff]
  %v2728 = vld [vmem:[%s9 + $0x448] sm:$0xff]
  %v2729 = vld [vmem:[%s9 + $0x450] sm:$0xff]
  %v2730 = vld [vmem:[%s9 + $0x458] sm:$0xff]
  %v2731 = vld [vmem:[%s9 + $0x460] sm:$0xff]
  %v2732 = vld [vmem:[%s9 + $0x468] sm:$0xff]
  %v2733 = vld [vmem:[%s9 + $0x470] sm:$0xff]
  %v2734 = vld [vmem:[%s9 + $0x478] sm:$0xff]
  %v2735 = vld [vmem:[%s9 + $0x480] sm:$0xff]
  %v2736 = vld [vmem:[%s9 + $0x488] sm:$0xff]
  %v2737 = vld [vmem:[%s9 + $0x490] sm:$0xff]
  %v2738 = vld [vmem:[%s9 + $0x498] sm:$0xff]
  %v2739 = vld [vmem:[%s9 + $0x4a0] sm:$0xff]
  %v2740 = vld [vmem:[%s9 + $0x4a8] sm:$0xff]
  %v2741 = vld [vmem:[%s9 + $0x4b0] sm:$0xff]
  %v2742 = vld [vmem:[%s9 + $0x4b8] sm:$0xff]
  %v2743 = vld [vmem:[%s9 + $0x4c0] sm:$0xff]
  %v2744 = vld [vmem:[%s9 + $0x4c8] sm:$0xff]
  %v2745 = vld [vmem:[%s9 + $0x4d0] sm:$0xff]
  %v2746 = vld [vmem:[%s9 + $0x4d8] sm:$0xff]
  %v2747 = vld [vmem:[%s9 + $0x4e0] sm:$0xff]
  %v2748 = vld [vmem:[%s9 + $0x4e8] sm:$0xff]
  %v2749 = vld [vmem:[%s9 + $0x4f0] sm:$0xff]
  %v2750 = vld [vmem:[%s9 + $0x4f8] sm:$0xff]
  %v2751 = vld [vmem:[%s9 + $0x500] sm:$0xff]
  %v2752 = vld [vmem:[%s9 + $0x508] sm:$0xff]
  %v2753 = vld [vmem:[%s9 + $0x510] sm:$0xff]
  %v2754 = vld [vmem:[%s9 + $0x518] sm:$0xff]
  %v2755 = vld [vmem:[%s9 + $0x520] sm:$0xff]
  %v2756 = vld [vmem:[%s9 + $0x528] sm:$0xff]
  %v2757 = vld [vmem:[%s9 + $0x530] sm:$0xff]
  %v2758 = vld [vmem:[%s9 + $0x538] sm:$0xff]
  %v2759 = vld [vmem:[%s9 + $0x540] sm:$0xff]
  %v2760 = vld [vmem:[%s9 + $0x548] sm:$0xff]
  %v2761 = vld [vmem:[%s9 + $0x550] sm:$0xff]
  %v2762 = vld [vmem:[%s9 + $0x558] sm:$0xff]
  %v2763 = vld [vmem:[%s9 + $0x560] sm:$0xff]
  %v2764 = vld [vmem:[%s9 + $0x568] sm:$0xff]
  %v2765 = vld [vmem:[%s9 + $0x570] sm:$0xff]
  %v2766 = vld [vmem:[%s9 + $0x578] sm:$0xff]
  %v2767 = vld [vmem:[%s9 + $0x580] sm:$0xff]
  %v2768 = vld [vmem:[%s9 + $0x588] sm:$0xff]
  %v2769 = vld [vmem:[%s9 + $0x590] sm:$0xff]
  %v2770 = vld [vmem:[%s9 + $0x598] sm:$0xff]
  %v2771 = vld [vmem:[%s9 + $0x5a0] sm:$0xff]
  %v2772 = vld [vmem:[%s9 + $0x5a8] sm:$0xff]
  %v2773 = vld [vmem:[%s9 + $0x5b0] sm:$0xff]
  %v2774 = vld [vmem:[%s9 + $0x5b8] sm:$0xff]
  %v2775 = vld [vmem:[%s9 + $0x5c0] sm:$0xff]
  %v2776 = vld [vmem:[%s9 + $0x5c8] sm:$0xff]
  %v2777 = vld [vmem:[%s9 + $0x5d0] sm:$0xff]
  %v2778 = vld [vmem:[%s9 + $0x5d8] sm:$0xff]
  %v2779 = vld [vmem:[%s9 + $0x5e0] sm:$0xff]
  %v2780 = vld [vmem:[%s9 + $0x5e8] sm:$0xff]
  %v2781 = vld [vmem:[%s9 + $0x5f0] sm:$0xff]
  %v2782 = vld [vmem:[%s9 + $0x5f8] sm:$0xff]
  %v2783 = vld [vmem:[%s9 + $0x600] sm:$0xff]
  %v2784 = vld [vmem:[%s9 + $0x608] sm:$0xff]
  %v2785 = vld [vmem:[%s9 + $0x610] sm:$0xff]
  %v2786 = vld [vmem:[%s9 + $0x618] sm:$0xff]
  %v2787 = vld [vmem:[%s9 + $0x620] sm:$0xff]
  %v2788 = vld [vmem:[%s9 + $0x628] sm:$0xff]
  %v2789 = vld [vmem:[%s9 + $0x630] sm:$0xff]
  %v2790 = vld [vmem:[%s9 + $0x638] sm:$0xff]
  %v2791 = vld [vmem:[%s9 + $0x640] sm:$0xff]
  %v2792 = vld [vmem:[%s9 + $0x648] sm:$0xff]
  %v2793 = vld [vmem:[%s9 + $0x650] sm:$0xff]
  %v2794 = vld [vmem:[%s9 + $0x658] sm:$0xff]
  %v2795 = vld [vmem:[%s9 + $0x660] sm:$0xff]
  %v2796 = vld [vmem:[%s9 + $0x668] sm:$0xff]
  %v2797 = vld [vmem:[%s9 + $0x670] sm:$0xff]
  %v2798 = vld [vmem:[%s9 + $0x678] sm:$0xff]
  %v2799 = vld [vmem:[%s10] sm:$0xff]
  %v2800 = vld [vmem:[%s10 + $0x8] sm:$0xff]
  %v2801 = vld [vmem:[%s10 + $0x10] sm:$0xff]
  %v2802 = vld [vmem:[%s10 + $0x18] sm:$0x3]
  %v2807 = vlaneseq
  %v2808 = vshrl.u32 %v2807, 7
  %v2809 = vsub.s32 0, %v2808
  %v2810 = vrot.slane %v2799, %v2809
  %v2811 = vlaneseq
  %v2812 = vshrl.u32 %v2811, 7
  %v2813 = vsub.s32 1, %v2812
  %v2814 = vrot.slane %v2799, %v2813
  %v2815 = vlaneseq
  %v2816 = vshrl.u32 %v2815, 7
  %v2817 = vsub.s32 2, %v2816
  %v2818 = vrot.slane %v2799, %v2817
  %v2819 = vlaneseq
  %v2820 = vshrl.u32 %v2819, 7
  %v2821 = vsub.s32 3, %v2820
  %v2822 = vrot.slane %v2799, %v2821
  %v2823 = vlaneseq
  %v2824 = vshrl.u32 %v2823, 7
  %v2825 = vsub.s32 4, %v2824
  %v2826 = vrot.slane %v2799, %v2825
  %v2827 = vlaneseq
  %v2828 = vshrl.u32 %v2827, 7
  %v2829 = vsub.s32 5, %v2828
  %v2830 = vrot.slane %v2799, %v2829
  %v2831 = vlaneseq
  %v2832 = vshrl.u32 %v2831, 7
  %v2833 = vsub.s32 6, %v2832
  %v2834 = vrot.slane %v2799, %v2833
  %v2835 = vlaneseq
  %v2836 = vshrl.u32 %v2835, 7
  %v2837 = vsub.s32 7, %v2836
  %v2838 = vrot.slane %v2799, %v2837
  %v2839 = vlaneseq
  %v2840 = vshrl.u32 %v2839, 7
  %v2841 = vsub.s32 0, %v2840
  %v2842 = vrot.slane %v2800, %v2841
  %v2843 = vlaneseq
  %v2844 = vshrl.u32 %v2843, 7
  %v2845 = vsub.s32 1, %v2844
  %v2846 = vrot.slane %v2800, %v2845
  %v2847 = vlaneseq
  %v2848 = vshrl.u32 %v2847, 7
  %v2849 = vsub.s32 2, %v2848
  %v2850 = vrot.slane %v2800, %v2849
  %v2851 = vlaneseq
  %v2852 = vshrl.u32 %v2851, 7
  %v2853 = vsub.s32 3, %v2852
  %v2854 = vrot.slane %v2800, %v2853
  %v2855 = vlaneseq
  %v2856 = vshrl.u32 %v2855, 7
  %v2857 = vsub.s32 4, %v2856
  %v2858 = vrot.slane %v2800, %v2857
  %v2859 = vlaneseq
  %v2860 = vshrl.u32 %v2859, 7
  %v2861 = vsub.s32 5, %v2860
  %v2862 = vrot.slane %v2800, %v2861
  %v2863 = vlaneseq
  %v2864 = vshrl.u32 %v2863, 7
  %v2865 = vsub.s32 6, %v2864
  %v2866 = vrot.slane %v2800, %v2865
  %v2867 = vlaneseq
  %v2868 = vshrl.u32 %v2867, 7
  %v2869 = vsub.s32 7, %v2868
  %v2870 = vrot.slane %v2800, %v2869
  %v2871 = vlaneseq
  %v2872 = vshrl.u32 %v2871, 7
  %v2873 = vsub.s32 0, %v2872
  %v2874 = vrot.slane %v2801, %v2873
  %v2875 = vlaneseq
  %v2876 = vshrl.u32 %v2875, 7
  %v2877 = vsub.s32 1, %v2876
  %v2878 = vrot.slane %v2801, %v2877
  %v2879 = vlaneseq
  %v2880 = vshrl.u32 %v2879, 7
  %v2881 = vsub.s32 2, %v2880
  %v2882 = vrot.slane %v2801, %v2881
  %v2883 = vlaneseq
  %v2884 = vshrl.u32 %v2883, 7
  %v2885 = vsub.s32 3, %v2884
  %v2886 = vrot.slane %v2801, %v2885
  %v2887 = vlaneseq
  %v2888 = vshrl.u32 %v2887, 7
  %v2889 = vsub.s32 4, %v2888
  %v2890 = vrot.slane %v2801, %v2889
  %v2891 = vlaneseq
  %v2892 = vshrl.u32 %v2891, 7
  %v2893 = vsub.s32 5, %v2892
  %v2894 = vrot.slane %v2801, %v2893
  %v2895 = vlaneseq
  %v2896 = vshrl.u32 %v2895, 7
  %v2897 = vsub.s32 6, %v2896
  %v2898 = vrot.slane %v2801, %v2897
  %v2899 = vlaneseq
  %v2900 = vshrl.u32 %v2899, 7
  %v2901 = vsub.s32 7, %v2900
  %v2902 = vrot.slane %v2801, %v2901
  %v2903 = vlaneseq
  %v2904 = vshrl.u32 %v2903, 7
  %v2905 = vsub.s32 0, %v2904
  %v2906 = vrot.slane %v2802, %v2905
  %v2907 = vlaneseq
  %v2908 = vshrl.u32 %v2907, 7
  %v2909 = vsub.s32 1, %v2908
  %v2910 = vrot.slane %v2802, %v2909
  %v3145 = vunpack.c.l.b16 %v2591
  %v3146 = vunpack.c.h.b16 %v2591
  %v3147 = vunpack.c.l.b16 %v2592
  %v3148 = vunpack.c.h.b16 %v2592
  %v3149 = vunpack.c.l.b16 %v2593
  %v3150 = vunpack.c.h.b16 %v2593
  %v3151 = vunpack.c.l.b16 %v2594
  %v3152 = vunpack.c.h.b16 %v2594
  %v3153 = vunpack.c.l.b16 %v2595
  %v3154 = vunpack.c.h.b16 %v2595
  %v3155 = vunpack.c.l.b16 %v2596
  %v3156 = vunpack.c.h.b16 %v2596
  %v3157 = vunpack.c.l.b16 %v2597
  %v3158 = vunpack.c.h.b16 %v2597
  %v3159 = vunpack.c.l.b16 %v2598
  %v3160 = vunpack.c.h.b16 %v2598
  %v3161 = vunpack.c.l.b16 %v2599
  %v3162 = vunpack.c.h.b16 %v2599
  %v3163 = vunpack.c.l.b16 %v2600
  %v3164 = vunpack.c.h.b16 %v2600
  %v3165 = vunpack.c.l.b16 %v2601
  %v3166 = vunpack.c.h.b16 %v2601
  %v3167 = vunpack.c.l.b16 %v2602
  %v3168 = vunpack.c.h.b16 %v2602
  %v3169 = vunpack.c.l.b16 %v2603
  %v3170 = vunpack.c.h.b16 %v2603
  %v3171 = vunpack.c.l.b16 %v2604
  %v3172 = vunpack.c.h.b16 %v2604
  %v3173 = vunpack.c.l.b16 %v2605
  %v3174 = vunpack.c.h.b16 %v2605
  %v3175 = vunpack.c.l.b16 %v2606
  %v3176 = vunpack.c.h.b16 %v2606
  %v3177 = vunpack.c.l.b16 %v2607
  %v3178 = vunpack.c.h.b16 %v2607
  %v3179 = vunpack.c.l.b16 %v2608
  %v3180 = vunpack.c.h.b16 %v2608
  %v3181 = vunpack.c.l.b16 %v2609
  %v3182 = vunpack.c.h.b16 %v2609
  %v3183 = vunpack.c.l.b16 %v2610
  %v3184 = vunpack.c.h.b16 %v2610
  %v3185 = vunpack.c.l.b16 %v2611
  %v3186 = vunpack.c.h.b16 %v2611
  %v3187 = vunpack.c.l.b16 %v2612
  %v3188 = vunpack.c.h.b16 %v2612
  %v3189 = vunpack.c.l.b16 %v2613
  %v3190 = vunpack.c.h.b16 %v2613
  %v3191 = vunpack.c.l.b16 %v2614
  %v3192 = vunpack.c.h.b16 %v2614
  %v3193 = vunpack.c.l.b16 %v2615
  %v3194 = vunpack.c.h.b16 %v2615
  %v3195 = vunpack.c.l.b16 %v2616
  %v3196 = vunpack.c.h.b16 %v2616
  %v3197 = vunpack.c.l.b16 %v2617
  %v3198 = vunpack.c.h.b16 %v2617
  %v3199 = vunpack.c.l.b16 %v2618
  %v3200 = vunpack.c.h.b16 %v2618
  %v3201 = vunpack.c.l.b16 %v2619
  %v3202 = vunpack.c.h.b16 %v2619
  %v3203 = vunpack.c.l.b16 %v2620
  %v3204 = vunpack.c.h.b16 %v2620
  %v3205 = vunpack.c.l.b16 %v2621
  %v3206 = vunpack.c.h.b16 %v2621
  %v3207 = vunpack.c.l.b16 %v2622
  %v3208 = vunpack.c.h.b16 %v2622
  %v3209 = vunpack.c.l.b16 %v2623
  %v3210 = vunpack.c.h.b16 %v2623
  %v3211 = vunpack.c.l.b16 %v2624
  %v3212 = vunpack.c.h.b16 %v2624
  %v3213 = vunpack.c.l.b16 %v2625
  %v3214 = vunpack.c.h.b16 %v2625
  %v3215 = vunpack.c.l.b16 %v2626
  %v3216 = vunpack.c.h.b16 %v2626
  %v3217 = vunpack.c.l.b16 %v2627
  %v3218 = vunpack.c.h.b16 %v2627
  %v3219 = vunpack.c.l.b16 %v2628
  %v3220 = vunpack.c.h.b16 %v2628
  %v3221 = vunpack.c.l.b16 %v2629
  %v3222 = vunpack.c.h.b16 %v2629
  %v3223 = vunpack.c.l.b16 %v2630
  %v3224 = vunpack.c.h.b16 %v2630
  %v3225 = vunpack.c.l.b16 %v2631
  %v3226 = vunpack.c.h.b16 %v2631
  %v3227 = vunpack.c.l.b16 %v2632
  %v3228 = vunpack.c.h.b16 %v2632
  %v3229 = vunpack.c.l.b16 %v2633
  %v3230 = vunpack.c.h.b16 %v2633
  %v3231 = vunpack.c.l.b16 %v2634
  %v3232 = vunpack.c.h.b16 %v2634
  %v3233 = vunpack.c.l.b16 %v2635
  %v3234 = vunpack.c.h.b16 %v2635
  %v3235 = vunpack.c.l.b16 %v2636
  %v3236 = vunpack.c.h.b16 %v2636
  %v3237 = vunpack.c.l.b16 %v2637
  %v3238 = vunpack.c.h.b16 %v2637
  %v3239 = vunpack.c.l.b16 %v2638
  %v3240 = vunpack.c.h.b16 %v2638
  %v3241 = vunpack.c.l.b16 %v2639
  %v3242 = vunpack.c.h.b16 %v2639
  %v3243 = vunpack.c.l.b16 %v2640
  %v3244 = vunpack.c.h.b16 %v2640
  %v3245 = vunpack.c.l.b16 %v2641
  %v3246 = vunpack.c.h.b16 %v2641
  %v3247 = vunpack.c.l.b16 %v2642
  %v3248 = vunpack.c.h.b16 %v2642
  %v3249 = vunpack.c.l.b16 %v2643
  %v3250 = vunpack.c.h.b16 %v2643
  %v3251 = vunpack.c.l.b16 %v2644
  %v3252 = vunpack.c.h.b16 %v2644
  %v3253 = vunpack.c.l.b16 %v2645
  %v3254 = vunpack.c.h.b16 %v2645
  %v3255 = vunpack.c.l.b16 %v2646
  %v3256 = vunpack.c.h.b16 %v2646
  %v3257 = vunpack.c.l.b16 %v2647
  %v3258 = vunpack.c.h.b16 %v2647
  %v3259 = vunpack.c.l.b16 %v2648
  %v3260 = vunpack.c.h.b16 %v2648
  %v3261 = vunpack.c.l.b16 %v2649
  %v3262 = vunpack.c.h.b16 %v2649
  %v3263 = vunpack.c.l.b16 %v2650
  %v3264 = vunpack.c.h.b16 %v2650
  %v3265 = vunpack.c.l.b16 %v2651
  %v3266 = vunpack.c.h.b16 %v2651
  %v3267 = vunpack.c.l.b16 %v2652
  %v3268 = vunpack.c.h.b16 %v2652
  %v3269 = vunpack.c.l.b16 %v2653
  %v3270 = vunpack.c.h.b16 %v2653
  %v3271 = vunpack.c.l.b16 %v2654
  %v3272 = vunpack.c.h.b16 %v2654
  %v3273 = vunpack.c.l.b16 %v2655
  %v3274 = vunpack.c.h.b16 %v2655
  %v3275 = vunpack.c.l.b16 %v2656
  %v3276 = vunpack.c.h.b16 %v2656
  %v3277 = vunpack.c.l.b16 %v2657
  %v3278 = vunpack.c.h.b16 %v2657
  %v3279 = vunpack.c.l.b16 %v2658
  %v3280 = vunpack.c.h.b16 %v2658
  %v3281 = vunpack.c.l.b16 %v2659
  %v3282 = vunpack.c.h.b16 %v2659
  %v3283 = vunpack.c.l.b16 %v2660
  %v3284 = vunpack.c.h.b16 %v2660
  %v3285 = vunpack.c.l.b16 %v2661
  %v3286 = vunpack.c.h.b16 %v2661
  %v3287 = vunpack.c.l.b16 %v2662
  %v3288 = vunpack.c.h.b16 %v2662
  %v3289 = vunpack.c.l.b16 %v2663
  %v3290 = vunpack.c.h.b16 %v2663
  %v3291 = vunpack.c.l.b16 %v2664
  %v3292 = vunpack.c.h.b16 %v2664
  %v3293 = vunpack.c.l.b16 %v2665
  %v3294 = vunpack.c.h.b16 %v2665
  %v3295 = vunpack.c.l.b16 %v2666
  %v3296 = vunpack.c.h.b16 %v2666
  %v3297 = vunpack.c.l.b16 %v2667
  %v3298 = vunpack.c.h.b16 %v2667
  %v3299 = vunpack.c.l.b16 %v2668
  %v3300 = vunpack.c.h.b16 %v2668
  %v3301 = vunpack.c.l.b16 %v2669
  %v3302 = vunpack.c.h.b16 %v2669
  %v3303 = vunpack.c.l.b16 %v2670
  %v3304 = vunpack.c.h.b16 %v2670
  %v3305 = vunpack.c.l.b16 %v2671
  %v3306 = vunpack.c.h.b16 %v2671
  %v3307 = vunpack.c.l.b16 %v2672
  %v3308 = vunpack.c.h.b16 %v2672
  %v3309 = vunpack.c.l.b16 %v2673
  %v3310 = vunpack.c.h.b16 %v2673
  %v3311 = vunpack.c.l.b16 %v2674
  %v3312 = vunpack.c.h.b16 %v2674
  %v3313 = vunpack.c.l.b16 %v2675
  %v3314 = vunpack.c.h.b16 %v2675
  %v3315 = vunpack.c.l.b16 %v2676
  %v3316 = vunpack.c.h.b16 %v2676
  %v3317 = vunpack.c.l.b16 %v2677
  %v3318 = vunpack.c.h.b16 %v2677
  %v3319 = vunpack.c.l.b16 %v2678
  %v3320 = vunpack.c.h.b16 %v2678
  %v3321 = vunpack.c.l.b16 %v2679
  %v3322 = vunpack.c.h.b16 %v2679
  %v3323 = vunpack.c.l.b16 %v2680
  %v3324 = vunpack.c.h.b16 %v2680
  %v3325 = vunpack.c.l.b16 %v2681
  %v3326 = vunpack.c.h.b16 %v2681
  %v3327 = vunpack.c.l.b16 %v2682
  %v3328 = vunpack.c.h.b16 %v2682
  %v3329 = vunpack.c.l.b16 %v2683
  %v3330 = vunpack.c.h.b16 %v2683
  %v3331 = vunpack.c.l.b16 %v2684
  %v3332 = vunpack.c.h.b16 %v2684
  %v3333 = vunpack.c.l.b16 %v2685
  %v3334 = vunpack.c.h.b16 %v2685
  %v3335 = vunpack.c.l.b16 %v2686
  %v3336 = vunpack.c.h.b16 %v2686
  %v3337 = vunpack.c.l.b16 %v2687
  %v3338 = vunpack.c.h.b16 %v2687
  %v3339 = vunpack.c.l.b16 %v2688
  %v3340 = vunpack.c.h.b16 %v2688
  %v3341 = vunpack.c.l.b16 %v2689
  %v3342 = vunpack.c.h.b16 %v2689
  %v3343 = vunpack.c.l.b16 %v2690
  %v3344 = vunpack.c.h.b16 %v2690
  %v3345 = vunpack.c.l.b16 %v2691
  %v3346 = vunpack.c.h.b16 %v2691
  %v3347 = vunpack.c.l.b16 %v2692
  %v3348 = vunpack.c.h.b16 %v2692
  %v3349 = vunpack.c.l.b16 %v2693
  %v3350 = vunpack.c.h.b16 %v2693
  %v3351 = vunpack.c.l.b16 %v2694
  %v3352 = vunpack.c.h.b16 %v2694
  %v3353 = vunpack.c.l.b16 %v2695
  %v3354 = vunpack.c.h.b16 %v2695
  %v3355 = vunpack.c.l.b16 %v2696
  %v3356 = vunpack.c.h.b16 %v2696
  %v3357 = vunpack.c.l.b16 %v2697
  %v3358 = vunpack.c.h.b16 %v2697
  %v3359 = vunpack.c.l.b16 %v2698
  %v3360 = vunpack.c.h.b16 %v2698
  %v3361 = vunpack.c.l.b16 %v2699
  %v3362 = vunpack.c.h.b16 %v2699
  %v3363 = vunpack.c.l.b16 %v2700
  %v3364 = vunpack.c.h.b16 %v2700
  %v3365 = vunpack.c.l.b16 %v2701
  %v3366 = vunpack.c.h.b16 %v2701
  %v3367 = vunpack.c.l.b16 %v2702
  %v3368 = vunpack.c.h.b16 %v2702
  %v3369 = vunpack.c.l.b16 %v2703
  %v3370 = vunpack.c.h.b16 %v2703
  %v3371 = vunpack.c.l.b16 %v2704
  %v3372 = vunpack.c.h.b16 %v2704
  %v3373 = vunpack.c.l.b16 %v2705
  %v3374 = vunpack.c.h.b16 %v2705
  %v3375 = vunpack.c.l.b16 %v2706
  %v3376 = vunpack.c.h.b16 %v2706
  %v3377 = vunpack.c.l.b16 %v2707
  %v3378 = vunpack.c.h.b16 %v2707
  %v3379 = vunpack.c.l.b16 %v2708
  %v3380 = vunpack.c.h.b16 %v2708
  %v3381 = vunpack.c.l.b16 %v2709
  %v3382 = vunpack.c.h.b16 %v2709
  %v3383 = vunpack.c.l.b16 %v2710
  %v3384 = vunpack.c.h.b16 %v2710
  %v3385 = vunpack.c.l.b16 %v2711
  %v3386 = vunpack.c.h.b16 %v2711
  %v3387 = vunpack.c.l.b16 %v2712
  %v3388 = vunpack.c.h.b16 %v2712
  %v3389 = vunpack.c.l.b16 %v2713
  %v3390 = vunpack.c.h.b16 %v2713
  %v3391 = vunpack.c.l.b16 %v2714
  %v3392 = vunpack.c.h.b16 %v2714
  %v3393 = vunpack.c.l.b16 %v2715
  %v3394 = vunpack.c.h.b16 %v2715
  %v3395 = vunpack.c.l.b16 %v2716
  %v3396 = vunpack.c.h.b16 %v2716
  %v3397 = vunpack.c.l.b16 %v2717
  %v3398 = vunpack.c.h.b16 %v2717
  %v3399 = vunpack.c.l.b16 %v2718
  %v3400 = vunpack.c.h.b16 %v2718
  %v3401 = vunpack.c.l.b16 %v2719
  %v3402 = vunpack.c.h.b16 %v2719
  %v3403 = vunpack.c.l.b16 %v2720
  %v3404 = vunpack.c.h.b16 %v2720
  %v3405 = vunpack.c.l.b16 %v2721
  %v3406 = vunpack.c.h.b16 %v2721
  %v3407 = vunpack.c.l.b16 %v2722
  %v3408 = vunpack.c.h.b16 %v2722
  %v3409 = vunpack.c.l.b16 %v2723
  %v3410 = vunpack.c.h.b16 %v2723
  %v3411 = vunpack.c.l.b16 %v2724
  %v3412 = vunpack.c.h.b16 %v2724
  %v3413 = vunpack.c.l.b16 %v2725
  %v3414 = vunpack.c.h.b16 %v2725
  %v3415 = vunpack.c.l.b16 %v2726
  %v3416 = vunpack.c.h.b16 %v2726
  %v3417 = vunpack.c.l.b16 %v2727
  %v3418 = vunpack.c.h.b16 %v2727
  %v3419 = vunpack.c.l.b16 %v2728
  %v3420 = vunpack.c.h.b16 %v2728
  %v3421 = vunpack.c.l.b16 %v2729
  %v3422 = vunpack.c.h.b16 %v2729
  %v3423 = vunpack.c.l.b16 %v2730
  %v3424 = vunpack.c.h.b16 %v2730
  %v3425 = vunpack.c.l.b16 %v2731
  %v3426 = vunpack.c.h.b16 %v2731
  %v3427 = vunpack.c.l.b16 %v2732
  %v3428 = vunpack.c.h.b16 %v2732
  %v3429 = vunpack.c.l.b16 %v2733
  %v3430 = vunpack.c.h.b16 %v2733
  %v3431 = vunpack.c.l.b16 %v2734
  %v3432 = vunpack.c.h.b16 %v2734
  %v3433 = vunpack.c.l.b16 %v2735
  %v3434 = vunpack.c.h.b16 %v2735
  %v3435 = vunpack.c.l.b16 %v2736
  %v3436 = vunpack.c.h.b16 %v2736
  %v3437 = vunpack.c.l.b16 %v2737
  %v3438 = vunpack.c.h.b16 %v2737
  %v3439 = vunpack.c.l.b16 %v2738
  %v3440 = vunpack.c.h.b16 %v2738
  %v3441 = vunpack.c.l.b16 %v2739
  %v3442 = vunpack.c.h.b16 %v2739
  %v3443 = vunpack.c.l.b16 %v2740
  %v3444 = vunpack.c.h.b16 %v2740
  %v3445 = vunpack.c.l.b16 %v2741
  %v3446 = vunpack.c.h.b16 %v2741
  %v3447 = vunpack.c.l.b16 %v2742
  %v3448 = vunpack.c.h.b16 %v2742
  %v3449 = vunpack.c.l.b16 %v2743
  %v3450 = vunpack.c.h.b16 %v2743
  %v3451 = vunpack.c.l.b16 %v2744
  %v3452 = vunpack.c.h.b16 %v2744
  %v3453 = vunpack.c.l.b16 %v2745
  %v3454 = vunpack.c.h.b16 %v2745
  %v3455 = vunpack.c.l.b16 %v2746
  %v3456 = vunpack.c.h.b16 %v2746
  %v3457 = vunpack.c.l.b16 %v2747
  %v3458 = vunpack.c.h.b16 %v2747
  %v3459 = vunpack.c.l.b16 %v2748
  %v3460 = vunpack.c.h.b16 %v2748
  %v3461 = vunpack.c.l.b16 %v2749
  %v3462 = vunpack.c.h.b16 %v2749
  %v3463 = vunpack.c.l.b16 %v2750
  %v3464 = vunpack.c.h.b16 %v2750
  %v3465 = vunpack.c.l.b16 %v2751
  %v3466 = vunpack.c.h.b16 %v2751
  %v3467 = vunpack.c.l.b16 %v2752
  %v3468 = vunpack.c.h.b16 %v2752
  %v3469 = vunpack.c.l.b16 %v2753
  %v3470 = vunpack.c.h.b16 %v2753
  %v3471 = vunpack.c.l.b16 %v2754
  %v3472 = vunpack.c.h.b16 %v2754
  %v3473 = vunpack.c.l.b16 %v2755
  %v3474 = vunpack.c.h.b16 %v2755
  %v3475 = vunpack.c.l.b16 %v2756
  %v3476 = vunpack.c.h.b16 %v2756
  %v3477 = vunpack.c.l.b16 %v2757
  %v3478 = vunpack.c.h.b16 %v2757
  %v3479 = vunpack.c.l.b16 %v2758
  %v3480 = vunpack.c.h.b16 %v2758
  %v3481 = vunpack.c.l.b16 %v2759
  %v3482 = vunpack.c.h.b16 %v2759
  %v3483 = vunpack.c.l.b16 %v2760
  %v3484 = vunpack.c.h.b16 %v2760
  %v3485 = vunpack.c.l.b16 %v2761
  %v3486 = vunpack.c.h.b16 %v2761
  %v3487 = vunpack.c.l.b16 %v2762
  %v3488 = vunpack.c.h.b16 %v2762
  %v3489 = vunpack.c.l.b16 %v2763
  %v3490 = vunpack.c.h.b16 %v2763
  %v3491 = vunpack.c.l.b16 %v2764
  %v3492 = vunpack.c.h.b16 %v2764
  %v3493 = vunpack.c.l.b16 %v2765
  %v3494 = vunpack.c.h.b16 %v2765
  %v3495 = vunpack.c.l.b16 %v2766
  %v3496 = vunpack.c.h.b16 %v2766
  %v3497 = vunpack.c.l.b16 %v2767
  %v3498 = vunpack.c.h.b16 %v2767
  %v3499 = vunpack.c.l.b16 %v2768
  %v3500 = vunpack.c.h.b16 %v2768
  %v3501 = vunpack.c.l.b16 %v2769
  %v3502 = vunpack.c.h.b16 %v2769
  %v3503 = vunpack.c.l.b16 %v2770
  %v3504 = vunpack.c.h.b16 %v2770
  %v3505 = vunpack.c.l.b16 %v2771
  %v3506 = vunpack.c.h.b16 %v2771
  %v3507 = vunpack.c.l.b16 %v2772
  %v3508 = vunpack.c.h.b16 %v2772
  %v3509 = vunpack.c.l.b16 %v2773
  %v3510 = vunpack.c.h.b16 %v2773
  %v3511 = vunpack.c.l.b16 %v2774
  %v3512 = vunpack.c.h.b16 %v2774
  %v3513 = vunpack.c.l.b16 %v2775
  %v3514 = vunpack.c.h.b16 %v2775
  %v3515 = vunpack.c.l.b16 %v2776
  %v3516 = vunpack.c.h.b16 %v2776
  %v3517 = vunpack.c.l.b16 %v2777
  %v3518 = vunpack.c.h.b16 %v2777
  %v3519 = vunpack.c.l.b16 %v2778
  %v3520 = vunpack.c.h.b16 %v2778
  %v3521 = vunpack.c.l.b16 %v2779
  %v3522 = vunpack.c.h.b16 %v2779
  %v3523 = vunpack.c.l.b16 %v2780
  %v3524 = vunpack.c.h.b16 %v2780
  %v3525 = vunpack.c.l.b16 %v2781
  %v3526 = vunpack.c.h.b16 %v2781
  %v3527 = vunpack.c.l.b16 %v2782
  %v3528 = vunpack.c.h.b16 %v2782
  %v3529 = vunpack.c.l.b16 %v2783
  %v3530 = vunpack.c.h.b16 %v2783
  %v3531 = vunpack.c.l.b16 %v2784
  %v3532 = vunpack.c.h.b16 %v2784
  %v3533 = vunpack.c.l.b16 %v2785
  %v3534 = vunpack.c.h.b16 %v2785
  %v3535 = vunpack.c.l.b16 %v2786
  %v3536 = vunpack.c.h.b16 %v2786
  %v3537 = vunpack.c.l.b16 %v2787
  %v3538 = vunpack.c.h.b16 %v2787
  %v3539 = vunpack.c.l.b16 %v2788
  %v3540 = vunpack.c.h.b16 %v2788
  %v3541 = vunpack.c.l.b16 %v2789
  %v3542 = vunpack.c.h.b16 %v2789
  %v3543 = vunpack.c.l.b16 %v2790
  %v3544 = vunpack.c.h.b16 %v2790
  %v3545 = vunpack.c.l.b16 %v2791
  %v3546 = vunpack.c.h.b16 %v2791
  %v3547 = vunpack.c.l.b16 %v2792
  %v3548 = vunpack.c.h.b16 %v2792
  %v3549 = vunpack.c.l.b16 %v2793
  %v3550 = vunpack.c.h.b16 %v2793
  %v3551 = vunpack.c.l.b16 %v2794
  %v3552 = vunpack.c.h.b16 %v2794
  %v3553 = vunpack.c.l.b16 %v2795
  %v3554 = vunpack.c.h.b16 %v2795
  %v3555 = vunpack.c.l.b16 %v2796
  %v3556 = vunpack.c.h.b16 %v2796
  %v3557 = vunpack.c.l.b16 %v2797
  %v3558 = vunpack.c.h.b16 %v2797
  %v3559 = vunpack.c.l.b16 %v2798
  %v3560 = vunpack.c.h.b16 %v2798
  %v3561 = vpack.c.b16 %v3171, %v3145
  %v3562 = vpack.c.b16 %v3172, %v3146
  %v3563 = vpack.c.b16 %v3173, %v3147
  %v3564 = vpack.c.b16 %v3174, %v3148
  %v3565 = vpack.c.b16 %v3175, %v3149
  %v3566 = vpack.c.b16 %v3176, %v3150
  %v3567 = vpack.c.b16 %v3177, %v3151
  %v3568 = vpack.c.b16 %v3178, %v3152
  %v3569 = vpack.c.b16 %v3179, %v3153
  %v3570 = vpack.c.b16 %v3180, %v3154
  %v3571 = vpack.c.b16 %v3181, %v3155
  %v3572 = vpack.c.b16 %v3182, %v3156
  %v3573 = vpack.c.b16 %v3183, %v3157
  %v3574 = vpack.c.b16 %v3184, %v3158
  %v3575 = vpack.c.b16 %v3185, %v3159
  %v3576 = vpack.c.b16 %v3186, %v3160
  %v3577 = vpack.c.b16 %v3187, %v3161
  %v3578 = vpack.c.b16 %v3188, %v3162
  %v3579 = vpack.c.b16 %v3189, %v3163
  %v3580 = vpack.c.b16 %v3190, %v3164
  %v3581 = vpack.c.b16 %v3191, %v3165
  %v3582 = vpack.c.b16 %v3192, %v3166
  %v3583 = vpack.c.b16 %v3193, %v3167
  %v3584 = vpack.c.b16 %v3194, %v3168
  %v3585 = vpack.c.b16 %v3195, %v3169
  %v3586 = vpack.c.b16 %v3196, %v3170
  %v3587 = vpack.c.b16 %v3223, %v3197
  %v3588 = vpack.c.b16 %v3224, %v3198
  %v3589 = vpack.c.b16 %v3225, %v3199
  %v3590 = vpack.c.b16 %v3226, %v3200
  %v3591 = vpack.c.b16 %v3227, %v3201
  %v3592 = vpack.c.b16 %v3228, %v3202
  %v3593 = vpack.c.b16 %v3229, %v3203
  %v3594 = vpack.c.b16 %v3230, %v3204
  %v3595 = vpack.c.b16 %v3231, %v3205
  %v3596 = vpack.c.b16 %v3232, %v3206
  %v3597 = vpack.c.b16 %v3233, %v3207
  %v3598 = vpack.c.b16 %v3234, %v3208
  %v3599 = vpack.c.b16 %v3235, %v3209
  %v3600 = vpack.c.b16 %v3236, %v3210
  %v3601 = vpack.c.b16 %v3237, %v3211
  %v3602 = vpack.c.b16 %v3238, %v3212
  %v3603 = vpack.c.b16 %v3239, %v3213
  %v3604 = vpack.c.b16 %v3240, %v3214
  %v3605 = vpack.c.b16 %v3241, %v3215
  %v3606 = vpack.c.b16 %v3242, %v3216
  %v3607 = vpack.c.b16 %v3243, %v3217
  %v3608 = vpack.c.b16 %v3244, %v3218
  %v3609 = vpack.c.b16 %v3245, %v3219
  %v3610 = vpack.c.b16 %v3246, %v3220
  %v3611 = vpack.c.b16 %v3247, %v3221
  %v3612 = vpack.c.b16 %v3248, %v3222
  %v3613 = vpack.c.b16 %v3275, %v3249
  %v3614 = vpack.c.b16 %v3276, %v3250
  %v3615 = vpack.c.b16 %v3277, %v3251
  %v3616 = vpack.c.b16 %v3278, %v3252
  %v3617 = vpack.c.b16 %v3279, %v3253
  %v3618 = vpack.c.b16 %v3280, %v3254
  %v3619 = vpack.c.b16 %v3281, %v3255
  %v3620 = vpack.c.b16 %v3282, %v3256
  %v3621 = vpack.c.b16 %v3283, %v3257
  %v3622 = vpack.c.b16 %v3284, %v3258
  %v3623 = vpack.c.b16 %v3285, %v3259
  %v3624 = vpack.c.b16 %v3286, %v3260
  %v3625 = vpack.c.b16 %v3287, %v3261
  %v3626 = vpack.c.b16 %v3288, %v3262
  %v3627 = vpack.c.b16 %v3289, %v3263
  %v3628 = vpack.c.b16 %v3290, %v3264
  %v3629 = vpack.c.b16 %v3291, %v3265
  %v3630 = vpack.c.b16 %v3292, %v3266
  %v3631 = vpack.c.b16 %v3293, %v3267
  %v3632 = vpack.c.b16 %v3294, %v3268
  %v3633 = vpack.c.b16 %v3295, %v3269
  %v3634 = vpack.c.b16 %v3296, %v3270
  %v3635 = vpack.c.b16 %v3297, %v3271
  %v3636 = vpack.c.b16 %v3298, %v3272
  %v3637 = vpack.c.b16 %v3299, %v3273
  %v3638 = vpack.c.b16 %v3300, %v3274
  %v3639 = vpack.c.b16 %v3327, %v3301
  %v3640 = vpack.c.b16 %v3328, %v3302
  %v3641 = vpack.c.b16 %v3329, %v3303
  %v3642 = vpack.c.b16 %v3330, %v3304
  %v3643 = vpack.c.b16 %v3331, %v3305
  %v3644 = vpack.c.b16 %v3332, %v3306
  %v3645 = vpack.c.b16 %v3333, %v3307
  %v3646 = vpack.c.b16 %v3334, %v3308
  %v3647 = vpack.c.b16 %v3335, %v3309
  %v3648 = vpack.c.b16 %v3336, %v3310
  %v3649 = vpack.c.b16 %v3337, %v3311
  %v3650 = vpack.c.b16 %v3338, %v3312
  %v3651 = vpack.c.b16 %v3339, %v3313
  %v3652 = vpack.c.b16 %v3340, %v3314
  %v3653 = vpack.c.b16 %v3341, %v3315
  %v3654 = vpack.c.b16 %v3342, %v3316
  %v3655 = vpack.c.b16 %v3343, %v3317
  %v3656 = vpack.c.b16 %v3344, %v3318
  %v3657 = vpack.c.b16 %v3345, %v3319
  %v3658 = vpack.c.b16 %v3346, %v3320
  %v3659 = vpack.c.b16 %v3347, %v3321
  %v3660 = vpack.c.b16 %v3348, %v3322
  %v3661 = vpack.c.b16 %v3349, %v3323
  %v3662 = vpack.c.b16 %v3350, %v3324
  %v3663 = vpack.c.b16 %v3351, %v3325
  %v3664 = vpack.c.b16 %v3352, %v3326
  %v3665 = vpack.c.b16 %v3379, %v3353
  %v3666 = vpack.c.b16 %v3380, %v3354
  %v3667 = vpack.c.b16 %v3381, %v3355
  %v3668 = vpack.c.b16 %v3382, %v3356
  %v3669 = vpack.c.b16 %v3383, %v3357
  %v3670 = vpack.c.b16 %v3384, %v3358
  %v3671 = vpack.c.b16 %v3385, %v3359
  %v3672 = vpack.c.b16 %v3386, %v3360
  %v3673 = vpack.c.b16 %v3387, %v3361
  %v3674 = vpack.c.b16 %v3388, %v3362
  %v3675 = vpack.c.b16 %v3389, %v3363
  %v3676 = vpack.c.b16 %v3390, %v3364
  %v3677 = vpack.c.b16 %v3391, %v3365
  %v3678 = vpack.c.b16 %v3392, %v3366
  %v3679 = vpack.c.b16 %v3393, %v3367
  %v3680 = vpack.c.b16 %v3394, %v3368
  %v3681 = vpack.c.b16 %v3395, %v3369
  %v3682 = vpack.c.b16 %v3396, %v3370
  %v3683 = vpack.c.b16 %v3397, %v3371
  %v3684 = vpack.c.b16 %v3398, %v3372
  %v3685 = vpack.c.b16 %v3399, %v3373
  %v3686 = vpack.c.b16 %v3400, %v3374
  %v3687 = vpack.c.b16 %v3401, %v3375
  %v3688 = vpack.c.b16 %v3402, %v3376
  %v3689 = vpack.c.b16 %v3403, %v3377
  %v3690 = vpack.c.b16 %v3404, %v3378
  %v3691 = vpack.c.b16 %v3431, %v3405
  %v3692 = vpack.c.b16 %v3432, %v3406
  %v3693 = vpack.c.b16 %v3433, %v3407
  %v3694 = vpack.c.b16 %v3434, %v3408
  %v3695 = vpack.c.b16 %v3435, %v3409
  %v3696 = vpack.c.b16 %v3436, %v3410
  %v3697 = vpack.c.b16 %v3437, %v3411
  %v3698 = vpack.c.b16 %v3438, %v3412
  %v3699 = vpack.c.b16 %v3439, %v3413
  %v3700 = vpack.c.b16 %v3440, %v3414
  %v3701 = vpack.c.b16 %v3441, %v3415
  %v3702 = vpack.c.b16 %v3442, %v3416
  %v3703 = vpack.c.b16 %v3443, %v3417
  %v3704 = vpack.c.b16 %v3444, %v3418
  %v3705 = vpack.c.b16 %v3445, %v3419
  %v3706 = vpack.c.b16 %v3446, %v3420
  %v3707 = vpack.c.b16 %v3447, %v3421
  %v3708 = vpack.c.b16 %v3448, %v3422
  %v3709 = vpack.c.b16 %v3449, %v3423
  %v3710 = vpack.c.b16 %v3450, %v3424
  %v3711 = vpack.c.b16 %v3451, %v3425
  %v3712 = vpack.c.b16 %v3452, %v3426
  %v3713 = vpack.c.b16 %v3453, %v3427
  %v3714 = vpack.c.b16 %v3454, %v3428
  %v3715 = vpack.c.b16 %v3455, %v3429
  %v3716 = vpack.c.b16 %v3456, %v3430
  %v3717 = vpack.c.b16 %v3483, %v3457
  %v3718 = vpack.c.b16 %v3484, %v3458
  %v3719 = vpack.c.b16 %v3485, %v3459
  %v3720 = vpack.c.b16 %v3486, %v3460
  %v3721 = vpack.c.b16 %v3487, %v3461
  %v3722 = vpack.c.b16 %v3488, %v3462
  %v3723 = vpack.c.b16 %v3489, %v3463
  %v3724 = vpack.c.b16 %v3490, %v3464
  %v3725 = vpack.c.b16 %v3491, %v3465
  %v3726 = vpack.c.b16 %v3492, %v3466
  %v3727 = vpack.c.b16 %v3493, %v3467
  %v3728 = vpack.c.b16 %v3494, %v3468
  %v3729 = vpack.c.b16 %v3495, %v3469
  %v3730 = vpack.c.b16 %v3496, %v3470
  %v3731 = vpack.c.b16 %v3497, %v3471
  %v3732 = vpack.c.b16 %v3498, %v3472
  %v3733 = vpack.c.b16 %v3499, %v3473
  %v3734 = vpack.c.b16 %v3500, %v3474
  %v3735 = vpack.c.b16 %v3501, %v3475
  %v3736 = vpack.c.b16 %v3502, %v3476
  %v3737 = vpack.c.b16 %v3503, %v3477
  %v3738 = vpack.c.b16 %v3504, %v3478
  %v3739 = vpack.c.b16 %v3505, %v3479
  %v3740 = vpack.c.b16 %v3506, %v3480
  %v3741 = vpack.c.b16 %v3507, %v3481
  %v3742 = vpack.c.b16 %v3508, %v3482
  %v3743 = vpack.c.b16 %v3535, %v3509
  %v3744 = vpack.c.b16 %v3536, %v3510
  %v3745 = vpack.c.b16 %v3537, %v3511
  %v3746 = vpack.c.b16 %v3538, %v3512
  %v3747 = vpack.c.b16 %v3539, %v3513
  %v3748 = vpack.c.b16 %v3540, %v3514
  %v3749 = vpack.c.b16 %v3541, %v3515
  %v3750 = vpack.c.b16 %v3542, %v3516
  %v3751 = vpack.c.b16 %v3543, %v3517
  %v3752 = vpack.c.b16 %v3544, %v3518
  %v3753 = vpack.c.b16 %v3545, %v3519
  %v3754 = vpack.c.b16 %v3546, %v3520
  %v3755 = vpack.c.b16 %v3547, %v3521
  %v3756 = vpack.c.b16 %v3548, %v3522
  %v3757 = vpack.c.b16 %v3549, %v3523
  %v3758 = vpack.c.b16 %v3550, %v3524
  %v3759 = vpack.c.b16 %v3551, %v3525
  %v3760 = vpack.c.b16 %v3552, %v3526
  %v3761 = vpack.c.b16 %v3553, %v3527
  %v3762 = vpack.c.b16 %v3554, %v3528
  %v3763 = vpack.c.b16 %v3555, %v3529
  %v3764 = vpack.c.b16 %v3556, %v3530
  %v3765 = vpack.c.b16 %v3557, %v3531
  %v3766 = vpack.c.b16 %v3558, %v3532
  %v3767 = vpack.c.b16 %v3559, %v3533
  %v3768 = vpack.c.b16 %v3560, %v3534
  %3977 = vmatprep.subr.bf16.mxu0 %v3562
  %3978 = vmatpush1.bf16.msra.mxu0 %v3561
  %3979 = vmatprep.subr.bf16.mxu0 %v3588
  %3980 = vmatpush1.bf16.msra.mxu0 %v3587
  %3981 = vmatprep.subr.bf16.mxu0 %v3614
  %3982 = vmatpush1.bf16.msra.mxu0 %v3613
  %3983 = vmatprep.subr.bf16.mxu0 %v3640
  %3984 = vmatpush1.bf16.msra.mxu0 %v3639
  %3985 = vmatprep.subr.bf16.mxu0 %v3666
  %3986 = vmatpush1.bf16.msra.mxu0 %v3665
  %3987 = vmatprep.subr.bf16.mxu0 %v3692
  %3988 = vmatpush1.bf16.msra.mxu0 %v3691
  %3989 = vmatprep.subr.bf16.mxu0 %v3718
  %3990 = vmatpush1.bf16.msra.mxu0 %v3717
  %3991 = vmatprep.subr.bf16.mxu0 %v3744
  %3992 = vmatpush1.bf16.msra.mxu0 %v3743
  %3993 = vmatprep.subr.bf16.mxu0 0
  %3994 = vmatpush1.bf16.msra.mxu0 0
  %3995 = vmatprep.subr.bf16.mxu0 0
  %3996 = vmatpush1.bf16.msra.mxu0 0
  %3997 = vmatprep.subr.bf16.mxu0 0
  %3998 = vmatpush1.bf16.msra.mxu0 0
  %3999 = vmatprep.subr.bf16.mxu0 0
  %4000 = vmatpush1.bf16.msra.mxu0 0
  %4001 = vmatprep.subr.bf16.mxu0 0
  %4002 = vmatpush1.bf16.msra.mxu0 0
  %4003 = vmatprep.subr.bf16.mxu0 0
  %4004 = vmatpush1.bf16.msra.mxu0 0
  %4005 = vmatprep.subr.bf16.mxu0 0
  %4006 = vmatpush1.bf16.msra.mxu0 0
  %4007 = vmatprep.subr.bf16.mxu0 0
  %4008 = vmatpush1.bf16.msra.mxu0 0
  %4009 = vmatprep.mubr.bf16.mxu0 0
  %4010 = vmatmul.mubr.bf16.gmra.mrb[0].mxu0 %v2590
  %v4011 = vpop.f32.mrb[0].mxu0
  %v4012 = vadd.f32 %v2810, %v4011
  %v4013 = vpop.f32.mrb[0].mxu0
  %v4014 = vadd.f32 %v2814, %v4013
  %v4015 = vpop.f32.mrb[0].mxu0
  %v4016 = vpop.f32.mrb[0].mxu0
  %4017 = vdwg.mxu0
  %4018 = vmatprep.subr.bf16.mxu0 %v3564
  %4019 = vmatpush1.bf16.msra.mxu0 %v3563
  %4020 = vmatprep.subr.bf16.mxu0 %v3590
  %4021 = vmatpush1.bf16.msra.mxu0 %v3589
  %4022 = vmatprep.subr.bf16.mxu0 %v3616
  %4023 = vmatpush1.bf16.msra.mxu0 %v3615
  %4024 = vmatprep.subr.bf16.mxu0 %v3642
  %4025 = vmatpush1.bf16.msra.mxu0 %v3641
  %4026 = vmatprep.subr.bf16.mxu0 %v3668
  %4027 = vmatpush1.bf16.msra.mxu0 %v3667
  %4028 = vmatprep.subr.bf16.mxu0 %v3694
  %4029 = vmatpush1.bf16.msra.mxu0 %v3693
  %4030 = vmatprep.subr.bf16.mxu0 %v3720
  %4031 = vmatpush1.bf16.msra.mxu0 %v3719
  %4032 = vmatprep.subr.bf16.mxu0 %v3746
  %4033 = vmatpush1.bf16.msra.mxu0 %v3745
  %4034 = vmatprep.subr.bf16.mxu0 0
  %4035 = vmatpush1.bf16.msra.mxu0 0
  %4036 = vmatprep.subr.bf16.mxu0 0
  %4037 = vmatpush1.bf16.msra.mxu0 0
  %4038 = vmatprep.subr.bf16.mxu0 0
  %4039 = vmatpush1.bf16.msra.mxu0 0
  %4040 = vmatprep.subr.bf16.mxu0 0
  %4041 = vmatpush1.bf16.msra.mxu0 0
  %4042 = vmatprep.subr.bf16.mxu0 0
  %4043 = vmatpush1.bf16.msra.mxu0 0
  %4044 = vmatprep.subr.bf16.mxu0 0
  %4045 = vmatpush1.bf16.msra.mxu0 0
  %4046 = vmatprep.subr.bf16.mxu0 0
  %4047 = vmatpush1.bf16.msra.mxu0 0
  %4048 = vmatprep.subr.bf16.mxu0 0
  %4049 = vmatpush1.bf16.msra.mxu0 0
  %4050 = vmatprep.mubr.bf16.mxu0 0
  %4051 = vmatmul.mubr.bf16.gmra.mrb[0].mxu0 %v2590
  %v4052 = vpop.f32.mrb[0].mxu0
  %v4053 = vadd.f32 %v2818, %v4052
  %v4054 = vpop.f32.mrb[0].mxu0
  %v4055 = vadd.f32 %v2822, %v4054
  %v4056 = vpop.f32.mrb[0].mxu0
  %v4057 = vpop.f32.mrb[0].mxu0
  %4058 = vdwg.mxu0
  %4059 = vmatprep.subr.bf16.mxu0 %v3566
  %4060 = vmatpush1.bf16.msra.mxu0 %v3565
  %4061 = vmatprep.subr.bf16.mxu0 %v3592
  %4062 = vmatpush1.bf16.msra.mxu0 %v3591
  %4063 = vmatprep.subr.bf16.mxu0 %v3618
  %4064 = vmatpush1.bf16.msra.mxu0 %v3617
  %4065 = vmatprep.subr.bf16.mxu0 %v3644
  %4066 = vmatpush1.bf16.msra.mxu0 %v3643
  %4067 = vmatprep.subr.bf16.mxu0 %v3670
  %4068 = vmatpush1.bf16.msra.mxu0 %v3669
  %4069 = vmatprep.subr.bf16.mxu0 %v3696
  %4070 = vmatpush1.bf16.msra.mxu0 %v3695
  %4071 = vmatprep.subr.bf16.mxu0 %v3722
  %4072 = vmatpush1.bf16.msra.mxu0 %v3721
  %4073 = vmatprep.subr.bf16.mxu0 %v3748
  %4074 = vmatpush1.bf16.msra.mxu0 %v3747
  %4075 = vmatprep.subr.bf16.mxu0 0
  %4076 = vmatpush1.bf16.msra.mxu0 0
  %4077 = vmatprep.subr.bf16.mxu0 0
  %4078 = vmatpush1.bf16.msra.mxu0 0
  %4079 = vmatprep.subr.bf16.mxu0 0
  %4080 = vmatpush1.bf16.msra.mxu0 0
  %4081 = vmatprep.subr.bf16.mxu0 0
  %4082 = vmatpush1.bf16.msra.mxu0 0
  %4083 = vmatprep.subr.bf16.mxu0 0
  %4084 = vmatpush1.bf16.msra.mxu0 0
  %4085 = vmatprep.subr.bf16.mxu0 0
  %4086 = vmatpush1.bf16.msra.mxu0 0
  %4087 = vmatprep.subr.bf16.mxu0 0
  %4088 = vmatpush1.bf16.msra.mxu0 0
  %4089 = vmatprep.subr.bf16.mxu0 0
  %4090 = vmatpush1.bf16.msra.mxu0 0
  %4091 = vmatprep.mubr.bf16.mxu0 0
  %4092 = vmatmul.mubr.bf16.gmra.mrb[0].mxu0 %v2590
  %v4093 = vpop.f32.mrb[0].mxu0
  %v4094 = vadd.f32 %v2826, %v4093
  %v4095 = vpop.f32.mrb[0].mxu0
  %v4096 = vadd.f32 %v2830, %v4095
  %v4097 = vpop.f32.mrb[0].mxu0
  %v4098 = vpop.f32.mrb[0].mxu0
  %4099 = vdwg.mxu0
  %4100 = vmatprep.subr.bf16.mxu0 %v3568
  %4101 = vmatpush1.bf16.msra.mxu0 %v3567
  %4102 = vmatprep.subr.bf16.mxu0 %v3594
  %4103 = vmatpush1.bf16.msra.mxu0 %v3593
  %4104 = vmatprep.subr.bf16.mxu0 %v3620
  %4105 = vmatpush1.bf16.msra.mxu0 %v3619
  %4106 = vmatprep.subr.bf16.mxu0 %v3646
  %4107 = vmatpush1.bf16.msra.mxu0 %v3645
  %4108 = vmatprep.subr.bf16.mxu0 %v3672
  %4109 = vmatpush1.bf16.msra.mxu0 %v3671
  %4110 = vmatprep.subr.bf16.mxu0 %v3698
  %4111 = vmatpush1.bf16.msra.mxu0 %v3697
  %4112 = vmatprep.subr.bf16.mxu0 %v3724
  %4113 = vmatpush1.bf16.msra.mxu0 %v3723
  %4114 = vmatprep.subr.bf16.mxu0 %v3750
  %4115 = vmatpush1.bf16.msra.mxu0 %v3749
  %4116 = vmatprep.subr.bf16.mxu0 0
  %4117 = vmatpush1.bf16.msra.mxu0 0
  %4118 = vmatprep.subr.bf16.mxu0 0
  %4119 = vmatpush1.bf16.msra.mxu0 0
  %4120 = vmatprep.subr.bf16.mxu0 0
  %4121 = vmatpush1.bf16.msra.mxu0 0
  %4122 = vmatprep.subr.bf16.mxu0 0
  %4123 = vmatpush1.bf16.msra.mxu0 0
  %4124 = vmatprep.subr.bf16.mxu0 0
  %4125 = vmatpush1.bf16.msra.mxu0 0
  %4126 = vmatprep.subr.bf16.mxu0 0
  %4127 = vmatpush1.bf16.msra.mxu0 0
  %4128 = vmatprep.subr.bf16.mxu0 0
  %4129 = vmatpush1.bf16.msra.mxu0 0
  %4130 = vmatprep.subr.bf16.mxu0 0
  %4131 = vmatpush1.bf16.msra.mxu0 0
  %4132 = vmatprep.mubr.bf16.mxu0 0
  %4133 = vmatmul.mubr.bf16.gmra.mrb[0].mxu0 %v2590
  %v4134 = vpop.f32.mrb[0].mxu0
  %v4135 = vadd.f32 %v2834, %v4134
  %v4136 = vpop.f32.mrb[0].mxu0
  %v4137 = vadd.f32 %v2838, %v4136
  %v4138 = vpop.f32.mrb[0].mxu0
  %v4139 = vpop.f32.mrb[0].mxu0
  %4140 = vdwg.mxu0
  %4141 = vmatprep.subr.bf16.mxu0 %v3570
  %4142 = vmatpush1.bf16.msra.mxu0 %v3569
  %4143 = vmatprep.subr.bf16.mxu0 %v3596
  %4144 = vmatpush1.bf16.msra.mxu0 %v3595
  %4145 = vmatprep.subr.bf16.mxu0 %v3622
  %4146 = vmatpush1.bf16.msra.mxu0 %v3621
  %4147 = vmatprep.subr.bf16.mxu0 %v3648
  %4148 = vmatpush1.bf16.msra.mxu0 %v3647
  %4149 = vmatprep.subr.bf16.mxu0 %v3674
  %4150 = vmatpush1.bf16.msra.mxu0 %v3673
  %4151 = vmatprep.subr.bf16.mxu0 %v3700
  %4152 = vmatpush1.bf16.msra.mxu0 %v3699
  %4153 = vmatprep.subr.bf16.mxu0 %v3726
  %4154 = vmatpush1.bf16.msra.mxu0 %v3725
  %4155 = vmatprep.subr.bf16.mxu0 %v3752
  %4156 = vmatpush1.bf16.msra.mxu0 %v3751
  %4157 = vmatprep.subr.bf16.mxu0 0
  %4158 = vmatpush1.bf16.msra.mxu0 0
  %4159 = vmatprep.subr.bf16.mxu0 0
  %4160 = vmatpush1.bf16.msra.mxu0 0
  %4161 = vmatprep.subr.bf16.mxu0 0
  %4162 = vmatpush1.bf16.msra.mxu0 0
  %4163 = vmatprep.subr.bf16.mxu0 0
  %4164 = vmatpush1.bf16.msra.mxu0 0
  %4165 = vmatprep.subr.bf16.mxu0 0
  %4166 = vmatpush1.bf16.msra.mxu0 0
  %4167 = vmatprep.subr.bf16.mxu0 0
  %4168 = vmatpush1.bf16.msra.mxu0 0
  %4169 = vmatprep.subr.bf16.mxu0 0
  %4170 = vmatpush1.bf16.msra.mxu0 0
  %4171 = vmatprep.subr.bf16.mxu0 0
  %4172 = vmatpush1.bf16.msra.mxu0 0
  %4173 = vmatprep.mubr.bf16.mxu0 0
  %4174 = vmatmul.mubr.bf16.gmra.mrb[0].mxu0 %v2590
  %v4175 = vpop.f32.mrb[0].mxu0
  %v4176 = vadd.f32 %v2842, %v4175
  %v4177 = vpop.f32.mrb[0].mxu0
  %v4178 = vadd.f32 %v2846, %v4177
  %v4179 = vpop.f32.mrb[0].mxu0
  %v4180 = vpop.f32.mrb[0].mxu0
  %4181 = vdwg.mxu0
  %4182 = vmatprep.subr.bf16.mxu0 %v3572
  %4183 = vmatpush1.bf16.msra.mxu0 %v3571
  %4184 = vmatprep.subr.bf16.mxu0 %v3598
  %4185 = vmatpush1.bf16.msra.mxu0 %v3597
  %4186 = vmatprep.subr.bf16.mxu0 %v3624
  %4187 = vmatpush1.bf16.msra.mxu0 %v3623
  %4188 = vmatprep.subr.bf16.mxu0 %v3650
  %4189 = vmatpush1.bf16.msra.mxu0 %v3649
  %4190 = vmatprep.subr.bf16.mxu0 %v3676
  %4191 = vmatpush1.bf16.msra.mxu0 %v3675
  %4192 = vmatprep.subr.bf16.mxu0 %v3702
  %4193 = vmatpush1.bf16.msra.mxu0 %v3701
  %4194 = vmatprep.subr.bf16.mxu0 %v3728
  %4195 = vmatpush1.bf16.msra.mxu0 %v3727
  %4196 = vmatprep.subr.bf16.mxu0 %v3754
  %4197 = vmatpush1.bf16.msra.mxu0 %v3753
  %4198 = vmatprep.subr.bf16.mxu0 0
  %4199 = vmatpush1.bf16.msra.mxu0 0
  %4200 = vmatprep.subr.bf16.mxu0 0
  %4201 = vmatpush1.bf16.msra.mxu0 0
  %4202 = vmatprep.subr.bf16.mxu0 0
  %4203 = vmatpush1.bf16.msra.mxu0 0
  %4204 = vmatprep.subr.bf16.mxu0 0
  %4205 = vmatpush1.bf16.msra.mxu0 0
  %4206 = vmatprep.subr.bf16.mxu0 0
  %4207 = vmatpush1.bf16.msra.mxu0 0
  %4208 = vmatprep.subr.bf16.mxu0 0
  %4209 = vmatpush1.bf16.msra.mxu0 0
  %4210 = vmatprep.subr.bf16.mxu0 0
  %4211 = vmatpush1.bf16.msra.mxu0 0
  %4212 = vmatprep.subr.bf16.mxu0 0
  %4213 = vmatpush1.bf16.msra.mxu0 0
  %4214 = vmatprep.mubr.bf16.mxu0 0
  %4215 = vmatmul.mubr.bf16.gmra.mrb[0].mxu0 %v2590
  %v4216 = vpop.f32.mrb[0].mxu0
  %v4217 = vadd.f32 %v2850, %v4216
  %v4218 = vpop.f32.mrb[0].mxu0
  %v4219 = vadd.f32 %v2854, %v4218
  %v4220 = vpop.f32.mrb[0].mxu0
  %v4221 = vpop.f32.mrb[0].mxu0
  %4222 = vdwg.mxu0
  %4223 = vmatprep.subr.bf16.mxu0 %v3574
  %4224 = vmatpush1.bf16.msra.mxu0 %v3573
  %4225 = vmatprep.subr.bf16.mxu0 %v3600
  %4226 = vmatpush1.bf16.msra.mxu0 %v3599
  %4227 = vmatprep.subr.bf16.mxu0 %v3626
  %4228 = vmatpush1.bf16.msra.mxu0 %v3625
  %4229 = vmatprep.subr.bf16.mxu0 %v3652
  %4230 = vmatpush1.bf16.msra.mxu0 %v3651
  %4231 = vmatprep.subr.bf16.mxu0 %v3678
  %4232 = vmatpush1.bf16.msra.mxu0 %v3677
  %4233 = vmatprep.subr.bf16.mxu0 %v3704
  %4234 = vmatpush1.bf16.msra.mxu0 %v3703
  %4235 = vmatprep.subr.bf16.mxu0 %v3730
  %4236 = vmatpush1.bf16.msra.mxu0 %v3729
  %4237 = vmatprep.subr.bf16.mxu0 %v3756
  %4238 = vmatpush1.bf16.msra.mxu0 %v3755
  %4239 = vmatprep.subr.bf16.mxu0 0
  %4240 = vmatpush1.bf16.msra.mxu0 0
  %4241 = vmatprep.subr.bf16.mxu0 0
  %4242 = vmatpush1.bf16.msra.mxu0 0
  %4243 = vmatprep.subr.bf16.mxu0 0
  %4244 = vmatpush1.bf16.msra.mxu0 0
  %4245 = vmatprep.subr.bf16.mxu0 0
  %4246 = vmatpush1.bf16.msra.mxu0 0
  %4247 = vmatprep.subr.bf16.mxu0 0
  %4248 = vmatpush1.bf16.msra.mxu0 0
  %4249 = vmatprep.subr.bf16.mxu0 0
  %4250 = vmatpush1.bf16.msra.mxu0 0
  %4251 = vmatprep.subr.bf16.mxu0 0
  %4252 = vmatpush1.bf16.msra.mxu0 0
  %4253 = vmatprep.subr.bf16.mxu0 0
  %4254 = vmatpush1.bf16.msra.mxu0 0
  %4255 = vmatprep.mubr.bf16.mxu0 0
  %4256 = vmatmul.mubr.bf16.gmra.mrb[0].mxu0 %v2590
  %v4257 = vpop.f32.mrb[0].mxu0
  %v4258 = vadd.f32 %v2858, %v4257
  %v4259 = vpop.f32.mrb[0].mxu0
  %v4260 = vadd.f32 %v2862, %v4259
  %v4261 = vpop.f32.mrb[0].mxu0
  %v4262 = vpop.f32.mrb[0].mxu0
  %4263 = vdwg.mxu0
  %4264 = vmatprep.subr.bf16.mxu0 %v3576
  %4265 = vmatpush1.bf16.msra.mxu0 %v3575
  %4266 = vmatprep.subr.bf16.mxu0 %v3602
  %4267 = vmatpush1.bf16.msra.mxu0 %v3601
  %4268 = vmatprep.subr.bf16.mxu0 %v3628
  %4269 = vmatpush1.bf16.msra.mxu0 %v3627
  %4270 = vmatprep.subr.bf16.mxu0 %v3654
  %4271 = vmatpush1.bf16.msra.mxu0 %v3653
  %4272 = vmatprep.subr.bf16.mxu0 %v3680
  %4273 = vmatpush1.bf16.msra.mxu0 %v3679
  %4274 = vmatprep.subr.bf16.mxu0 %v3706
  %4275 = vmatpush1.bf16.msra.mxu0 %v3705
  %4276 = vmatprep.subr.bf16.mxu0 %v3732
  %4277 = vmatpush1.bf16.msra.mxu0 %v3731
  %4278 = vmatprep.subr.bf16.mxu0 %v3758
  %4279 = vmatpush1.bf16.msra.mxu0 %v3757
  %4280 = vmatprep.subr.bf16.mxu0 0
  %4281 = vmatpush1.bf16.msra.mxu0 0
  %4282 = vmatprep.subr.bf16.mxu0 0
  %4283 = vmatpush1.bf16.msra.mxu0 0
  %4284 = vmatprep.subr.bf16.mxu0 0
  %4285 = vmatpush1.bf16.msra.mxu0 0
  %4286 = vmatprep.subr.bf16.mxu0 0
  %4287 = vmatpush1.bf16.msra.mxu0 0
  %4288 = vmatprep.subr.bf16.mxu0 0
  %4289 = vmatpush1.bf16.msra.mxu0 0
  %4290 = vmatprep.subr.bf16.mxu0 0
  %4291 = vmatpush1.bf16.msra.mxu0 0
  %4292 = vmatprep.subr.bf16.mxu0 0
  %4293 = vmatpush1.bf16.msra.mxu0 0
  %4294 = vmatprep.subr.bf16.mxu0 0
  %4295 = vmatpush1.bf16.msra.mxu0 0
  %4296 = vmatprep.mubr.bf16.mxu0 0
  %4297 = vmatmul.mubr.bf16.gmra.mrb[0].mxu0 %v2590
  %v4298 = vpop.f32.mrb[0].mxu0
  %v4299 = vadd.f32 %v2866, %v4298
  %v4300 = vpop.f32.mrb[0].mxu0
  %v4301 = vadd.f32 %v2870, %v4300
  %v4302 = vpop.f32.mrb[0].mxu0
  %v4303 = vpop.f32.mrb[0].mxu0
  %4304 = vdwg.mxu0
  %4305 = vmatprep.subr.bf16.mxu0 %v3578
  %4306 = vmatpush1.bf16.msra.mxu0 %v3577
  %4307 = vmatprep.subr.bf16.mxu0 %v3604
  %4308 = vmatpush1.bf16.msra.mxu0 %v3603
  %4309 = vmatprep.subr.bf16.mxu0 %v3630
  %4310 = vmatpush1.bf16.msra.mxu0 %v3629
  %4311 = vmatprep.subr.bf16.mxu0 %v3656
  %4312 = vmatpush1.bf16.msra.mxu0 %v3655
  %4313 = vmatprep.subr.bf16.mxu0 %v3682
  %4314 = vmatpush1.bf16.msra.mxu0 %v3681
  %4315 = vmatprep.subr.bf16.mxu0 %v3708
  %4316 = vmatpush1.bf16.msra.mxu0 %v3707
  %4317 = vmatprep.subr.bf16.mxu0 %v3734
  %4318 = vmatpush1.bf16.msra.mxu0 %v3733
  %4319 = vmatprep.subr.bf16.mxu0 %v3760
  %4320 = vmatpush1.bf16.msra.mxu0 %v3759
  %4321 = vmatprep.subr.bf16.mxu0 0
  %4322 = vmatpush1.bf16.msra.mxu0 0
  %4323 = vmatprep.subr.bf16.mxu0 0
  %4324 = vmatpush1.bf16.msra.mxu0 0
  %4325 = vmatprep.subr.bf16.mxu0 0
  %4326 = vmatpush1.bf16.msra.mxu0 0
  %4327 = vmatprep.subr.bf16.mxu0 0
  %4328 = vmatpush1.bf16.msra.mxu0 0
  %4329 = vmatprep.subr.bf16.mxu0 0
  %4330 = vmatpush1.bf16.msra.mxu0 0
  %4331 = vmatprep.subr.bf16.mxu0 0
  %4332 = vmatpush1.bf16.msra.mxu0 0
  %4333 = vmatprep.subr.bf16.mxu0 0
  %4334 = vmatpush1.bf16.msra.mxu0 0
  %4335 = vmatprep.subr.bf16.mxu0 0
  %4336 = vmatpush1.bf16.msra.mxu0 0
  %4337 = vmatprep.mubr.bf16.mxu0 0
  %4338 = vmatmul.mubr.bf16.gmra.mrb[0].mxu0 %v2590
  %v4339 = vpop.f32.mrb[0].mxu0
  %v4340 = vadd.f32 %v2874, %v4339
  %v4341 = vpop.f32.mrb[0].mxu0
  %v4342 = vadd.f32 %v2878, %v4341
  %v4343 = vpop.f32.mrb[0].mxu0
  %v4344 = vpop.f32.mrb[0].mxu0
  %4345 = vdwg.mxu0
  %4346 = vmatprep.subr.bf16.mxu0 %v3580
  %4347 = vmatpush1.bf16.msra.mxu0 %v3579
  %4348 = vmatprep.subr.bf16.mxu0 %v3606
  %4349 = vmatpush1.bf16.msra.mxu0 %v3605
  %4350 = vmatprep.subr.bf16.mxu0 %v3632
  %4351 = vmatpush1.bf16.msra.mxu0 %v3631
  %4352 = vmatprep.subr.bf16.mxu0 %v3658
  %4353 = vmatpush1.bf16.msra.mxu0 %v3657
  %4354 = vmatprep.subr.bf16.mxu0 %v3684
  %4355 = vmatpush1.bf16.msra.mxu0 %v3683
  %4356 = vmatprep.subr.bf16.mxu0 %v3710
  %4357 = vmatpush1.bf16.msra.mxu0 %v3709
  %4358 = vmatprep.subr.bf16.mxu0 %v3736
  %4359 = vmatpush1.bf16.msra.mxu0 %v3735
  %4360 = vmatprep.subr.bf16.mxu0 %v3762
  %4361 = vmatpush1.bf16.msra.mxu0 %v3761
  %4362 = vmatprep.subr.bf16.mxu0 0
  %4363 = vmatpush1.bf16.msra.mxu0 0
  %4364 = vmatprep.subr.bf16.mxu0 0
  %4365 = vmatpush1.bf16.msra.mxu0 0
  %4366 = vmatprep.subr.bf16.mxu0 0
  %4367 = vmatpush1.bf16.msra.mxu0 0
  %4368 = vmatprep.subr.bf16.mxu0 0
  %4369 = vmatpush1.bf16.msra.mxu0 0
  %4370 = vmatprep.subr.bf16.mxu0 0
  %4371 = vmatpush1.bf16.msra.mxu0 0
  %4372 = vmatprep.subr.bf16.mxu0 0
  %4373 = vmatpush1.bf16.msra.mxu0 0
  %4374 = vmatprep.subr.bf16.mxu0 0
  %4375 = vmatpush1.bf16.msra.mxu0 0
  %4376 = vmatprep.subr.bf16.mxu0 0
  %4377 = vmatpush1.bf16.msra.mxu0 0
  %4378 = vmatprep.mubr.bf16.mxu0 0
  %4379 = vmatmul.mubr.bf16.gmra.mrb[0].mxu0 %v2590
  %v4380 = vpop.f32.mrb[0].mxu0
  %v4381 = vadd.f32 %v2882, %v4380
  %v4382 = vpop.f32.mrb[0].mxu0
  %v4383 = vadd.f32 %v2886, %v4382
  %v4384 = vpop.f32.mrb[0].mxu0
  %v4385 = vpop.f32.mrb[0].mxu0
  %4386 = vdwg.mxu0
  %4387 = vmatprep.subr.bf16.mxu0 %v3582
  %4388 = vmatpush1.bf16.msra.mxu0 %v3581
  %4389 = vmatprep.subr.bf16.mxu0 %v3608
  %4390 = vmatpush1.bf16.msra.mxu0 %v3607
  %4391 = vmatprep.subr.bf16.mxu0 %v3634
  %4392 = vmatpush1.bf16.msra.mxu0 %v3633
  %4393 = vmatprep.subr.bf16.mxu0 %v3660
  %4394 = vmatpush1.bf16.msra.mxu0 %v3659
  %4395 = vmatprep.subr.bf16.mxu0 %v3686
  %4396 = vmatpush1.bf16.msra.mxu0 %v3685
  %4397 = vmatprep.subr.bf16.mxu0 %v3712
  %4398 = vmatpush1.bf16.msra.mxu0 %v3711
  %4399 = vmatprep.subr.bf16.mxu0 %v3738
  %4400 = vmatpush1.bf16.msra.mxu0 %v3737
  %4401 = vmatprep.subr.bf16.mxu0 %v3764
  %4402 = vmatpush1.bf16.msra.mxu0 %v3763
  %4403 = vmatprep.subr.bf16.mxu0 0
  %4404 = vmatpush1.bf16.msra.mxu0 0
  %4405 = vmatprep.subr.bf16.mxu0 0
  %4406 = vmatpush1.bf16.msra.mxu0 0
  %4407 = vmatprep.subr.bf16.mxu0 0
  %4408 = vmatpush1.bf16.msra.mxu0 0
  %4409 = vmatprep.subr.bf16.mxu0 0
  %4410 = vmatpush1.bf16.msra.mxu0 0
  %4411 = vmatprep.subr.bf16.mxu0 0
  %4412 = vmatpush1.bf16.msra.mxu0 0
  %4413 = vmatprep.subr.bf16.mxu0 0
  %4414 = vmatpush1.bf16.msra.mxu0 0
  %4415 = vmatprep.subr.bf16.mxu0 0
  %4416 = vmatpush1.bf16.msra.mxu0 0
  %4417 = vmatprep.subr.bf16.mxu0 0
  %4418 = vmatpush1.bf16.msra.mxu0 0
  %4419 = vmatprep.mubr.bf16.mxu0 0
  %4420 = vmatmul.mubr.bf16.gmra.mrb[0].mxu0 %v2590
  %v4421 = vpop.f32.mrb[0].mxu0
  %v4422 = vadd.f32 %v2890, %v4421
  %v4423 = vpop.f32.mrb[0].mxu0
  %v4424 = vadd.f32 %v2894, %v4423
  %v4425 = vpop.f32.mrb[0].mxu0
  %v4426 = vpop.f32.mrb[0].mxu0
  %4427 = vdwg.mxu0
  %4428 = vmatprep.subr.bf16.mxu0 %v3584
  %4429 = vmatpush1.bf16.msra.mxu0 %v3583
  %4430 = vmatprep.subr.bf16.mxu0 %v3610
  %4431 = vmatpush1.bf16.msra.mxu0 %v3609
  %4432 = vmatprep.subr.bf16.mxu0 %v3636
  %4433 = vmatpush1.bf16.msra.mxu0 %v3635
  %4434 = vmatprep.subr.bf16.mxu0 %v3662
  %4435 = vmatpush1.bf16.msra.mxu0 %v3661
  %4436 = vmatprep.subr.bf16.mxu0 %v3688
  %4437 = vmatpush1.bf16.msra.mxu0 %v3687
  %4438 = vmatprep.subr.bf16.mxu0 %v3714
  %4439 = vmatpush1.bf16.msra.mxu0 %v3713
  %4440 = vmatprep.subr.bf16.mxu0 %v3740
  %4441 = vmatpush1.bf16.msra.mxu0 %v3739
  %4442 = vmatprep.subr.bf16.mxu0 %v3766
  %4443 = vmatpush1.bf16.msra.mxu0 %v3765
  %4444 = vmatprep.subr.bf16.mxu0 0
  %4445 = vmatpush1.bf16.msra.mxu0 0
  %4446 = vmatprep.subr.bf16.mxu0 0
  %4447 = vmatpush1.bf16.msra.mxu0 0
  %4448 = vmatprep.subr.bf16.mxu0 0
  %4449 = vmatpush1.bf16.msra.mxu0 0
  %4450 = vmatprep.subr.bf16.mxu0 0
  %4451 = vmatpush1.bf16.msra.mxu0 0
  %4452 = vmatprep.subr.bf16.mxu0 0
  %4453 = vmatpush1.bf16.msra.mxu0 0
  %4454 = vmatprep.subr.bf16.mxu0 0
  %4455 = vmatpush1.bf16.msra.mxu0 0
  %4456 = vmatprep.subr.bf16.mxu0 0
  %4457 = vmatpush1.bf16.msra.mxu0 0
  %4458 = vmatprep.subr.bf16.mxu0 0
  %4459 = vmatpush1.bf16.msra.mxu0 0
  %4460 = vmatprep.mubr.bf16.mxu0 0
  %4461 = vmatmul.mubr.bf16.gmra.mrb[0].mxu0 %v2590
  %v4462 = vpop.f32.mrb[0].mxu0
  %v4463 = vadd.f32 %v2898, %v4462
  %v4464 = vpop.f32.mrb[0].mxu0
  %v4465 = vadd.f32 %v2902, %v4464
  %v4466 = vpop.f32.mrb[0].mxu0
  %v4467 = vpop.f32.mrb[0].mxu0
  %4468 = vdwg.mxu0
  %4469 = vmatprep.subr.bf16.mxu0 %v3586
  %4470 = vmatpush1.bf16.msra.mxu0 %v3585
  %4471 = vmatprep.subr.bf16.mxu0 %v3612
  %4472 = vmatpush1.bf16.msra.mxu0 %v3611
  %4473 = vmatprep.subr.bf16.mxu0 %v3638
  %4474 = vmatpush1.bf16.msra.mxu0 %v3637
  %4475 = vmatprep.subr.bf16.mxu0 %v3664
  %4476 = vmatpush1.bf16.msra.mxu0 %v3663
  %4477 = vmatprep.subr.bf16.mxu0 %v3690
  %4478 = vmatpush1.bf16.msra.mxu0 %v3689
  %4479 = vmatprep.subr.bf16.mxu0 %v3716
  %4480 = vmatpush1.bf16.msra.mxu0 %v3715
  %4481 = vmatprep.subr.bf16.mxu0 %v3742
  %4482 = vmatpush1.bf16.msra.mxu0 %v3741
  %4483 = vmatprep.subr.bf16.mxu0 %v3768
  %4484 = vmatpush1.bf16.msra.mxu0 %v3767
  %4485 = vmatprep.subr.bf16.mxu0 0
  %4486 = vmatpush1.bf16.msra.mxu0 0
  %4487 = vmatprep.subr.bf16.mxu0 0
  %4488 = vmatpush1.bf16.msra.mxu0 0
  %4489 = vmatprep.subr.bf16.mxu0 0
  %4490 = vmatpush1.bf16.msra.mxu0 0
  %4491 = vmatprep.subr.bf16.mxu0 0
  %4492 = vmatpush1.bf16.msra.mxu0 0
  %4493 = vmatprep.subr.bf16.mxu0 0
  %4494 = vmatpush1.bf16.msra.mxu0 0
  %4495 = vmatprep.subr.bf16.mxu0 0
  %4496 = vmatpush1.bf16.msra.mxu0 0
  %4497 = vmatprep.subr.bf16.mxu0 0
  %4498 = vmatpush1.bf16.msra.mxu0 0
  %4499 = vmatprep.subr.bf16.mxu0 0
  %4500 = vmatpush1.bf16.msra.mxu0 0
  %4501 = vmatprep.mubr.bf16.mxu0 0
  %4502 = vmatmul.mubr.bf16.gmra.mrb[0].mxu0 %v2590
  %v4503 = vpop.f32.mrb[0].mxu0
  %v4504 = vadd.f32 %v2906, %v4503
  %v4505 = vpop.f32.mrb[0].mxu0
  %v4506 = vadd.f32 %v2910, %v4505
  %v4507 = vpop.f32.mrb[0].mxu0
  %v4508 = vpop.f32.mrb[0].mxu0
  %4509 = vdwg.mxu0
  %v4510 = vpack.c.bf16 %v4012, %v4012
  %v4511 = vpack.c.bf16 %v4014, %v4014
  %v4512 = vpack.c.bf16 %v4053, %v4053
  %v4513 = vpack.c.bf16 %v4055, %v4055
  %v4514 = vpack.c.bf16 %v4094, %v4094
  %v4515 = vpack.c.bf16 %v4096, %v4096
  %v4516 = vpack.c.bf16 %v4135, %v4135
  %v4517 = vpack.c.bf16 %v4137, %v4137
  %v4518 = vpack.c.bf16 %v4176, %v4176
  %v4519 = vpack.c.bf16 %v4178, %v4178
  %v4520 = vpack.c.bf16 %v4217, %v4217
  %v4521 = vpack.c.bf16 %v4219, %v4219
  %v4522 = vpack.c.bf16 %v4258, %v4258
  %v4523 = vpack.c.bf16 %v4260, %v4260
  %v4524 = vpack.c.bf16 %v4299, %v4299
  %v4525 = vpack.c.bf16 %v4301, %v4301
  %v4526 = vpack.c.bf16 %v4340, %v4340
  %v4527 = vpack.c.bf16 %v4342, %v4342
  %v4528 = vpack.c.bf16 %v4381, %v4381
  %v4529 = vpack.c.bf16 %v4383, %v4383
  %v4530 = vpack.c.bf16 %v4422, %v4422
  %v4531 = vpack.c.bf16 %v4424, %v4424
  %v4532 = vpack.c.bf16 %v4463, %v4463
  %v4533 = vpack.c.bf16 %v4465, %v4465
  %v4534 = vpack.c.bf16 %v4504, %v4504
  %v4535 = vpack.c.bf16 %v4506, %v4506
  %v4562 = vcombine.low %v4510, %v4511
  %v4563 = vcombine.low %v4512, %v4513
  %v4564 = vcombine.low %v4514, %v4515
  %v4565 = vcombine.low %v4516, %v4517
  %v4567 = vunpack.c.l.s4 1966171168
  %v4568 = vunpack.c.0.s8 %v4567
  %v4569 = vlaneseq
  %v4570 = vshrl.u32 %v4569, 7
  %v4571 = vsub.s32 %v4568, %v4570
  %v4572 = vrot.slane %v4562, %v4571
  %v4574 = vunpack.c.l.s4 1966171168
  %v4575 = vunpack.c.0.s8 %v4574
  %v4576 = vlaneseq
  %v4577 = vshrl.u32 %v4576, 7
  %v4578 = vsub.s32 %v4575, %v4577
  %v4579 = vrot.slane %v4563, %v4578
  %v4581 = vunpack.c.l.s4 1966171168
  %v4582 = vunpack.c.0.s8 %v4581
  %v4583 = vlaneseq
  %v4584 = vshrl.u32 %v4583, 7
  %v4585 = vsub.s32 %v4582, %v4584
  %v4586 = vrot.slane %v4564, %v4585
  %v4588 = vunpack.c.l.s4 1966171168
  %v4589 = vunpack.c.0.s8 %v4588
  %v4590 = vlaneseq
  %v4591 = vshrl.u32 %v4590, 7
  %v4592 = vsub.s32 %v4589, %v4591
  %v4593 = vrot.slane %v4565, %v4592
  %v4594 = vcombine.low %v4572, %v4579
  %v4595 = vcombine.low %v4586, %v4593
  %v4597 = vunpack.c.l.s4 1966171168
  %v4598 = vunpack.c.0.s8 %v4597
  %v4599 = vlaneseq
  %v4600 = vshrl.u32 %v4599, 7
  %v4601 = vsub.s32 %v4598, %v4600
  %v4602 = vrot.slane %v4594, %v4601
  %v4604 = vunpack.c.l.s4 1966171168
  %v4605 = vunpack.c.0.s8 %v4604
  %v4606 = vlaneseq
  %v4607 = vshrl.u32 %v4606, 7
  %v4608 = vsub.s32 %v4605, %v4607
  %v4609 = vrot.slane %v4595, %v4608
  %v4610 = vcombine.low %v4602, %v4609
  %v4611 = vcombine.low %v4518, %v4519
  %v4612 = vcombine.low %v4520, %v4521
  %v4613 = vcombine.low %v4522, %v4523
  %v4614 = vcombine.low %v4524, %v4525
  %v4616 = vunpack.c.l.s4 1966171168
  %v4617 = vunpack.c.0.s8 %v4616
  %v4618 = vlaneseq
  %v4619 = vshrl.u32 %v4618, 7
  %v4620 = vsub.s32 %v4617, %v4619
  %v4621 = vrot.slane %v4611, %v4620
  %v4623 = vunpack.c.l.s4 1966171168
  %v4624 = vunpack.c.0.s8 %v4623
  %v4625 = vlaneseq
  %v4626 = vshrl.u32 %v4625, 7
  %v4627 = vsub.s32 %v4624, %v4626
  %v4628 = vrot.slane %v4612, %v4627
  %v4630 = vunpack.c.l.s4 1966171168
  %v4631 = vunpack.c.0.s8 %v4630
  %v4632 = vlaneseq
  %v4633 = vshrl.u32 %v4632, 7
  %v4634 = vsub.s32 %v4631, %v4633
  %v4635 = vrot.slane %v4613, %v4634
  %v4637 = vunpack.c.l.s4 1966171168
  %v4638 = vunpack.c.0.s8 %v4637
  %v4639 = vlaneseq
  %v4640 = vshrl.u32 %v4639, 7
  %v4641 = vsub.s32 %v4638, %v4640
  %v4642 = vrot.slane %v4614, %v4641
  %v4643 = vcombine.low %v4621, %v4628
  %v4644 = vcombine.low %v4635, %v4642
  %v4646 = vunpack.c.l.s4 1966171168
  %v4647 = vunpack.c.0.s8 %v4646
  %v4648 = vlaneseq
  %v4649 = vshrl.u32 %v4648, 7
  %v4650 = vsub.s32 %v4647, %v4649
  %v4651 = vrot.slane %v4643, %v4650
  %v4653 = vunpack.c.l.s4 1966171168
  %v4654 = vunpack.c.0.s8 %v4653
  %v4655 = vlaneseq
  %v4656 = vshrl.u32 %v4655, 7
  %v4657 = vsub.s32 %v4654, %v4656
  %v4658 = vrot.slane %v4644, %v4657
  %v4659 = vcombine.low %v4651, %v4658
  %v4660 = vcombine.low %v4526, %v4527
  %v4661 = vcombine.low %v4528, %v4529
  %v4662 = vcombine.low %v4530, %v4531
  %v4663 = vcombine.low %v4532, %v4533
  %v4665 = vunpack.c.l.s4 1966171168
  %v4666 = vunpack.c.0.s8 %v4665
  %v4667 = vlaneseq
  %v4668 = vshrl.u32 %v4667, 7
  %v4669 = vsub.s32 %v4666, %v4668
  %v4670 = vrot.slane %v4660, %v4669
  %v4672 = vunpack.c.l.s4 1966171168
  %v4673 = vunpack.c.0.s8 %v4672
  %v4674 = vlaneseq
  %v4675 = vshrl.u32 %v4674, 7
  %v4676 = vsub.s32 %v4673, %v4675
  %v4677 = vrot.slane %v4661, %v4676
  %v4679 = vunpack.c.l.s4 1966171168
  %v4680 = vunpack.c.0.s8 %v4679
  %v4681 = vlaneseq
  %v4682 = vshrl.u32 %v4681, 7
  %v4683 = vsub.s32 %v4680, %v4682
  %v4684 = vrot.slane %v4662, %v4683
  %v4686 = vunpack.c.l.s4 1966171168
  %v4687 = vunpack.c.0.s8 %v4686
  %v4688 = vlaneseq
  %v4689 = vshrl.u32 %v4688, 7
  %v4690 = vsub.s32 %v4687, %v4689
  %v4691 = vrot.slane %v4663, %v4690
  %v4692 = vcombine.low %v4670, %v4677
  %v4693 = vcombine.low %v4684, %v4691
  %v4695 = vunpack.c.l.s4 1966171168
  %v4696 = vunpack.c.0.s8 %v4695
  %v4697 = vlaneseq
  %v4698 = vshrl.u32 %v4697, 7
  %v4699 = vsub.s32 %v4696, %v4698
  %v4700 = vrot.slane %v4692, %v4699
  %v4702 = vunpack.c.l.s4 1966171168
  %v4703 = vunpack.c.0.s8 %v4702
  %v4704 = vlaneseq
  %v4705 = vshrl.u32 %v4704, 7
  %v4706 = vsub.s32 %v4703, %v4705
  %v4707 = vrot.slane %v4693, %v4706
  %v4708 = vcombine.low %v4700, %v4707
  %v4709 = vcombine.low %v4534, %v4535
  %v4711 = vunpack.c.l.s4 1966171168
  %v4712 = vunpack.c.0.s8 %v4711
  %v4713 = vlaneseq
  %v4714 = vshrl.u32 %v4713, 7
  %v4715 = vsub.s32 %v4712, %v4714
  %v4716 = vrot.slane %v4709, %v4715
  %v4718 = vunpack.c.l.s4 1966171168
  %v4719 = vunpack.c.0.s8 %v4718
  %v4720 = vlaneseq
  %v4721 = vshrl.u32 %v4720, 7
  %v4722 = vsub.s32 %v4719, %v4721
  %v4723 = vrot.slane %v4716, %v4722
  %4728 = vst [vmem:[%s11] sm:$0xff] %v4610
  %4729 = vst [vmem:[%s11 + $0x8] sm:$0xff] %v4659
  %4730 = vst [vmem:[%s11 + $0x10] sm:$0xff] %v4708
  %vm4731 = vcmask 1040384
  %vm4732 = vcmask 517121
  %vm4733 = vmor %vm4732, %vm4731
  %4734 = vst.msk [vmem:[%s11 + $0x18] sm:$0x3] %vm4733, %v4723
  // Predicated region
  $region46: #{saccade_shift_forward.1} parent=0 // pred_check
    _
  $region47: #{saccade_shift_forward.1} parent=0 // pred_check_branch
    %4736 = sbr.rel (0) target = $region49
  $region48: #{saccade_shift_forward.1} parent=0 // pred_region
    _
  $region49: #{saccade_shift_forward.1} parent=0 // pred_fallthru
    _
  // Predicated region
  $region50: #{saccade_shift_forward.1} parent=0 // pred_check
    _
  $region51: #{saccade_shift_forward.1} parent=0 // pred_check_branch
    %4738 = sbr.rel (0) target = $region53
  $region52: #{saccade_shift_forward.1} parent=0 // pred_region
    _
  $region53: #{saccade_shift_forward.1} parent=0 // pred_fallthru
    _

</llo_original>
